<compile_context>
chip_gen: v7x
topology: tpu7x:2x2x1
jax: 0.10.0
libtpu: 0.0.40
codegen_flags: <defaults>
</compile_context>

<pallas_src>
import functools

import jax
import jax.numpy as jnp
from jax import lax
from jax.experimental import pallas as pl
from jax.experimental.pallas import tpu as pltpu


# ----------------------- generation-dependent VMEM tuning ---------------------

_HW_CACHE = None


def _hw_params():
    """VMEM budgets / TensorCore count; conservative (v7x-safe) fallback."""
    global _HW_CACHE
    if _HW_CACHE is not None:
        return _HW_CACHE
    vmem_cap = 0
    num_cores = 0
    try:
        info = pltpu.get_tpu_info()
        vmem_cap = int(getattr(info, "vmem_capacity_bytes", 0) or 0)
        for attr in ("num_tensorcores", "tensorcore_count", "num_cores"):
            v = getattr(info, attr, None)
            if v:
                num_cores = int(v)
                break
    except Exception:
        pass
    mib = 1024 * 1024
    if vmem_cap >= 96 * mib:
        # v5e / v6e class: 128 MiB physical VMEM, single TensorCore.
        hw = dict(vmem_limit=112 * mib, vmem_budget=72 * mib,
                  single_block_bytes=12 * mib, num_cores=num_cores or 1)
    else:
        # v7x class (64 MiB / TC, 2 TCs) or unknown: keep conservative limits.
        hw = dict(vmem_limit=48 * mib, vmem_budget=24 * mib,
                  single_block_bytes=2 * mib, num_cores=num_cores or 2)
    _HW_CACHE = hw
    return hw


# ----------------------------- Pallas GEMM kernel ----------------------------

def _mm_bias_act_kernel(w_ref, a_ref, b_ref, o_ref, *, leaky, clip_val):
    """out^T tile = act(W^T @ A^T + bias); acc/bias/act/clip in f32, store o_ref.dtype."""
    acc = jnp.dot(w_ref[...], a_ref[...], preferred_element_type=jnp.float32)
    acc = acc + b_ref[...]                          # (Cout, 1) broadcasts over lanes
    if leaky:
        acc = jnp.where(acc >= 0.0, acc, 0.1 * acc)  # LeakyReLU(0.1)
    if clip_val is not None:
        acc = jnp.clip(acc, -clip_val, clip_val)
    o_ref[...] = acc.astype(o_ref.dtype)


def matmul_bias_act_T(wT, aT, bias_col, *, leaky, clip_val=None,
                      out_dtype=jnp.float32):
    """wT: (Cout,K) bf16, aT: (K,M) bf16, bias_col: (Cout,1) f32 -> (Cout,M) out_dtype.

    M (batch*spatial) sits on the lane axis -> lane-dense MXU and stores.
    """
    Cout, K = wT.shape
    K2, M = aT.shape
    assert K == K2
    hw = _hw_params()
    kern = functools.partial(_mm_bias_act_kernel, leaky=leaky, clip_val=clip_val)
    item = aT.dtype.itemsize
    out_item = jnp.dtype(out_dtype).itemsize

    if K * M * item <= hw["single_block_bytes"]:
        # Whole GEMM as one VMEM-resident block: no padding of A anywhere.
        return pl.pallas_call(
            kern,
            out_shape=jax.ShapeDtypeStruct((Cout, M), out_dtype),
            compiler_params=pltpu.CompilerParams(vmem_limit_bytes=hw["vmem_limit"]),
        )(wT, aT, bias_col)

    # ---- tiled over M (lane axis): tile_m chosen TOP-DOWN from the VMEM budget.
    tile_m = max(256, min(8192, pl.next_power_of_2(max(M, 1))))

    def step_bytes(t):
        # A triple-buffered + out double-buffered + resident weights/bias.
        return 3 * K * t * item + 2 * Cout * t * out_item + Cout * K * item + Cout * 4

    while tile_m > 256 and step_bytes(tile_m) > hw["vmem_budget"]:
        tile_m //= 2
    if hw["num_cores"] > 1:
        # Megacore (v7x): keep >= 2 tiles per TensorCore so 'parallel' feeds all cores.
        while tile_m > 256 and -(-M // tile_m) < 2 * hw["num_cores"]:
            tile_m //= 2

    grid_m = -(-M // tile_m)
    M_pad = grid_m * tile_m

    # Deepen the input pipeline (kernel is DMA/store-bound, MXU <5% utilised).
    a_kwargs = dict(pipeline_mode=pl.Buffered(3)) if grid_m >= 3 else {}
    try:
        a_spec = pl.BlockSpec((K, tile_m), lambda i: (0, i), **a_kwargs)
    except TypeError:                               # older API without pipeline_mode
        a_spec = pl.BlockSpec((K, tile_m), lambda i: (0, i))

    # Only the OUTPUT is allocated padded (Cout rows -> cheap).  A is passed
    # unpadded: Pallas pads the last input block with unspecified values, which
    # only reach the padded output columns sliced off below.
    out = pl.pallas_call(
        kern,
        out_shape=jax.ShapeDtypeStruct((Cout, M_pad), out_dtype),
        grid=(grid_m,),
        in_specs=[
            pl.BlockSpec((Cout, K), lambda i: (0, 0)),      # resident weights
            a_spec,                                          # A tile, M on lanes
            pl.BlockSpec((Cout, 1), lambda i: (0, 0)),       # bias column
        ],
        out_specs=pl.BlockSpec((Cout, tile_m), lambda i: (0, i)),
        compiler_params=pltpu.CompilerParams(
            dimension_semantics=("parallel",),
            vmem_limit_bytes=hw["vmem_limit"]),
    )(wT, aT, bias_col)
    return out[:, :M] if M_pad != M else out


# -------------------- ConvTranspose3d via phase decomposition ----------------

def _phase_taps(k, s, p):
    """Per output phase r in [0, s): taps into the flipped kernel + input offsets."""
    lp = k - 1 - p
    plan = []
    for r in range(s):
        taps, deltas = [], []
        for j in range(k):
            if (r + j - lp) % s == 0:
                taps.append(j)
                deltas.append((r + j - lp) // s)
        plan.append((taps, deltas))
    return plan


def prepare_conv_plan(w, b, cfg, *, leaky, compute_dtype=jnp.bfloat16):
    """Precompute (once per layer) the per-phase GEMM weights in bf16."""
    k, s, p = cfg["kernel_size"], cfg["stride"], cfg["padding"]
    Cin, Cout = int(w.shape[0]), int(w.shape[1])
    wf = jnp.flip(w, axis=(2, 3, 4))                 # flipped -> regular-conv weights
    tap_plan = _phase_taps(k, s, p)                  # identical for d/h/w axes
    phase_w = {}
    for rd in range(s):
        for rh in range(s):
            for rw in range(s):
                td, th, tw = tap_plan[rd][0], tap_plan[rh][0], tap_plan[rw][0]
                if not (td and th and tw):
                    phase_w[(rd, rh, rw)] = None
                    continue
                blocks = [wf[:, :, jd, jh, jw]       # (Cin, Cout) per tap
                          for jd in td for jh in th for jw in tw]
                Wp = jnp.stack(blocks, axis=0).reshape(len(blocks) * Cin, Cout)
                phase_w[(rd, rh, rw)] = jnp.transpose(Wp, (1, 0)).astype(compute_dtype)
    return dict(cfg=cfg, leaky=leaky, Cin=Cin, Cout=Cout, tap_plan=tap_plan,
                phase_w=phase_w, bias=b.reshape(Cout, 1).astype(jnp.float32),
                compute_dtype=compute_dtype)


def conv_transpose3d(x_cf, plan, *, out_dtype=jnp.bfloat16, clip_val=None):
    """PyTorch-equivalent ConvTranspose3d (+optional LeakyReLU(0.1), +optional clip).

    Channels-first layout: x_cf (Cin, N, D, H, W) -> (Cout, N, Do, Ho, Wo).
    Phase-decomposed: no dilated activation, no zero FLOPs, no strided scatters.
    """
    cfg = plan["cfg"]
    k, s, p = cfg["kernel_size"], cfg["stride"], cfg["padding"]
    opd, oph, opw = cfg["output_padding"]
    Cin, N, D, H, W = x_cf.shape
    assert Cin == plan["Cin"]
    Cout = plan["Cout"]
    Do = (D - 1) * s + k - 2 * p + opd
    Ho = (H - 1) * s + k - 2 * p + oph
    Wo = (W - 1) * s + k - 2 * p + opw
    tap_plan = plan["tap_plan"]

    cnt_d = [len(range(r, Do, s)) for r in range(s)]
    cnt_h = [len(range(r, Ho, s)) for r in range(s)]
    cnt_w = [len(range(r, Wo, s)) for r in range(s)]

    def pads(in_size, cnts):
        lo, hi = 0, in_size - 1
        for r in range(s):
            if cnts[r] == 0:
                continue
            for dlt in tap_plan[r][1]:
                lo = min(lo, dlt)
                hi = max(hi, cnts[r] - 1 + dlt)
        return max(0, -lo), max(0, hi - (in_size - 1))

    (pdl, pdh), (phl, phh), (pwl, pwh) = pads(D, cnt_d), pads(H, cnt_h), pads(W, cnt_w)

    xt = jnp.pad(x_cf.astype(plan["compute_dtype"]),
                 ((0, 0), (0, 0), (pdl, pdh), (phl, phh), (pwl, pwh)))

    def phase_out(rd, rh, rw, cd, ch, cw):
        wT = plan["phase_w"][(rd, rh, rw)]
        if wT is None:                               # no contributing taps: act(bias)
            val = plan["bias"][:, 0]
            if plan["leaky"]:
                val = jnp.where(val >= 0.0, val, 0.1 * val)
            if clip_val is not None:
                val = jnp.clip(val, -clip_val, clip_val)
            return jnp.broadcast_to(val.reshape(Cout, 1, 1, 1, 1).astype(out_dtype),
                                    (Cout, N, cd, ch, cw))
        dds, dhs, dws = tap_plan[rd][1], tap_plan[rh][1], tap_plan[rw][1]
        # TODO(synk): gather these taps inside the Pallas kernel (tap grid axis +
        # f32 VMEM accumulator) so this im2col never round-trips HBM.
        patches = [
            xt[:, :,
               pdl + dd: pdl + dd + cd,
               phl + dh: phl + dh + ch,
               pwl + dw: pwl + dw + cw]
            for dd in dds for dh in dhs for dw in dws
        ]
        M = N * cd * ch * cw
        aT = jnp.stack(patches, axis=0).reshape(len(patches) * Cin, M)
        oT = matmul_bias_act_T(wT, aT, plan["bias"], leaky=plan["leaky"],
                               clip_val=clip_val, out_dtype=out_dtype)
        return oT.reshape(Cout, N, cd, ch, cw)

    if s == 1:                                       # single phase, direct output
        return phase_out(0, 0, 0, Do, Ho, Wo)

    # Contiguous per-phase writes into a phase-major buffer, then ONE interleave
    # (replaces s^3 stride-s lane scatters + zeros pre-write).
    cdu, chu, cwu = -(-Do // s), -(-Ho // s), -(-Wo // s)
    buf = jnp.zeros((s, s, s, Cout, N, cdu, chu, cwu), out_dtype)
    for rd in range(s):
        for rh in range(s):
            for rw in range(s):
                cd, ch, cw = cnt_d[rd], cnt_h[rh], cnt_w[rw]
                if cd == 0 or ch == 0 or cw == 0:
                    continue
                buf = buf.at[rd, rh, rw, :, :, :cd, :ch, :cw].set(
                    phase_out(rd, rh, rw, cd, ch, cw))
    out = jnp.transpose(buf, (3, 4, 5, 0, 6, 1, 7, 2)).reshape(
        Cout, N, cdu * s, chu * s, cwu * s)
    return out[:, :, :Do, :Ho, :Wo]


# ---------------------- Independent f32 reference (lax) ----------------------

def conv_transpose3d_ref(x, w, b, cfg, *, leaky):
    k, s, p = cfg["kernel_size"], cfg["stride"], cfg["padding"]
    op = cfg["output_padding"]
    lp = k - 1 - p
    wf = jnp.flip(w, axis=(2, 3, 4))                         # (Cin, Cout, k, k, k)
    rhs = jnp.transpose(wf, (1, 0, 2, 3, 4))                 # OIDHW
    out = lax.conv_general_dilated(
        x, rhs, window_strides=(1, 1, 1),
        padding=[(lp, lp + op[0]), (lp, lp + op[1]), (lp, lp + op[2])],
        lhs_dilation=(s, s, s),
        dimension_numbers=("NCDHW", "OIDHW", "NCDHW"))
    out = out + b.reshape(1, -1, 1, 1, 1)
    if leaky:
        out = jnp.where(out >= 0.0, out, 0.1 * out)
    return out


# ------------------------------- Decoder --------------------------------------

def init_decoder_params(key, num_chs):
    """Deterministic synthetic params mirroring Decoder.__init__ (PyTorch layout)."""
    params = []
    kernel_size, stride = 3, 2
    out_pads = {0: (1, 1, 0), 1: (0, 0, 1), 2: (1, 1, 0), 3: (0, 0, 1), 4: (1, 1, 1)}
    for l, (ch_in, ch_out) in enumerate(zip(num_chs[:-1], num_chs[1:])):
        if l == 5:
            ch_in_exp = ch_in + 1
            kernel_size, stride = 1, 1
        else:
            ch_in_exp = ch_in * 2
        pad = (kernel_size - 1) // 2
        op1 = out_pads.get(l, (0, 0, 0))
        key, k1, k2, k3, k4 = jax.random.split(key, 5)
        w1 = 0.1 * jax.random.normal(
            k1, (ch_in_exp, ch_out, kernel_size, kernel_size, kernel_size), jnp.float32)
        b1 = 0.05 * jax.random.normal(k2, (ch_out,), jnp.float32)
        w2 = 0.1 * jax.random.normal(
            k3, (ch_out, ch_out, kernel_size, kernel_size, kernel_size), jnp.float32)
        b2 = 0.05 * jax.random.normal(k4, (ch_out,), jnp.float32)
        cfg1 = dict(kernel_size=kernel_size, stride=stride, padding=pad, output_padding=op1)
        cfg2 = dict(kernel_size=kernel_size, stride=1, padding=pad, output_padding=(0, 0, 0))
        params.append(((w1, b1, cfg1), (w2, b2, cfg2)))
    return params


def prepare_decoder_plans(raw_params):
    """Hoisted weight preprocessing: flip/transpose/per-phase split + bf16 cast, once."""
    plans = []
    for (w1, b1, cfg1), (w2, b2, cfg2) in raw_params:
        plans.append((prepare_conv_plan(w1, b1, cfg1, leaky=True),
                      prepare_conv_plan(w2, b2, cfg2, leaky=False)))
    return plans


def decoder_forward(z, condition_pyramid, plans, max_flow_hat_abs_val):
    """Matches Decoder.forward; activations carried channels-first + bf16 between layers."""
    max_clip = abs(max_flow_hat_abs_val)
    n_layers = len(plans)
    x = jnp.transpose(z, (1, 0, 2, 3, 4))                    # NCDHW -> (C, N, D, H, W)
    # TODO(synk): fuse the two convs of each block so the LeakyReLU intermediate
    # stays in VMEM (emit_pipeline over spatial tiles with a halo).
    for l, ((plan1, plan2), cond) in enumerate(zip(plans, condition_pyramid)):
        cond_cf = jnp.transpose(cond, (1, 0, 2, 3, 4)).astype(x.dtype)
        x = jnp.concatenate([x, cond_cf], axis=0)            # skip-concat on channels
        last = l == n_layers - 1
        x = conv_transpose3d(x, plan1, out_dtype=jnp.bfloat16)       # + LeakyReLU fused
        x = conv_transpose3d(x, plan2,
                             out_dtype=jnp.float32 if last else jnp.bfloat16,
                             clip_val=max_clip if last else None)     # final clip fused
    return jnp.transpose(x, (1, 0, 2, 3, 4))                 # back to NCDHW


def decoder_forward_ref(z, condition_pyramid, raw_params, max_flow_hat_abs_val):
    x = z
    max_clip = abs(max_flow_hat_abs_val)
    for ((w1, b1, cfg1), (w2, b2, cfg2)), cond in zip(raw_params, condition_pyramid):
        x = jnp.concatenate([x, cond], axis=1)
        x = conv_transpose3d_ref(x, w1, b1, cfg1, leaky=True)
        x = conv_transpose3d_ref(x, w2, b2, cfg2, leaky=False)
    return jnp.clip(x, -max_clip, max_clip)


# --------------------------------- Main ---------------------------------------

if __name__ == "__main__":
    key = jax.random.PRNGKey(0)
    num_chs = [4, 4, 2]          # 2 decoder levels at small size
    max_flow = 5.0

    kparams, kz, kc0, kc1, kg1, kg2, kg3 = jax.random.split(key, 7)
    raw_params = init_decoder_params(kparams, num_chs)
    plans = prepare_decoder_plans(raw_params)

    N, D, H, W = 2, 3, 3, 4
    z = jax.random.normal(kz, (N, num_chs[0], D, H, W), jnp.float32)
    cond0 = jax.random.normal(kc0, (N, num_chs[0], D, H, W), jnp.float32)
    # after level 0 (k=3, s=2, out_pad=(1,1,0)): spatial -> (2D, 2H, 2W-1), ch -> num_chs[1]
    cond1 = jax.random.normal(kc1, (N, num_chs[1], 2 * D, 2 * H, 2 * W - 1), jnp.float32)
    condition_pyramid = [cond0, cond1]

    fwd = jax.jit(lambda zz, cc: decoder_forward(zz, cc, plans, max_flow))
    out = jax.block_until_ready(fwd(z, condition_pyramid))
    assert out.shape == (N, num_chs[-1], 11, 11, 14), out.shape

    # correctness vs an independent full-f32 lax-based ConvTranspose3d reference
    ref = jax.block_until_ready(
        decoder_forward_ref(z, condition_pyramid, raw_params, max_flow))
    err_max = float(jnp.max(jnp.abs(out - ref)))
    err_mean = float(jnp.mean(jnp.abs(out - ref)))
    assert err_max < 1.5e-1 and err_mean < 2e-2, (err_max, err_mean)   # bf16 GEMMs
    assert float(jnp.max(jnp.abs(out))) <= max_flow + 1e-5

    # standalone check of the tiled (grid) GEMM path: large lane-aligned M so the
    # budget-derived tile_m, Buffered(3) pipeline and the megacore rule are exercised.
    K_t, M_t, Cout_t = 256, 32768, 4
    wT_t = (0.1 * jax.random.normal(kg1, (Cout_t, K_t), jnp.float32)).astype(jnp.bfloat16)
    aT_t = jax.random.normal(kg2, (K_t, M_t), jnp.float32).astype(jnp.bfloat16)
    bias_t = 0.05 * jax.random.normal(kg3, (Cout_t, 1), jnp.float32)
    got = matmul_bias_act_T(wT_t, aT_t, bias_t, leaky=True)
    want = jnp.dot(wT_t.astype(jnp.float32), aT_t.astype(jnp.float32)) + bias_t
    want = jnp.where(want >= 0.0, want, 0.1 * want)
    got, want = jax.block_until_ready((got, want))
    assert jnp.allclose(got, want, atol=2e-3, rtol=2e-3), \
        float(jnp.max(jnp.abs(got - want)))

    print("KERNEL_OK")
</pallas_src>

<mosaic_0001>
module attributes {stable_mosaic.version = 11 : i64} {
  func.func @_mm_bias_act_kernel(%arg0: memref<4x8xbf16, #tpu.memory_space<vmem>>, %arg1: memref<8x72xbf16, #tpu.memory_space<vmem>>, %arg2: memref<4x1xf32, #tpu.memory_space<vmem>>, %arg3: memref<4x72xbf16, #tpu.memory_space<vmem>>) attributes {dimension_semantics = [], scalar_prefetch = 0 : i64, scratch_operands = 0 : i64, tpu.core_type = #tpu.core_type<tc>} {
    %c0 = arith.constant 0 : index
    %c0_0 = arith.constant 0 : index
    %0 = vector.load %arg0[%c0, %c0_0] : memref<4x8xbf16, #tpu.memory_space<vmem>>, vector<4x8xbf16>
    %c0_1 = arith.constant 0 : index
    %c0_2 = arith.constant 0 : index
    %1 = vector.load %arg1[%c0_1, %c0_2] : memref<8x72xbf16, #tpu.memory_space<vmem>>, vector<8x72xbf16>
    %cst = arith.constant dense<0.000000e+00> : vector<4x72xf32>
    %2 = tpu.matmul %0, %1, %cst {dimension_numbers = #tpu.dot_dimension_numbers<[1], [0], [0], [1], [0, 0, 1, 1], [], []>} : vector<4x8xbf16>, vector<8x72xbf16>, vector<4x72xf32> -> vector<4x72xf32>
    %c0_3 = arith.constant 0 : index
    %c0_4 = arith.constant 0 : index
    %3 = vector.load %arg2[%c0_3, %c0_4] : memref<4x1xf32, #tpu.memory_space<vmem>>, vector<4x1xf32>
    %4 = vector.broadcast %3 : vector<4x1xf32> to vector<4x72xf32>
    %5 = arith.addf %2, %4 : vector<4x72xf32>
    %cst_5 = arith.constant 0.000000e+00 : f32
    %6 = vector.broadcast %cst_5 : f32 to vector<4x72xf32>
    %7 = arith.cmpf oge, %5, %6 : vector<4x72xf32>
    %cst_6 = arith.constant 1.000000e-01 : f32
    %8 = vector.broadcast %cst_6 : f32 to vector<4x72xf32>
    %9 = arith.mulf %8, %5 : vector<4x72xf32>
    %10 = arith.select %7, %5, %9 : vector<4x72xi1>, vector<4x72xf32>
    %11 = arith.truncf %10 : vector<4x72xf32> to vector<4x72xbf16>
    %c0_7 = arith.constant 0 : index
    %c0_8 = arith.constant 0 : index
    %12 = vector.load %arg3[%c0_7, %c0_8] : memref<4x72xbf16, #tpu.memory_space<vmem>>, vector<4x72xbf16>
    tpu.vector_store %arg3[%c0_7, %c0_8], %11 {strides = array<i32>} : memref<4x72xbf16, #tpu.memory_space<vmem>>, vector<4x72xbf16>,
    return
  }
}

module attributes {stable_mosaic.version = 11 : i64} {
  func.func @_mm_bias_act_kernel(%arg0: memref<4x16xbf16, #tpu.memory_space<vmem>>, %arg1: memref<16x54xbf16, #tpu.memory_space<vmem>>, %arg2: memref<4x1xf32, #tpu.memory_space<vmem>>, %arg3: memref<4x54xbf16, #tpu.memory_space<vmem>>) attributes {dimension_semantics = [], scalar_prefetch = 0 : i64, scratch_operands = 0 : i64, tpu.core_type = #tpu.core_type<tc>} {
    %c0 = arith.constant 0 : index
    %c0_0 = arith.constant 0 : index
    %0 = vector.load %arg0[%c0, %c0_0] : memref<4x16xbf16, #tpu.memory_space<vmem>>, vector<4x16xbf16>
    %c0_1 = arith.constant 0 : index
    %c0_2 = arith.constant 0 : index
    %1 = vector.load %arg1[%c0_1, %c0_2] : memref<16x54xbf16, #tpu.memory_space<vmem>>, vector<16x54xbf16>
    %cst = arith.constant dense<0.000000e+00> : vector<4x54xf32>
    %2 = tpu.matmul %0, %1, %cst {dimension_numbers = #tpu.dot_dimension_numbers<[1], [0], [0], [1], [0, 0, 1, 1], [], []>} : vector<4x16xbf16>, vector<16x54xbf16>, vector<4x54xf32> -> vector<4x54xf32>
    %c0_3 = arith.constant 0 : index
    %c0_4 = arith.constant 0 : index
    %3 = vector.load %arg2[%c0_3, %c0_4] : memref<4x1xf32, #tpu.memory_space<vmem>>, vector<4x1xf32>
    %4 = vector.broadcast %3 : vector<4x1xf32> to vector<4x54xf32>
    %5 = arith.addf %2, %4 : vector<4x54xf32>
    %cst_5 = arith.constant 0.000000e+00 : f32
    %6 = vector.broadcast %cst_5 : f32 to vector<4x54xf32>
    %7 = arith.cmpf oge, %5, %6 : vector<4x54xf32>
    %cst_6 = arith.constant 1.000000e-01 : f32
    %8 = vector.broadcast %cst_6 : f32 to vector<4x54xf32>
    %9 = arith.mulf %8, %5 : vector<4x54xf32>
    %10 = arith.select %7, %5, %9 : vector<4x54xi1>, vector<4x54xf32>
    %11 = arith.truncf %10 : vector<4x54xf32> to vector<4x54xbf16>
    %c0_7 = arith.constant 0 : index
    %c0_8 = arith.constant 0 : index
    %12 = vector.load %arg3[%c0_7, %c0_8] : memref<4x54xbf16, #tpu.memory_space<vmem>>, vector<4x54xbf16>
    tpu.vector_store %arg3[%c0_7, %c0_8], %11 {strides = array<i32>} : memref<4x54xbf16, #tpu.memory_space<vmem>>, vector<4x54xbf16>,
    return
  }
}

module attributes {stable_mosaic.version = 11 : i64} {
  func.func @_mm_bias_act_kernel(%arg0: memref<4x32xbf16, #tpu.memory_space<vmem>>, %arg1: memref<32x72xbf16, #tpu.memory_space<vmem>>, %arg2: memref<4x1xf32, #tpu.memory_space<vmem>>, %arg3: memref<4x72xbf16, #tpu.memory_space<vmem>>) attributes {dimension_semantics = [], scalar_prefetch = 0 : i64, scratch_operands = 0 : i64, tpu.core_type = #tpu.core_type<tc>} {
    %c0 = arith.constant 0 : index
    %c0_0 = arith.constant 0 : index
    %0 = vector.load %arg0[%c0, %c0_0] : memref<4x32xbf16, #tpu.memory_space<vmem>>, vector<4x32xbf16>
    %c0_1 = arith.constant 0 : index
    %c0_2 = arith.constant 0 : index
    %1 = vector.load %arg1[%c0_1, %c0_2] : memref<32x72xbf16, #tpu.memory_space<vmem>>, vector<32x72xbf16>
    %cst = arith.constant dense<0.000000e+00> : vector<4x72xf32>
    %2 = tpu.matmul %0, %1, %cst {dimension_numbers = #tpu.dot_dimension_numbers<[1], [0], [0], [1], [0, 0, 1, 1], [], []>} : vector<4x32xbf16>, vector<32x72xbf16>, vector<4x72xf32> -> vector<4x72xf32>
    %c0_3 = arith.constant 0 : index
    %c0_4 = arith.constant 0 : index
    %3 = vector.load %arg2[%c0_3, %c0_4] : memref<4x1xf32, #tpu.memory_space<vmem>>, vector<4x1xf32>
    %4 = vector.broadcast %3 : vector<4x1xf32> to vector<4x72xf32>
    %5 = arith.addf %2, %4 : vector<4x72xf32>
    %cst_5 = arith.constant 0.000000e+00 : f32
    %6 = vector.broadcast %cst_5 : f32 to vector<4x72xf32>
    %7 = arith.cmpf oge, %5, %6 : vector<4x72xf32>
    %cst_6 = arith.constant 1.000000e-01 : f32
    %8 = vector.broadcast %cst_6 : f32 to vector<4x72xf32>
    %9 = arith.mulf %8, %5 : vector<4x72xf32>
    %10 = arith.select %7, %5, %9 : vector<4x72xi1>, vector<4x72xf32>
    %11 = arith.truncf %10 : vector<4x72xf32> to vector<4x72xbf16>
    %c0_7 = arith.constant 0 : index
    %c0_8 = arith.constant 0 : index
    %12 = vector.load %arg3[%c0_7, %c0_8] : memref<4x72xbf16, #tpu.memory_space<vmem>>, vector<4x72xbf16>
    tpu.vector_store %arg3[%c0_7, %c0_8], %11 {strides = array<i32>} : memref<4x72xbf16, #tpu.memory_space<vmem>>, vector<4x72xbf16>,
    return
  }
}

module attributes {stable_mosaic.version = 11 : i64} {
  func.func @_mm_bias_act_kernel(%arg0: memref<4x16xbf16, #tpu.memory_space<vmem>>, %arg1: memref<16x72xbf16, #tpu.memory_space<vmem>>, %arg2: memref<4x1xf32, #tpu.memory_space<vmem>>, %arg3: memref<4x72xbf16, #tpu.memory_space<vmem>>) attributes {dimension_semantics = [], scalar_prefetch = 0 : i64, scratch_operands = 0 : i64, tpu.core_type = #tpu.core_type<tc>} {
    %c0 = arith.constant 0 : index
    %c0_0 = arith.constant 0 : index
    %0 = vector.load %arg0[%c0, %c0_0] : memref<4x16xbf16, #tpu.memory_space<vmem>>, vector<4x16xbf16>
    %c0_1 = arith.constant 0 : index
    %c0_2 = arith.constant 0 : index
    %1 = vector.load %arg1[%c0_1, %c0_2] : memref<16x72xbf16, #tpu.memory_space<vmem>>, vector<16x72xbf16>
    %cst = arith.constant dense<0.000000e+00> : vector<4x72xf32>
    %2 = tpu.matmul %0, %1, %cst {dimension_numbers = #tpu.dot_dimension_numbers<[1], [0], [0], [1], [0, 0, 1, 1], [], []>} : vector<4x16xbf16>, vector<16x72xbf16>, vector<4x72xf32> -> vector<4x72xf32>
    %c0_3 = arith.constant 0 : index
    %c0_4 = arith.constant 0 : index
    %3 = vector.load %arg2[%c0_3, %c0_4] : memref<4x1xf32, #tpu.memory_space<vmem>>, vector<4x1xf32>
    %4 = vector.broadcast %3 : vector<4x1xf32> to vector<4x72xf32>
    %5 = arith.addf %2, %4 : vector<4x72xf32>
    %cst_5 = arith.constant 0.000000e+00 : f32
    %6 = vector.broadcast %cst_5 : f32 to vector<4x72xf32>
    %7 = arith.cmpf oge, %5, %6 : vector<4x72xf32>
    %cst_6 = arith.constant 1.000000e-01 : f32
    %8 = vector.broadcast %cst_6 : f32 to vector<4x72xf32>
    %9 = arith.mulf %8, %5 : vector<4x72xf32>
    %10 = arith.select %7, %5, %9 : vector<4x72xi1>, vector<4x72xf32>
    %11 = arith.truncf %10 : vector<4x72xf32> to vector<4x72xbf16>
    %c0_7 = arith.constant 0 : index
    %c0_8 = arith.constant 0 : index
    %12 = vector.load %arg3[%c0_7, %c0_8] : memref<4x72xbf16, #tpu.memory_space<vmem>>, vector<4x72xbf16>
    tpu.vector_store %arg3[%c0_7, %c0_8], %11 {strides = array<i32>} : memref<4x72xbf16, #tpu.memory_space<vmem>>, vector<4x72xbf16>,
    return
  }
}

module attributes {stable_mosaic.version = 11 : i64} {
  func.func @_mm_bias_act_kernel(%arg0: memref<4x32xbf16, #tpu.memory_space<vmem>>, %arg1: memref<32x54xbf16, #tpu.memory_space<vmem>>, %arg2: memref<4x1xf32, #tpu.memory_space<vmem>>, %arg3: memref<4x54xbf16, #tpu.memory_space<vmem>>) attributes {dimension_semantics = [], scalar_prefetch = 0 : i64, scratch_operands = 0 : i64, tpu.core_type = #tpu.core_type<tc>} {
    %c0 = arith.constant 0 : index
    %c0_0 = arith.constant 0 : index
    %0 = vector.load %arg0[%c0, %c0_0] : memref<4x32xbf16, #tpu.memory_space<vmem>>, vector<4x32xbf16>
    %c0_1 = arith.constant 0 : index
    %c0_2 = arith.constant 0 : index
    %1 = vector.load %arg1[%c0_1, %c0_2] : memref<32x54xbf16, #tpu.memory_space<vmem>>, vector<32x54xbf16>
    %cst = arith.constant dense<0.000000e+00> : vector<4x54xf32>
    %2 = tpu.matmul %0, %1, %cst {dimension_numbers = #tpu.dot_dimension_numbers<[1], [0], [0], [1], [0, 0, 1, 1], [], []>} : vector<4x32xbf16>, vector<32x54xbf16>, vector<4x54xf32> -> vector<4x54xf32>
    %c0_3 = arith.constant 0 : index
    %c0_4 = arith.constant 0 : index
    %3 = vector.load %arg2[%c0_3, %c0_4] : memref<4x1xf32, #tpu.memory_space<vmem>>, vector<4x1xf32>
    %4 = vector.broadcast %3 : vector<4x1xf32> to vector<4x54xf32>
    %5 = arith.addf %2, %4 : vector<4x54xf32>
    %cst_5 = arith.constant 0.000000e+00 : f32
    %6 = vector.broadcast %cst_5 : f32 to vector<4x54xf32>
    %7 = arith.cmpf oge, %5, %6 : vector<4x54xf32>
    %cst_6 = arith.constant 1.000000e-01 : f32
    %8 = vector.broadcast %cst_6 : f32 to vector<4x54xf32>
    %9 = arith.mulf %8, %5 : vector<4x54xf32>
    %10 = arith.select %7, %5, %9 : vector<4x54xi1>, vector<4x54xf32>
    %11 = arith.truncf %10 : vector<4x54xf32> to vector<4x54xbf16>
    %c0_7 = arith.constant 0 : index
    %c0_8 = arith.constant 0 : index
    %12 = vector.load %arg3[%c0_7, %c0_8] : memref<4x54xbf16, #tpu.memory_space<vmem>>, vector<4x54xbf16>
    tpu.vector_store %arg3[%c0_7, %c0_8], %11 {strides = array<i32>} : memref<4x54xbf16, #tpu.memory_space<vmem>>, vector<4x54xbf16>,
    return
  }
}

module attributes {stable_mosaic.version = 11 : i64} {
  func.func @_mm_bias_act_kernel(%arg0: memref<4x64xbf16, #tpu.memory_space<vmem>>, %arg1: memref<64x54xbf16, #tpu.memory_space<vmem>>, %arg2: memref<4x1xf32, #tpu.memory_space<vmem>>, %arg3: memref<4x54xbf16, #tpu.memory_space<vmem>>) attributes {dimension_semantics = [], scalar_prefetch = 0 : i64, scratch_operands = 0 : i64, tpu.core_type = #tpu.core_type<tc>} {
    %c0 = arith.constant 0 : index
    %c0_0 = arith.constant 0 : index
    %0 = vector.load %arg0[%c0, %c0_0] : memref<4x64xbf16, #tpu.memory_space<vmem>>, vector<4x64xbf16>
    %c0_1 = arith.constant 0 : index
    %c0_2 = arith.constant 0 : index
    %1 = vector.load %arg1[%c0_1, %c0_2] : memref<64x54xbf16, #tpu.memory_space<vmem>>, vector<64x54xbf16>
    %cst = arith.constant dense<0.000000e+00> : vector<4x54xf32>
    %2 = tpu.matmul %0, %1, %cst {dimension_numbers = #tpu.dot_dimension_numbers<[1], [0], [0], [1], [0, 0, 1, 1], [], []>} : vector<4x64xbf16>, vector<64x54xbf16>, vector<4x54xf32> -> vector<4x54xf32>
    %c0_3 = arith.constant 0 : index
    %c0_4 = arith.constant 0 : index
    %3 = vector.load %arg2[%c0_3, %c0_4] : memref<4x1xf32, #tpu.memory_space<vmem>>, vector<4x1xf32>
    %4 = vector.broadcast %3 : vector<4x1xf32> to vector<4x54xf32>
    %5 = arith.addf %2, %4 : vector<4x54xf32>
    %cst_5 = arith.constant 0.000000e+00 : f32
    %6 = vector.broadcast %cst_5 : f32 to vector<4x54xf32>
    %7 = arith.cmpf oge, %5, %6 : vector<4x54xf32>
    %cst_6 = arith.constant 1.000000e-01 : f32
    %8 = vector.broadcast %cst_6 : f32 to vector<4x54xf32>
    %9 = arith.mulf %8, %5 : vector<4x54xf32>
    %10 = arith.select %7, %5, %9 : vector<4x54xi1>, vector<4x54xf32>
    %11 = arith.truncf %10 : vector<4x54xf32> to vector<4x54xbf16>
    %c0_7 = arith.constant 0 : index
    %c0_8 = arith.constant 0 : index
    %12 = vector.load %arg3[%c0_7, %c0_8] : memref<4x54xbf16, #tpu.memory_space<vmem>>, vector<4x54xbf16>
    tpu.vector_store %arg3[%c0_7, %c0_8], %11 {strides = array<i32>} : memref<4x54xbf16, #tpu.memory_space<vmem>>, vector<4x54xbf16>,
    return
  }
}

module attributes {stable_mosaic.version = 11 : i64} {
  func.func @_mm_bias_act_kernel(%arg0: memref<4x108xbf16, #tpu.memory_space<vmem>>, %arg1: memref<108x504xbf16, #tpu.memory_space<vmem>>, %arg2: memref<4x1xf32, #tpu.memory_space<vmem>>, %arg3: memref<4x504xbf16, #tpu.memory_space<vmem>>) attributes {dimension_semantics = [], scalar_prefetch = 0 : i64, scratch_operands = 0 : i64, tpu.core_type = #tpu.core_type<tc>} {
    %c0 = arith.constant 0 : index
    %c0_0 = arith.constant 0 : index
    %0 = vector.load %arg0[%c0, %c0_0] : memref<4x108xbf16, #tpu.memory_space<vmem>>, vector<4x108xbf16>
    %c0_1 = arith.constant 0 : index
    %c0_2 = arith.constant 0 : index
    %1 = vector.load %arg1[%c0_1, %c0_2] : memref<108x504xbf16, #tpu.memory_space<vmem>>, vector<108x504xbf16>
    %cst = arith.constant dense<0.000000e+00> : vector<4x504xf32>
    %2 = tpu.matmul %0, %1, %cst {dimension_numbers = #tpu.dot_dimension_numbers<[1], [0], [0], [1], [0, 0, 1, 1], [], []>} : vector<4x108xbf16>, vector<108x504xbf16>, vector<4x504xf32> -> vector<4x504xf32>
    %c0_3 = arith.constant 0 : index
    %c0_4 = arith.constant 0 : index
    %3 = vector.load %arg2[%c0_3, %c0_4] : memref<4x1xf32, #tpu.memory_space<vmem>>, vector<4x1xf32>
    %4 = vector.broadcast %3 : vector<4x1xf32> to vector<4x504xf32>
    %5 = arith.addf %2, %4 : vector<4x504xf32>
    %6 = arith.truncf %5 : vector<4x504xf32> to vector<4x504xbf16>
    %c0_5 = arith.constant 0 : index
    %c0_6 = arith.constant 0 : index
    %7 = vector.load %arg3[%c0_5, %c0_6] : memref<4x504xbf16, #tpu.memory_space<vmem>>, vector<4x504xbf16>
    tpu.vector_store %arg3[%c0_5, %c0_6], %6 {strides = array<i32>} : memref<4x504xbf16, #tpu.memory_space<vmem>>, vector<4x504xbf16>,
    return
  }
}

module attributes {stable_mosaic.version = 11 : i64} {
  func.func @_mm_bias_act_kernel(%arg0: memref<2x8xbf16, #tpu.memory_space<vmem>>, %arg1: memref<8x504xbf16, #tpu.memory_space<vmem>>, %arg2: memref<2x1xf32, #tpu.memory_space<vmem>>, %arg3: memref<2x504xbf16, #tpu.memory_space<vmem>>) attributes {dimension_semantics = [], scalar_prefetch = 0 : i64, scratch_operands = 0 : i64, tpu.core_type = #tpu.core_type<tc>} {
    %c0 = arith.constant 0 : index
    %c0_0 = arith.constant 0 : index
    %0 = vector.load %arg0[%c0, %c0_0] : memref<2x8xbf16, #tpu.memory_space<vmem>>, vector<2x8xbf16>
    %c0_1 = arith.constant 0 : index
    %c0_2 = arith.constant 0 : index
    %1 = vector.load %arg1[%c0_1, %c0_2] : memref<8x504xbf16, #tpu.memory_space<vmem>>, vector<8x504xbf16>
    %cst = arith.constant dense<0.000000e+00> : vector<2x504xf32>
    %2 = tpu.matmul %0, %1, %cst {dimension_numbers = #tpu.dot_dimension_numbers<[1], [0], [0], [1], [0, 0, 1, 1], [], []>} : vector<2x8xbf16>, vector<8x504xbf16>, vector<2x504xf32> -> vector<2x504xf32>
    %c0_3 = arith.constant 0 : index
    %c0_4 = arith.constant 0 : index
    %3 = vector.load %arg2[%c0_3, %c0_4] : memref<2x1xf32, #tpu.memory_space<vmem>>, vector<2x1xf32>
    %4 = vector.broadcast %3 : vector<2x1xf32> to vector<2x504xf32>
    %5 = arith.addf %2, %4 : vector<2x504xf32>
    %cst_5 = arith.constant 0.000000e+00 : f32
    %6 = vector.broadcast %cst_5 : f32 to vector<2x504xf32>
    %7 = arith.cmpf oge, %5, %6 : vector<2x504xf32>
    %cst_6 = arith.constant 1.000000e-01 : f32
    %8 = vector.broadcast %cst_6 : f32 to vector<2x504xf32>
    %9 = arith.mulf %8, %5 : vector<2x504xf32>
    %10 = arith.select %7, %5, %9 : vector<2x504xi1>, vector<2x504xf32>
    %11 = arith.truncf %10 : vector<2x504xf32> to vector<2x504xbf16>
    %c0_7 = arith.constant 0 : index
    %c0_8 = arith.constant 0 : index
    %12 = vector.load %arg3[%c0_7, %c0_8] : memref<2x504xbf16, #tpu.memory_space<vmem>>, vector<2x504xbf16>
    tpu.vector_store %arg3[%c0_7, %c0_8], %11 {strides = array<i32>} : memref<2x504xbf16, #tpu.memory_space<vmem>>, vector<2x504xbf16>,
    return
  }
}

module attributes {stable_mosaic.version = 11 : i64} {
  func.func @_mm_bias_act_kernel(%arg0: memref<2x16xbf16, #tpu.memory_space<vmem>>, %arg1: memref<16x504xbf16, #tpu.memory_space<vmem>>, %arg2: memref<2x1xf32, #tpu.memory_space<vmem>>, %arg3: memref<2x504xbf16, #tpu.memory_space<vmem>>) attributes {dimension_semantics = [], scalar_prefetch = 0 : i64, scratch_operands = 0 : i64, tpu.core_type = #tpu.core_type<tc>} {
    %c0 = arith.constant 0 : index
    %c0_0 = arith.constant 0 : index
    %0 = vector.load %arg0[%c0, %c0_0] : memref<2x16xbf16, #tpu.memory_space<vmem>>, vector<2x16xbf16>
    %c0_1 = arith.constant 0 : index
    %c0_2 = arith.constant 0 : index
    %1 = vector.load %arg1[%c0_1, %c0_2] : memref<16x504xbf16, #tpu.memory_space<vmem>>, vector<16x504xbf16>
    %cst = arith.constant dense<0.000000e+00> : vector<2x504xf32>
    %2 = tpu.matmul %0, %1, %cst {dimension_numbers = #tpu.dot_dimension_numbers<[1], [0], [0], [1], [0, 0, 1, 1], [], []>} : vector<2x16xbf16>, vector<16x504xbf16>, vector<2x504xf32> -> vector<2x504xf32>
    %c0_3 = arith.constant 0 : index
    %c0_4 = arith.constant 0 : index
    %3 = vector.load %arg2[%c0_3, %c0_4] : memref<2x1xf32, #tpu.memory_space<vmem>>, vector<2x1xf32>
    %4 = vector.broadcast %3 : vector<2x1xf32> to vector<2x504xf32>
    %5 = arith.addf %2, %4 : vector<2x504xf32>
    %cst_5 = arith.constant 0.000000e+00 : f32
    %6 = vector.broadcast %cst_5 : f32 to vector<2x504xf32>
    %7 = arith.cmpf oge, %5, %6 : vector<2x504xf32>
    %cst_6 = arith.constant 1.000000e-01 : f32
    %8 = vector.broadcast %cst_6 : f32 to vector<2x504xf32>
    %9 = arith.mulf %8, %5 : vector<2x504xf32>
    %10 = arith.select %7, %5, %9 : vector<2x504xi1>, vector<2x504xf32>
    %11 = arith.truncf %10 : vector<2x504xf32> to vector<2x504xbf16>
    %c0_7 = arith.constant 0 : index
    %c0_8 = arith.constant 0 : index
    %12 = vector.load %arg3[%c0_7, %c0_8] : memref<2x504xbf16, #tpu.memory_space<vmem>>, vector<2x504xbf16>
    tpu.vector_store %arg3[%c0_7, %c0_8], %11 {strides = array<i32>} : memref<2x504xbf16, #tpu.memory_space<vmem>>, vector<2x504xbf16>,
    return
  }
}

module attributes {stable_mosaic.version = 11 : i64} {
  func.func @_mm_bias_act_kernel(%arg0: memref<2x32xbf16, #tpu.memory_space<vmem>>, %arg1: memref<32x420xbf16, #tpu.memory_space<vmem>>, %arg2: memref<2x1xf32, #tpu.memory_space<vmem>>, %arg3: memref<2x420xbf16, #tpu.memory_space<vmem>>) attributes {dimension_semantics = [], scalar_prefetch = 0 : i64, scratch_operands = 0 : i64, tpu.core_type = #tpu.core_type<tc>} {
    %c0 = arith.constant 0 : index
    %c0_0 = arith.constant 0 : index
    %0 = vector.load %arg0[%c0, %c0_0] : memref<2x32xbf16, #tpu.memory_space<vmem>>, vector<2x32xbf16>
    %c0_1 = arith.constant 0 : index
    %c0_2 = arith.constant 0 : index
    %1 = vector.load %arg1[%c0_1, %c0_2] : memref<32x420xbf16, #tpu.memory_space<vmem>>, vector<32x420xbf16>
    %cst = arith.constant dense<0.000000e+00> : vector<2x420xf32>
    %2 = tpu.matmul %0, %1, %cst {dimension_numbers = #tpu.dot_dimension_numbers<[1], [0], [0], [1], [0, 0, 1, 1], [], []>} : vector<2x32xbf16>, vector<32x420xbf16>, vector<2x420xf32> -> vector<2x420xf32>
    %c0_3 = arith.constant 0 : index
    %c0_4 = arith.constant 0 : index
    %3 = vector.load %arg2[%c0_3, %c0_4] : memref<2x1xf32, #tpu.memory_space<vmem>>, vector<2x1xf32>
    %4 = vector.broadcast %3 : vector<2x1xf32> to vector<2x420xf32>
    %5 = arith.addf %2, %4 : vector<2x420xf32>
    %cst_5 = arith.constant 0.000000e+00 : f32
    %6 = vector.broadcast %cst_5 : f32 to vector<2x420xf32>
    %7 = arith.cmpf oge, %5, %6 : vector<2x420xf32>
    %cst_6 = arith.constant 1.000000e-01 : f32
    %8 = vector.broadcast %cst_6 : f32 to vector<2x420xf32>
    %9 = arith.mulf %8, %5 : vector<2x420xf32>
    %10 = arith.select %7, %5, %9 : vector<2x420xi1>, vector<2x420xf32>
    %11 = arith.truncf %10 : vector<2x420xf32> to vector<2x420xbf16>
    %c0_7 = arith.constant 0 : index
    %c0_8 = arith.constant 0 : index
    %12 = vector.load %arg3[%c0_7, %c0_8] : memref<2x420xbf16, #tpu.memory_space<vmem>>, vector<2x420xbf16>
    tpu.vector_store %arg3[%c0_7, %c0_8], %11 {strides = array<i32>} : memref<2x420xbf16, #tpu.memory_space<vmem>>, vector<2x420xbf16>,
    return
  }
}

module attributes {stable_mosaic.version = 11 : i64} {
  func.func @_mm_bias_act_kernel(%arg0: memref<2x16xbf16, #tpu.memory_space<vmem>>, %arg1: memref<16x420xbf16, #tpu.memory_space<vmem>>, %arg2: memref<2x1xf32, #tpu.memory_space<vmem>>, %arg3: memref<2x420xbf16, #tpu.memory_space<vmem>>) attributes {dimension_semantics = [], scalar_prefetch = 0 : i64, scratch_operands = 0 : i64, tpu.core_type = #tpu.core_type<tc>} {
    %c0 = arith.constant 0 : index
    %c0_0 = arith.constant 0 : index
    %0 = vector.load %arg0[%c0, %c0_0] : memref<2x16xbf16, #tpu.memory_space<vmem>>, vector<2x16xbf16>
    %c0_1 = arith.constant 0 : index
    %c0_2 = arith.constant 0 : index
    %1 = vector.load %arg1[%c0_1, %c0_2] : memref<16x420xbf16, #tpu.memory_space<vmem>>, vector<16x420xbf16>
    %cst = arith.constant dense<0.000000e+00> : vector<2x420xf32>
    %2 = tpu.matmul %0, %1, %cst {dimension_numbers = #tpu.dot_dimension_numbers<[1], [0], [0], [1], [0, 0, 1, 1], [], []>} : vector<2x16xbf16>, vector<16x420xbf16>, vector<2x420xf32> -> vector<2x420xf32>
    %c0_3 = arith.constant 0 : index
    %c0_4 = arith.constant 0 : index
    %3 = vector.load %arg2[%c0_3, %c0_4] : memref<2x1xf32, #tpu.memory_space<vmem>>, vector<2x1xf32>
    %4 = vector.broadcast %3 : vector<2x1xf32> to vector<2x420xf32>
    %5 = arith.addf %2, %4 : vector<2x420xf32>
    %cst_5 = arith.constant 0.000000e+00 : f32
    %6 = vector.broadcast %cst_5 : f32 to vector<2x420xf32>
    %7 = arith.cmpf oge, %5, %6 : vector<2x420xf32>
    %cst_6 = arith.constant 1.000000e-01 : f32
    %8 = vector.broadcast %cst_6 : f32 to vector<2x420xf32>
    %9 = arith.mulf %8, %5 : vector<2x420xf32>
    %10 = arith.select %7, %5, %9 : vector<2x420xi1>, vector<2x420xf32>
    %11 = arith.truncf %10 : vector<2x420xf32> to vector<2x420xbf16>
    %c0_7 = arith.constant 0 : index
    %c0_8 = arith.constant 0 : index
    %12 = vector.load %arg3[%c0_7, %c0_8] : memref<2x420xbf16, #tpu.memory_space<vmem>>, vector<2x420xbf16>
    tpu.vector_store %arg3[%c0_7, %c0_8], %11 {strides = array<i32>} : memref<2x420xbf16, #tpu.memory_space<vmem>>, vector<2x420xbf16>,
    return
  }
}

module attributes {stable_mosaic.version = 11 : i64} {
  func.func @_mm_bias_act_kernel(%arg0: memref<2x64xbf16, #tpu.memory_space<vmem>>, %arg1: memref<64x350xbf16, #tpu.memory_space<vmem>>, %arg2: memref<2x1xf32, #tpu.memory_space<vmem>>, %arg3: memref<2x350xbf16, #tpu.memory_space<vmem>>) attributes {dimension_semantics = [], scalar_prefetch = 0 : i64, scratch_operands = 0 : i64, tpu.core_type = #tpu.core_type<tc>} {
    %c0 = arith.constant 0 : index
    %c0_0 = arith.constant 0 : index
    %0 = vector.load %arg0[%c0, %c0_0] : memref<2x64xbf16, #tpu.memory_space<vmem>>, vector<2x64xbf16>
    %c0_1 = arith.constant 0 : index
    %c0_2 = arith.constant 0 : index
    %1 = vector.load %arg1[%c0_1, %c0_2] : memref<64x350xbf16, #tpu.memory_space<vmem>>, vector<64x350xbf16>
    %cst = arith.constant dense<0.000000e+00> : vector<2x350xf32>
    %2 = tpu.matmul %0, %1, %cst {dimension_numbers = #tpu.dot_dimension_numbers<[1], [0], [0], [1], [0, 0, 1, 1], [], []>} : vector<2x64xbf16>, vector<64x350xbf16>, vector<2x350xf32> -> vector<2x350xf32>
    %c0_3 = arith.constant 0 : index
    %c0_4 = arith.constant 0 : index
    %3 = vector.load %arg2[%c0_3, %c0_4] : memref<2x1xf32, #tpu.memory_space<vmem>>, vector<2x1xf32>
    %4 = vector.broadcast %3 : vector<2x1xf32> to vector<2x350xf32>
    %5 = arith.addf %2, %4 : vector<2x350xf32>
    %cst_5 = arith.constant 0.000000e+00 : f32
    %6 = vector.broadcast %cst_5 : f32 to vector<2x350xf32>
    %7 = arith.cmpf oge, %5, %6 : vector<2x350xf32>
    %cst_6 = arith.constant 1.000000e-01 : f32
    %8 = vector.broadcast %cst_6 : f32 to vector<2x350xf32>
    %9 = arith.mulf %8, %5 : vector<2x350xf32>
    %10 = arith.select %7, %5, %9 : vector<2x350xi1>, vector<2x350xf32>
    %11 = arith.truncf %10 : vector<2x350xf32> to vector<2x350xbf16>
    %c0_7 = arith.constant 0 : index
    %c0_8 = arith.constant 0 : index
    %12 = vector.load %arg3[%c0_7, %c0_8] : memref<2x350xbf16, #tpu.memory_space<vmem>>, vector<2x350xbf16>
    tpu.vector_store %arg3[%c0_7, %c0_8], %11 {strides = array<i32>} : memref<2x350xbf16, #tpu.memory_space<vmem>>, vector<2x350xbf16>,
    return
  }
}

module attributes {stable_mosaic.version = 11 : i64} {
  func.func @_mm_bias_act_kernel(%arg0: memref<2x32xbf16, #tpu.memory_space<vmem>>, %arg1: memref<32x350xbf16, #tpu.memory_space<vmem>>, %arg2: memref<2x1xf32, #tpu.memory_space<vmem>>, %arg3: memref<2x350xbf16, #tpu.memory_space<vmem>>) attributes {dimension_semantics = [], scalar_prefetch = 0 : i64, scratch_operands = 0 : i64, tpu.core_type = #tpu.core_type<tc>} {
    %c0 = arith.constant 0 : index
    %c0_0 = arith.constant 0 : index
    %0 = vector.load %arg0[%c0, %c0_0] : memref<2x32xbf16, #tpu.memory_space<vmem>>, vector<2x32xbf16>
    %c0_1 = arith.constant 0 : index
    %c0_2 = arith.constant 0 : index
    %1 = vector.load %arg1[%c0_1, %c0_2] : memref<32x350xbf16, #tpu.memory_space<vmem>>, vector<32x350xbf16>
    %cst = arith.constant dense<0.000000e+00> : vector<2x350xf32>
    %2 = tpu.matmul %0, %1, %cst {dimension_numbers = #tpu.dot_dimension_numbers<[1], [0], [0], [1], [0, 0, 1, 1], [], []>} : vector<2x32xbf16>, vector<32x350xbf16>, vector<2x350xf32> -> vector<2x350xf32>
    %c0_3 = arith.constant 0 : index
    %c0_4 = arith.constant 0 : index
    %3 = vector.load %arg2[%c0_3, %c0_4] : memref<2x1xf32, #tpu.memory_space<vmem>>, vector<2x1xf32>
    %4 = vector.broadcast %3 : vector<2x1xf32> to vector<2x350xf32>
    %5 = arith.addf %2, %4 : vector<2x350xf32>
    %cst_5 = arith.constant 0.000000e+00 : f32
    %6 = vector.broadcast %cst_5 : f32 to vector<2x350xf32>
    %7 = arith.cmpf oge, %5, %6 : vector<2x350xf32>
    %cst_6 = arith.constant 1.000000e-01 : f32
    %8 = vector.broadcast %cst_6 : f32 to vector<2x350xf32>
    %9 = arith.mulf %8, %5 : vector<2x350xf32>
    %10 = arith.select %7, %5, %9 : vector<2x350xi1>, vector<2x350xf32>
    %11 = arith.truncf %10 : vector<2x350xf32> to vector<2x350xbf16>
    %c0_7 = arith.constant 0 : index
    %c0_8 = arith.constant 0 : index
    %12 = vector.load %arg3[%c0_7, %c0_8] : memref<2x350xbf16, #tpu.memory_space<vmem>>, vector<2x350xbf16>
    tpu.vector_store %arg3[%c0_7, %c0_8], %11 {strides = array<i32>} : memref<2x350xbf16, #tpu.memory_space<vmem>>, vector<2x350xbf16>,
    return
  }
}

module attributes {stable_mosaic.version = 11 : i64} {
  func.func @_mm_bias_act_kernel(%arg0: memref<2x54xbf16, #tpu.memory_space<vmem>>, %arg1: memref<54x3388xbf16, #tpu.memory_space<vmem>>, %arg2: memref<2x1xf32, #tpu.memory_space<vmem>>, %arg3: memref<2x3388xf32, #tpu.memory_space<vmem>>) attributes {dimension_semantics = [], scalar_prefetch = 0 : i64, scratch_operands = 0 : i64, tpu.core_type = #tpu.core_type<tc>} {
    %c0 = arith.constant 0 : index
    %c0_0 = arith.constant 0 : index
    %0 = vector.load %arg0[%c0, %c0_0] : memref<2x54xbf16, #tpu.memory_space<vmem>>, vector<2x54xbf16>
    %c0_1 = arith.constant 0 : index
    %c0_2 = arith.constant 0 : index
    %1 = vector.load %arg1[%c0_1, %c0_2] : memref<54x3388xbf16, #tpu.memory_space<vmem>>, vector<54x3388xbf16>
    %cst = arith.constant dense<0.000000e+00> : vector<2x3388xf32>
    %2 = tpu.matmul %0, %1, %cst {dimension_numbers = #tpu.dot_dimension_numbers<[1], [0], [0], [1], [0, 0, 1, 1], [], []>} : vector<2x54xbf16>, vector<54x3388xbf16>, vector<2x3388xf32> -> vector<2x3388xf32>
    %c0_3 = arith.constant 0 : index
    %c0_4 = arith.constant 0 : index
    %3 = vector.load %arg2[%c0_3, %c0_4] : memref<2x1xf32, #tpu.memory_space<vmem>>, vector<2x1xf32>
    %4 = vector.broadcast %3 : vector<2x1xf32> to vector<2x3388xf32>
    %5 = arith.addf %2, %4 : vector<2x3388xf32>
    %cst_5 = arith.constant -5.000000e+00 : f32
    %cst_6 = arith.constant 5.000000e+00 : f32
    %6 = vector.broadcast %cst_5 : f32 to vector<2x3388xf32>
    %7 = arith.maximumf %6, %5 : vector<2x3388xf32>
    %8 = vector.broadcast %cst_6 : f32 to vector<2x3388xf32>
    %9 = arith.minimumf %8, %7 : vector<2x3388xf32>
    %c0_7 = arith.constant 0 : index
    %c0_8 = arith.constant 0 : index
    %10 = vector.load %arg3[%c0_7, %c0_8] : memref<2x3388xf32, #tpu.memory_space<vmem>>, vector<2x3388xf32>
    tpu.vector_store %arg3[%c0_7, %c0_8], %9 {strides = array<i32>} : memref<2x3388xf32, #tpu.memory_space<vmem>>, vector<2x3388xf32>,
    return
  }
}

</mosaic_0001>

<llo_original>
// kernel: _lambda_.18
$region0: #{_lambda_.18}
  #allocation0 [shape = 'u32[]', space=smem, size = 0x4, offset = 0x4, fixed_abs, tag = 'smem constant byte address 0x4 - core index']
  #allocation1 [shape = 'u32[144,128]{1,0:T(1,128)}', space=vmem, size = 0x12000, scoped, tag = 'internal scratch']
  %s0 = inlined_call_operand.hbm [shape: bf16[4,8], index: 0, kind: input, shape index: {}]
  %s1 = inlined_call_operand.vmem [shape: bf16[8,72], index: 1, kind: input, shape index: {}]
  %s2 = inlined_call_operand.hbm [shape: f32[4,1], index: 2, kind: input, shape index: {}]
  %s3 = inlined_call_operand.vmem [shape: bf16[4,72], index: 3, kind: output, shape index: {}]
  %s4 = sld [smem:[#allocation0]]
  $region30: #{_lambda_.18} parent=0
    _
  %s6 = ssub.s32 1, %s4
  %s7 = scalar_select 0, %s6, %s4
  $region1: #{_lambda_.18} parent=0
    #allocation2 [shape = 'u8[1024]{0}', space=vmem, size = 0x400, scoped, tag = 'input window, operand 0, single buffered']
    #allocation3 [shape = 's32[1]{0}', space=sflag, size = 0x4, scoped, tag = 'scoped memory for _lambda_.18']
    #allocation4 [shape = 'u8[2048]{0}', space=vmem, size = 0x800, scoped, tag = 'input window, operand 2, single buffered']
    #allocation5 [shape = 's32[1]{0}', space=sflag, size = 0x4, scoped, tag = 'scoped memory for _lambda_.18']
    %8 = vsyncpa [#allocation3], 0
    %9 = vsyncpa [#allocation5], 0
    // Predicated region
    $region2: #{_lambda_.18} parent=1 // pred_check
      _
    $region3: #{_lambda_.18} parent=1 // pred_check_branch
      %11 = sbr.rel (0) target = $region5
    $region4: #{_lambda_.18} parent=1 // pred_region
      %s13 = ssub.s32 32, 32
      %14 = vsyncadd [#allocation3], %s13
      %s16 = sshll.u32 [#allocation2], 4
      %s17 = int_to_ptr.vmem [resolvable:$true] %s16
      %19 = dma.hbm_to_vmem [thread:$0]  %s0, 32, %s17, [#allocation3]
    $region5: #{_lambda_.18} parent=1 // pred_fallthru
      _
    // Predicated region
    $region6: #{_lambda_.18} parent=1 // pred_check
      _
    $region7: #{_lambda_.18} parent=1 // pred_check_branch
      %21 = sbr.rel (0) target = $region9
    $region8: #{_lambda_.18} parent=1 // pred_region
      _
    $region9: #{_lambda_.18} parent=1 // pred_fallthru
      _
    // Predicated region
    $region10: #{_lambda_.18} parent=1 // pred_check
      _
    $region11: #{_lambda_.18} parent=1 // pred_check_branch
      %23 = sbr.rel (0) target = $region13
    $region12: #{_lambda_.18} parent=1 // pred_region
      %s25 = ssub.s32 64, 64
      %26 = vsyncadd [#allocation5], %s25
      %s28 = sshll.u32 [#allocation4], 4
      %s29 = int_to_ptr.vmem [resolvable:$true] %s28
      %31 = dma.hbm_to_vmem [thread:$0]  %s2, 64, %s29, [#allocation5]
    $region13: #{_lambda_.18} parent=1 // pred_fallthru
      _
    // Predicated region
    $region14: #{_lambda_.18} parent=1 // pred_check
      _
    $region15: #{_lambda_.18} parent=1 // pred_check_branch
      %33 = sbr.rel (0) target = $region17
    $region16: #{_lambda_.18} parent=1 // pred_region
      %34 = dma.done [#allocation3], 32
    $region17: #{_lambda_.18} parent=1 // pred_fallthru
      _
    // Predicated region
    $region18: #{_lambda_.18} parent=1 // pred_check
      _
    $region19: #{_lambda_.18} parent=1 // pred_check_branch
      %36 = sbr.rel (0) target = $region21
    $region20: #{_lambda_.18} parent=1 // pred_region
      %37 = dma.done [#allocation5], 64
    $region21: #{_lambda_.18} parent=1 // pred_fallthru
      _
    %v39 = vld [vmem:[#allocation2] sm:$0x3]
    %v40 = vld [vmem:[%s1] sm:$0xf]
    %v41 = vld [vmem:[#allocation4] sm:$0xf]
    %43 = vset.pattern.permute.xlu0 0
    %44 = vperm.xlu0 %43, %v41
    %v45 = vpop.permute.xlu0 %44
    %vm47 = vcmask 64512
    %v49 = vsel %vm47, %v39, 0
    %vm51 = vcmask 1043456
    %v53 = vsel %vm51, %v40, 0
    %55 = vmatprep.subr.bf16.mxu0 0
    %56 = vmatpush1.bf16.msra.mxu0 %v53
    %57 = vmatprep.subr.bf16.mxu0 0
    %58 = vmatpush1.bf16.msra.mxu0 0
    %59 = vmatprep.subr.bf16.mxu0 0
    %60 = vmatpush1.bf16.msra.mxu0 0
    %61 = vmatprep.subr.bf16.mxu0 0
    %62 = vmatpush1.bf16.msra.mxu0 0
    %63 = vmatprep.subr.bf16.mxu0 0
    %64 = vmatpush1.bf16.msra.mxu0 0
    %65 = vmatprep.subr.bf16.mxu0 0
    %66 = vmatpush1.bf16.msra.mxu0 0
    %67 = vmatprep.subr.bf16.mxu0 0
    %68 = vmatpush1.bf16.msra.mxu0 0
    %69 = vmatprep.subr.bf16.mxu0 0
    %70 = vmatpush1.bf16.msra.mxu0 0
    %71 = vmatprep.subr.bf16.mxu0 0
    %72 = vmatpush1.bf16.msra.mxu0 0
    %73 = vmatprep.subr.bf16.mxu0 0
    %74 = vmatpush1.bf16.msra.mxu0 0
    %75 = vmatprep.subr.bf16.mxu0 0
    %76 = vmatpush1.bf16.msra.mxu0 0
    %77 = vmatprep.subr.bf16.mxu0 0
    %78 = vmatpush1.bf16.msra.mxu0 0
    %79 = vmatprep.subr.bf16.mxu0 0
    %80 = vmatpush1.bf16.msra.mxu0 0
    %81 = vmatprep.subr.bf16.mxu0 0
    %82 = vmatpush1.bf16.msra.mxu0 0
    %83 = vmatprep.subr.bf16.mxu0 0
    %84 = vmatpush1.bf16.msra.mxu0 0
    %85 = vmatprep.subr.bf16.mxu0 0
    %86 = vmatpush1.bf16.msra.mxu0 0
    %87 = vmatprep.mubr.bf16.mxu0 0
    %88 = vmatmul.mubr.bf16.gmra.mrb[0].mxu0 %v49
    %v89 = vpop.f32.mrb[0].mxu0
    %v90 = vadd.f32 %v45, %v89
    %v91 = vpop.f32.mrb[0].mxu0
    %v92 = vpop.f32.mrb[0].mxu0
    %v93 = vpop.f32.mrb[0].mxu0
    %94 = vdwg.mxu0
    %vm95 = vcmp.ge.f32.partialorder %v90, 0.0
    %v96 = vmul.f32 %v90, 0.1
    %v97 = vsel %vm95, %v90, %v96
    %v98 = vpack.c.bf16 %v97, %v97
    %vm99 = vcmask 582656
    %100 = vst.msk [vmem:[%s3] sm:$0x3] %vm99, %v98
    // Predicated region
    $region22: #{_lambda_.18} parent=1 // pred_check
      _
    $region23: #{_lambda_.18} parent=1 // pred_check_branch
      %102 = sbr.rel (0) target = $region25
    $region24: #{_lambda_.18} parent=1 // pred_region
      _
    $region25: #{_lambda_.18} parent=1 // pred_fallthru
      _
    // Predicated region
    $region26: #{_lambda_.18} parent=1 // pred_check
      _
    $region27: #{_lambda_.18} parent=1 // pred_check_branch
      %104 = sbr.rel (0) target = $region29
    $region28: #{_lambda_.18} parent=1 // pred_region
      _
    $region29: #{_lambda_.18} parent=1 // pred_fallthru
      _
    %105 = vsyncpa [#allocation3], 1
    %106 = vsyncpa [#allocation5], 1

// kernel: _lambda_.19
$region0: #{_lambda_.19}
  #allocation0 [shape = 'u32[]', space=smem, size = 0x4, offset = 0x4, fixed_abs, tag = 'smem constant byte address 0x4 - core index']
  #allocation1 [shape = 'u32[144,128]{1,0:T(1,128)}', space=vmem, size = 0x12000, scoped, tag = 'internal scratch']
  %s0 = inlined_call_operand.hbm [shape: bf16[4,16], index: 0, kind: input, shape index: {}]
  %s1 = inlined_call_operand.vmem [shape: bf16[16,54], index: 1, kind: input, shape index: {}]
  %s2 = inlined_call_operand.hbm [shape: f32[4,1], index: 2, kind: input, shape index: {}]
  %s3 = inlined_call_operand.vmem [shape: bf16[4,54], index: 3, kind: output, shape index: {}]
  %s4 = sld [smem:[#allocation0]]
  $region30: #{_lambda_.19} parent=0
    _
  %s6 = ssub.s32 1, %s4
  %s7 = scalar_select 0, %s6, %s4
  $region1: #{_lambda_.19} parent=0
    #allocation2 [shape = 'u8[1024]{0}', space=vmem, size = 0x400, scoped, tag = 'input window, operand 0, single buffered']
    #allocation3 [shape = 's32[1]{0}', space=sflag, size = 0x4, scoped, tag = 'scoped memory for _lambda_.19']
    #allocation4 [shape = 'u8[2048]{0}', space=vmem, size = 0x800, scoped, tag = 'input window, operand 2, single buffered']
    #allocation5 [shape = 's32[1]{0}', space=sflag, size = 0x4, scoped, tag = 'scoped memory for _lambda_.19']
    %8 = vsyncpa [#allocation3], 0
    %9 = vsyncpa [#allocation5], 0
    // Predicated region
    $region2: #{_lambda_.19} parent=1 // pred_check
      _
    $region3: #{_lambda_.19} parent=1 // pred_check_branch
      %11 = sbr.rel (0) target = $region5
    $region4: #{_lambda_.19} parent=1 // pred_region
      %s13 = ssub.s32 32, 32
      %14 = vsyncadd [#allocation3], %s13
      %s16 = sshll.u32 [#allocation2], 4
      %s17 = int_to_ptr.vmem [resolvable:$true] %s16
      %19 = dma.hbm_to_vmem [thread:$0]  %s0, 32, %s17, [#allocation3]
    $region5: #{_lambda_.19} parent=1 // pred_fallthru
      _
    // Predicated region
    $region6: #{_lambda_.19} parent=1 // pred_check
      _
    $region7: #{_lambda_.19} parent=1 // pred_check_branch
      %21 = sbr.rel (0) target = $region9
    $region8: #{_lambda_.19} parent=1 // pred_region
      _
    $region9: #{_lambda_.19} parent=1 // pred_fallthru
      _
    // Predicated region
    $region10: #{_lambda_.19} parent=1 // pred_check
      _
    $region11: #{_lambda_.19} parent=1 // pred_check_branch
      %23 = sbr.rel (0) target = $region13
    $region12: #{_lambda_.19} parent=1 // pred_region
      %s25 = ssub.s32 64, 64
      %26 = vsyncadd [#allocation5], %s25
      %s28 = sshll.u32 [#allocation4], 4
      %s29 = int_to_ptr.vmem [resolvable:$true] %s28
      %31 = dma.hbm_to_vmem [thread:$0]  %s2, 64, %s29, [#allocation5]
    $region13: #{_lambda_.19} parent=1 // pred_fallthru
      _
    // Predicated region
    $region14: #{_lambda_.19} parent=1 // pred_check
      _
    $region15: #{_lambda_.19} parent=1 // pred_check_branch
      %33 = sbr.rel (0) target = $region17
    $region16: #{_lambda_.19} parent=1 // pred_region
      %34 = dma.done [#allocation3], 32
    $region17: #{_lambda_.19} parent=1 // pred_fallthru
      _
    // Predicated region
    $region18: #{_lambda_.19} parent=1 // pred_check
      _
    $region19: #{_lambda_.19} parent=1 // pred_check_branch
      %36 = sbr.rel (0) target = $region21
    $region20: #{_lambda_.19} parent=1 // pred_region
      %37 = dma.done [#allocation5], 64
    $region21: #{_lambda_.19} parent=1 // pred_fallthru
      _
    %v39 = vld [vmem:[#allocation2] sm:$0x3]
    %v40 = vld [vmem:[%s1] sm:$0xf]
    %v41 = vld [vmem:[%s1 + $0x4] sm:$0xf]
    %v42 = vld [vmem:[#allocation4] sm:$0xf]
    %44 = vset.pattern.permute.xlu0 0
    %45 = vperm.xlu0 %44, %v42
    %v46 = vpop.permute.xlu0 %45
    %v50 = vunpack.c.l.b16 %v40
    %v51 = vunpack.c.l.b16 %v41
    %v52 = vpack.c.b16 %v51, %v50
    %vm54 = vcmask 130048
    %v56 = vsel %vm54, %v39, 0
    %58 = vmatprep.subr.bf16.mxu0 0
    %59 = vmatpush1.bf16.msra.mxu0 %v52
    %60 = vmatprep.subr.bf16.mxu0 0
    %61 = vmatpush1.bf16.msra.mxu0 0
    %62 = vmatprep.subr.bf16.mxu0 0
    %63 = vmatpush1.bf16.msra.mxu0 0
    %64 = vmatprep.subr.bf16.mxu0 0
    %65 = vmatpush1.bf16.msra.mxu0 0
    %66 = vmatprep.subr.bf16.mxu0 0
    %67 = vmatpush1.bf16.msra.mxu0 0
    %68 = vmatprep.subr.bf16.mxu0 0
    %69 = vmatpush1.bf16.msra.mxu0 0
    %70 = vmatprep.subr.bf16.mxu0 0
    %71 = vmatpush1.bf16.msra.mxu0 0
    %72 = vmatprep.subr.bf16.mxu0 0
    %73 = vmatpush1.bf16.msra.mxu0 0
    %74 = vmatprep.subr.bf16.mxu0 0
    %75 = vmatpush1.bf16.msra.mxu0 0
    %76 = vmatprep.subr.bf16.mxu0 0
    %77 = vmatpush1.bf16.msra.mxu0 0
    %78 = vmatprep.subr.bf16.mxu0 0
    %79 = vmatpush1.bf16.msra.mxu0 0
    %80 = vmatprep.subr.bf16.mxu0 0
    %81 = vmatpush1.bf16.msra.mxu0 0
    %82 = vmatprep.subr.bf16.mxu0 0
    %83 = vmatpush1.bf16.msra.mxu0 0
    %84 = vmatprep.subr.bf16.mxu0 0
    %85 = vmatpush1.bf16.msra.mxu0 0
    %86 = vmatprep.subr.bf16.mxu0 0
    %87 = vmatpush1.bf16.msra.mxu0 0
    %88 = vmatprep.subr.bf16.mxu0 0
    %89 = vmatpush1.bf16.msra.mxu0 0
    %90 = vmatprep.mubr.bf16.mxu0 0
    %91 = vmatmul.mubr.bf16.gmra.mrb[0].mxu0 %v56
    %v92 = vpop.f32.mrb[0].mxu0
    %v93 = vadd.f32 %v46, %v92
    %v94 = vpop.f32.mrb[0].mxu0
    %v95 = vpop.f32.mrb[0].mxu0
    %v96 = vpop.f32.mrb[0].mxu0
    %97 = vdwg.mxu0
    %vm98 = vcmp.ge.f32.partialorder %v93, 0.0
    %v99 = vmul.f32 %v93, 0.1
    %v100 = vsel %vm98, %v93, %v99
    %v101 = vpack.c.bf16 %v100, %v100
    %vm102 = vcmask 435200
    %103 = vst.msk [vmem:[%s3] sm:$0x3] %vm102, %v101
    // Predicated region
    $region22: #{_lambda_.19} parent=1 // pred_check
      _
    $region23: #{_lambda_.19} parent=1 // pred_check_branch
      %105 = sbr.rel (0) target = $region25
    $region24: #{_lambda_.19} parent=1 // pred_region
      _
    $region25: #{_lambda_.19} parent=1 // pred_fallthru
      _
    // Predicated region
    $region26: #{_lambda_.19} parent=1 // pred_check
      _
    $region27: #{_lambda_.19} parent=1 // pred_check_branch
      %107 = sbr.rel (0) target = $region29
    $region28: #{_lambda_.19} parent=1 // pred_region
      _
    $region29: #{_lambda_.19} parent=1 // pred_fallthru
      _
    %108 = vsyncpa [#allocation3], 1
    %109 = vsyncpa [#allocation5], 1

// kernel: _lambda_.24
$region0: #{_lambda_.24}
  #allocation0 [shape = 'u32[]', space=smem, size = 0x4, offset = 0x4, fixed_abs, tag = 'smem constant byte address 0x4 - core index']
  #allocation1 [shape = 'u32[144,128]{1,0:T(1,128)}', space=vmem, size = 0x12000, scoped, tag = 'internal scratch']
  %s0 = inlined_call_operand.hbm [shape: bf16[4,32], index: 0, kind: input, shape index: {}]
  %s1 = inlined_call_operand.vmem [shape: bf16[32,72], index: 1, kind: input, shape index: {}]
  %s2 = inlined_call_operand.hbm [shape: f32[4,1], index: 2, kind: input, shape index: {}]
  %s3 = inlined_call_operand.vmem [shape: bf16[4,72], index: 3, kind: output, shape index: {}]
  %s4 = sld [smem:[#allocation0]]
  $region30: #{_lambda_.24} parent=0
    _
  %s6 = ssub.s32 1, %s4
  %s7 = scalar_select 0, %s6, %s4
  $region1: #{_lambda_.24} parent=0
    #allocation2 [shape = 'u8[1024]{0}', space=vmem, size = 0x400, scoped, tag = 'input window, operand 0, single buffered']
    #allocation3 [shape = 's32[1]{0}', space=sflag, size = 0x4, scoped, tag = 'scoped memory for _lambda_.24']
    #allocation4 [shape = 'u8[2048]{0}', space=vmem, size = 0x800, scoped, tag = 'input window, operand 2, single buffered']
    #allocation5 [shape = 's32[1]{0}', space=sflag, size = 0x4, scoped, tag = 'scoped memory for _lambda_.24']
    %8 = vsyncpa [#allocation3], 0
    %9 = vsyncpa [#allocation5], 0
    // Predicated region
    $region2: #{_lambda_.24} parent=1 // pred_check
      _
    $region3: #{_lambda_.24} parent=1 // pred_check_branch
      %11 = sbr.rel (0) target = $region5
    $region4: #{_lambda_.24} parent=1 // pred_region
      %s13 = ssub.s32 32, 32
      %14 = vsyncadd [#allocation3], %s13
      %s16 = sshll.u32 [#allocation2], 4
      %s17 = int_to_ptr.vmem [resolvable:$true] %s16
      %19 = dma.hbm_to_vmem [thread:$0]  %s0, 32, %s17, [#allocation3]
    $region5: #{_lambda_.24} parent=1 // pred_fallthru
      _
    // Predicated region
    $region6: #{_lambda_.24} parent=1 // pred_check
      _
    $region7: #{_lambda_.24} parent=1 // pred_check_branch
      %21 = sbr.rel (0) target = $region9
    $region8: #{_lambda_.24} parent=1 // pred_region
      _
    $region9: #{_lambda_.24} parent=1 // pred_fallthru
      _
    // Predicated region
    $region10: #{_lambda_.24} parent=1 // pred_check
      _
    $region11: #{_lambda_.24} parent=1 // pred_check_branch
      %23 = sbr.rel (0) target = $region13
    $region12: #{_lambda_.24} parent=1 // pred_region
      %s25 = ssub.s32 64, 64
      %26 = vsyncadd [#allocation5], %s25
      %s28 = sshll.u32 [#allocation4], 4
      %s29 = int_to_ptr.vmem [resolvable:$true] %s28
      %31 = dma.hbm_to_vmem [thread:$0]  %s2, 64, %s29, [#allocation5]
    $region13: #{_lambda_.24} parent=1 // pred_fallthru
      _
    // Predicated region
    $region14: #{_lambda_.24} parent=1 // pred_check
      _
    $region15: #{_lambda_.24} parent=1 // pred_check_branch
      %33 = sbr.rel (0) target = $region17
    $region16: #{_lambda_.24} parent=1 // pred_region
      %34 = dma.done [#allocation3], 32
    $region17: #{_lambda_.24} parent=1 // pred_fallthru
      _
    // Predicated region
    $region18: #{_lambda_.24} parent=1 // pred_check
      _
    $region19: #{_lambda_.24} parent=1 // pred_check_branch
      %36 = sbr.rel (0) target = $region21
    $region20: #{_lambda_.24} parent=1 // pred_region
      %37 = dma.done [#allocation5], 64
    $region21: #{_lambda_.24} parent=1 // pred_fallthru
      _
    %v39 = vld [vmem:[#allocation2] sm:$0x3]
    %v40 = vld [vmem:[%s1] sm:$0xf]
    %v41 = vld [vmem:[%s1 + $0x4] sm:$0xf]
    %v42 = vld [vmem:[%s1 + $0x8] sm:$0xf]
    %v43 = vld [vmem:[%s1 + $0xc] sm:$0xf]
    %v44 = vld [vmem:[#allocation4] sm:$0xf]
    %46 = vset.pattern.permute.xlu0 0
    %47 = vperm.xlu0 %46, %v44
    %v48 = vpop.permute.xlu0 %47
    %v54 = vunpack.c.l.b16 %v40
    %v55 = vunpack.c.l.b16 %v41
    %v56 = vunpack.c.l.b16 %v42
    %v57 = vunpack.c.l.b16 %v43
    %v58 = vpack.c.b16 %v55, %v54
    %v59 = vpack.c.b16 %v57, %v56
    %vm62 = vcmask 261120
    %v64 = vsel %vm62, %v39, 0
    %66 = vmatprep.subr.bf16.mxu0 0
    %67 = vmatpush1.bf16.msra.mxu0 %v58
    %68 = vmatprep.subr.bf16.mxu0 0
    %69 = vmatpush1.bf16.msra.mxu0 %v59
    %70 = vmatprep.subr.bf16.mxu0 0
    %71 = vmatpush1.bf16.msra.mxu0 0
    %72 = vmatprep.subr.bf16.mxu0 0
    %73 = vmatpush1.bf16.msra.mxu0 0
    %74 = vmatprep.subr.bf16.mxu0 0
    %75 = vmatpush1.bf16.msra.mxu0 0
    %76 = vmatprep.subr.bf16.mxu0 0
    %77 = vmatpush1.bf16.msra.mxu0 0
    %78 = vmatprep.subr.bf16.mxu0 0
    %79 = vmatpush1.bf16.msra.mxu0 0
    %80 = vmatprep.subr.bf16.mxu0 0
    %81 = vmatpush1.bf16.msra.mxu0 0
    %82 = vmatprep.subr.bf16.mxu0 0
    %83 = vmatpush1.bf16.msra.mxu0 0
    %84 = vmatprep.subr.bf16.mxu0 0
    %85 = vmatpush1.bf16.msra.mxu0 0
    %86 = vmatprep.subr.bf16.mxu0 0
    %87 = vmatpush1.bf16.msra.mxu0 0
    %88 = vmatprep.subr.bf16.mxu0 0
    %89 = vmatpush1.bf16.msra.mxu0 0
    %90 = vmatprep.subr.bf16.mxu0 0
    %91 = vmatpush1.bf16.msra.mxu0 0
    %92 = vmatprep.subr.bf16.mxu0 0
    %93 = vmatpush1.bf16.msra.mxu0 0
    %94 = vmatprep.subr.bf16.mxu0 0
    %95 = vmatpush1.bf16.msra.mxu0 0
    %96 = vmatprep.subr.bf16.mxu0 0
    %97 = vmatpush1.bf16.msra.mxu0 0
    %98 = vmatprep.mubr.bf16.mxu0 0
    %99 = vmatmul.mubr.bf16.gmra.mrb[0].mxu0 %v64
    %v100 = vpop.f32.mrb[0].mxu0
    %v101 = vadd.f32 %v48, %v100
    %v102 = vpop.f32.mrb[0].mxu0
    %v103 = vpop.f32.mrb[0].mxu0
    %v104 = vpop.f32.mrb[0].mxu0
    %105 = vdwg.mxu0
    %vm106 = vcmp.ge.f32.partialorder %v101, 0.0
    %v107 = vmul.f32 %v101, 0.1
    %v108 = vsel %vm106, %v101, %v107
    %v109 = vpack.c.bf16 %v108, %v108
    %vm110 = vcmask 582656
    %111 = vst.msk [vmem:[%s3] sm:$0x3] %vm110, %v109
    // Predicated region
    $region22: #{_lambda_.24} parent=1 // pred_check
      _
    $region23: #{_lambda_.24} parent=1 // pred_check_branch
      %113 = sbr.rel (0) target = $region25
    $region24: #{_lambda_.24} parent=1 // pred_region
      _
    $region25: #{_lambda_.24} parent=1 // pred_fallthru
      _
    // Predicated region
    $region26: #{_lambda_.24} parent=1 // pred_check
      _
    $region27: #{_lambda_.24} parent=1 // pred_check_branch
      %115 = sbr.rel (0) target = $region29
    $region28: #{_lambda_.24} parent=1 // pred_region
      _
    $region29: #{_lambda_.24} parent=1 // pred_fallthru
      _
    %116 = vsyncpa [#allocation3], 1
    %117 = vsyncpa [#allocation5], 1

// kernel: _lambda_.22
$region0: #{_lambda_.22}
  #allocation0 [shape = 'u32[]', space=smem, size = 0x4, offset = 0x4, fixed_abs, tag = 'smem constant byte address 0x4 - core index']
  #allocation1 [shape = 'u32[144,128]{1,0:T(1,128)}', space=vmem, size = 0x12000, scoped, tag = 'internal scratch']
  %s0 = inlined_call_operand.hbm [shape: bf16[4,16], index: 0, kind: input, shape index: {}]
  %s1 = inlined_call_operand.vmem [shape: bf16[16,72], index: 1, kind: input, shape index: {}]
  %s2 = inlined_call_operand.hbm [shape: f32[4,1], index: 2, kind: input, shape index: {}]
  %s3 = inlined_call_operand.vmem [shape: bf16[4,72], index: 3, kind: output, shape index: {}]
  %s4 = sld [smem:[#allocation0]]
  $region30: #{_lambda_.22} parent=0
    _
  %s6 = ssub.s32 1, %s4
  %s7 = scalar_select 0, %s6, %s4
  $region1: #{_lambda_.22} parent=0
    #allocation2 [shape = 'u8[1024]{0}', space=vmem, size = 0x400, scoped, tag = 'input window, operand 0, single buffered']
    #allocation3 [shape = 's32[1]{0}', space=sflag, size = 0x4, scoped, tag = 'scoped memory for _lambda_.22']
    #allocation4 [shape = 'u8[2048]{0}', space=vmem, size = 0x800, scoped, tag = 'input window, operand 2, single buffered']
    #allocation5 [shape = 's32[1]{0}', space=sflag, size = 0x4, scoped, tag = 'scoped memory for _lambda_.22']
    %8 = vsyncpa [#allocation3], 0
    %9 = vsyncpa [#allocation5], 0
    // Predicated region
    $region2: #{_lambda_.22} parent=1 // pred_check
      _
    $region3: #{_lambda_.22} parent=1 // pred_check_branch
      %11 = sbr.rel (0) target = $region5
    $region4: #{_lambda_.22} parent=1 // pred_region
      %s13 = ssub.s32 32, 32
      %14 = vsyncadd [#allocation3], %s13
      %s16 = sshll.u32 [#allocation2], 4
      %s17 = int_to_ptr.vmem [resolvable:$true] %s16
      %19 = dma.hbm_to_vmem [thread:$0]  %s0, 32, %s17, [#allocation3]
    $region5: #{_lambda_.22} parent=1 // pred_fallthru
      _
    // Predicated region
    $region6: #{_lambda_.22} parent=1 // pred_check
      _
    $region7: #{_lambda_.22} parent=1 // pred_check_branch
      %21 = sbr.rel (0) target = $region9
    $region8: #{_lambda_.22} parent=1 // pred_region
      _
    $region9: #{_lambda_.22} parent=1 // pred_fallthru
      _
    // Predicated region
    $region10: #{_lambda_.22} parent=1 // pred_check
      _
    $region11: #{_lambda_.22} parent=1 // pred_check_branch
      %23 = sbr.rel (0) target = $region13
    $region12: #{_lambda_.22} parent=1 // pred_region
      %s25 = ssub.s32 64, 64
      %26 = vsyncadd [#allocation5], %s25
      %s28 = sshll.u32 [#allocation4], 4
      %s29 = int_to_ptr.vmem [resolvable:$true] %s28
      %31 = dma.hbm_to_vmem [thread:$0]  %s2, 64, %s29, [#allocation5]
    $region13: #{_lambda_.22} parent=1 // pred_fallthru
      _
    // Predicated region
    $region14: #{_lambda_.22} parent=1 // pred_check
      _
    $region15: #{_lambda_.22} parent=1 // pred_check_branch
      %33 = sbr.rel (0) target = $region17
    $region16: #{_lambda_.22} parent=1 // pred_region
      %34 = dma.done [#allocation3], 32
    $region17: #{_lambda_.22} parent=1 // pred_fallthru
      _
    // Predicated region
    $region18: #{_lambda_.22} parent=1 // pred_check
      _
    $region19: #{_lambda_.22} parent=1 // pred_check_branch
      %36 = sbr.rel (0) target = $region21
    $region20: #{_lambda_.22} parent=1 // pred_region
      %37 = dma.done [#allocation5], 64
    $region21: #{_lambda_.22} parent=1 // pred_fallthru
      _
    %v39 = vld [vmem:[#allocation2] sm:$0x3]
    %v40 = vld [vmem:[%s1] sm:$0xf]
    %v41 = vld [vmem:[%s1 + $0x4] sm:$0xf]
    %v42 = vld [vmem:[#allocation4] sm:$0xf]
    %44 = vset.pattern.permute.xlu0 0
    %45 = vperm.xlu0 %44, %v42
    %v46 = vpop.permute.xlu0 %45
    %v50 = vunpack.c.l.b16 %v40
    %v51 = vunpack.c.l.b16 %v41
    %v52 = vpack.c.b16 %v51, %v50
    %vm54 = vcmask 130048
    %v56 = vsel %vm54, %v39, 0
    %58 = vmatprep.subr.bf16.mxu0 0
    %59 = vmatpush1.bf16.msra.mxu0 %v52
    %60 = vmatprep.subr.bf16.mxu0 0
    %61 = vmatpush1.bf16.msra.mxu0 0
    %62 = vmatprep.subr.bf16.mxu0 0
    %63 = vmatpush1.bf16.msra.mxu0 0
    %64 = vmatprep.subr.bf16.mxu0 0
    %65 = vmatpush1.bf16.msra.mxu0 0
    %66 = vmatprep.subr.bf16.mxu0 0
    %67 = vmatpush1.bf16.msra.mxu0 0
    %68 = vmatprep.subr.bf16.mxu0 0
    %69 = vmatpush1.bf16.msra.mxu0 0
    %70 = vmatprep.subr.bf16.mxu0 0
    %71 = vmatpush1.bf16.msra.mxu0 0
    %72 = vmatprep.subr.bf16.mxu0 0
    %73 = vmatpush1.bf16.msra.mxu0 0
    %74 = vmatprep.subr.bf16.mxu0 0
    %75 = vmatpush1.bf16.msra.mxu0 0
    %76 = vmatprep.subr.bf16.mxu0 0
    %77 = vmatpush1.bf16.msra.mxu0 0
    %78 = vmatprep.subr.bf16.mxu0 0
    %79 = vmatpush1.bf16.msra.mxu0 0
    %80 = vmatprep.subr.bf16.mxu0 0
    %81 = vmatpush1.bf16.msra.mxu0 0
    %82 = vmatprep.subr.bf16.mxu0 0
    %83 = vmatpush1.bf16.msra.mxu0 0
    %84 = vmatprep.subr.bf16.mxu0 0
    %85 = vmatpush1.bf16.msra.mxu0 0
    %86 = vmatprep.subr.bf16.mxu0 0
    %87 = vmatpush1.bf16.msra.mxu0 0
    %88 = vmatprep.subr.bf16.mxu0 0
    %89 = vmatpush1.bf16.msra.mxu0 0
    %90 = vmatprep.mubr.bf16.mxu0 0
    %91 = vmatmul.mubr.bf16.gmra.mrb[0].mxu0 %v56
    %v92 = vpop.f32.mrb[0].mxu0
    %v93 = vadd.f32 %v46, %v92
    %v94 = vpop.f32.mrb[0].mxu0
    %v95 = vpop.f32.mrb[0].mxu0
    %v96 = vpop.f32.mrb[0].mxu0
    %97 = vdwg.mxu0
    %vm98 = vcmp.ge.f32.partialorder %v93, 0.0
    %v99 = vmul.f32 %v93, 0.1
    %v100 = vsel %vm98, %v93, %v99
    %v101 = vpack.c.bf16 %v100, %v100
    %vm102 = vcmask 582656
    %103 = vst.msk [vmem:[%s3] sm:$0x3] %vm102, %v101
    // Predicated region
    $region22: #{_lambda_.22} parent=1 // pred_check
      _
    $region23: #{_lambda_.22} parent=1 // pred_check_branch
      %105 = sbr.rel (0) target = $region25
    $region24: #{_lambda_.22} parent=1 // pred_region
      _
    $region25: #{_lambda_.22} parent=1 // pred_fallthru
      _
    // Predicated region
    $region26: #{_lambda_.22} parent=1 // pred_check
      _
    $region27: #{_lambda_.22} parent=1 // pred_check_branch
      %107 = sbr.rel (0) target = $region29
    $region28: #{_lambda_.22} parent=1 // pred_region
      _
    $region29: #{_lambda_.22} parent=1 // pred_fallthru
      _
    %108 = vsyncpa [#allocation3], 1
    %109 = vsyncpa [#allocation5], 1

// kernel: _lambda_.23
$region0: #{_lambda_.23}
  #allocation0 [shape = 'u32[]', space=smem, size = 0x4, offset = 0x4, fixed_abs, tag = 'smem constant byte address 0x4 - core index']
  #allocation1 [shape = 'u32[144,128]{1,0:T(1,128)}', space=vmem, size = 0x12000, scoped, tag = 'internal scratch']
  %s0 = inlined_call_operand.hbm [shape: bf16[4,32], index: 0, kind: input, shape index: {}]
  %s1 = inlined_call_operand.vmem [shape: bf16[32,54], index: 1, kind: input, shape index: {}]
  %s2 = inlined_call_operand.hbm [shape: f32[4,1], index: 2, kind: input, shape index: {}]
  %s3 = inlined_call_operand.vmem [shape: bf16[4,54], index: 3, kind: output, shape index: {}]
  %s4 = sld [smem:[#allocation0]]
  $region30: #{_lambda_.23} parent=0
    _
  %s6 = ssub.s32 1, %s4
  %s7 = scalar_select 0, %s6, %s4
  $region1: #{_lambda_.23} parent=0
    #allocation2 [shape = 'u8[1024]{0}', space=vmem, size = 0x400, scoped, tag = 'input window, operand 0, single buffered']
    #allocation3 [shape = 's32[1]{0}', space=sflag, size = 0x4, scoped, tag = 'scoped memory for _lambda_.23']
    #allocation4 [shape = 'u8[2048]{0}', space=vmem, size = 0x800, scoped, tag = 'input window, operand 2, single buffered']
    #allocation5 [shape = 's32[1]{0}', space=sflag, size = 0x4, scoped, tag = 'scoped memory for _lambda_.23']
    %8 = vsyncpa [#allocation3], 0
    %9 = vsyncpa [#allocation5], 0
    // Predicated region
    $region2: #{_lambda_.23} parent=1 // pred_check
      _
    $region3: #{_lambda_.23} parent=1 // pred_check_branch
      %11 = sbr.rel (0) target = $region5
    $region4: #{_lambda_.23} parent=1 // pred_region
      %s13 = ssub.s32 32, 32
      %14 = vsyncadd [#allocation3], %s13
      %s16 = sshll.u32 [#allocation2], 4
      %s17 = int_to_ptr.vmem [resolvable:$true] %s16
      %19 = dma.hbm_to_vmem [thread:$0]  %s0, 32, %s17, [#allocation3]
    $region5: #{_lambda_.23} parent=1 // pred_fallthru
      _
    // Predicated region
    $region6: #{_lambda_.23} parent=1 // pred_check
      _
    $region7: #{_lambda_.23} parent=1 // pred_check_branch
      %21 = sbr.rel (0) target = $region9
    $region8: #{_lambda_.23} parent=1 // pred_region
      _
    $region9: #{_lambda_.23} parent=1 // pred_fallthru
      _
    // Predicated region
    $region10: #{_lambda_.23} parent=1 // pred_check
      _
    $region11: #{_lambda_.23} parent=1 // pred_check_branch
      %23 = sbr.rel (0) target = $region13
    $region12: #{_lambda_.23} parent=1 // pred_region
      %s25 = ssub.s32 64, 64
      %26 = vsyncadd [#allocation5], %s25
      %s28 = sshll.u32 [#allocation4], 4
      %s29 = int_to_ptr.vmem [resolvable:$true] %s28
      %31 = dma.hbm_to_vmem [thread:$0]  %s2, 64, %s29, [#allocation5]
    $region13: #{_lambda_.23} parent=1 // pred_fallthru
      _
    // Predicated region
    $region14: #{_lambda_.23} parent=1 // pred_check
      _
    $region15: #{_lambda_.23} parent=1 // pred_check_branch
      %33 = sbr.rel (0) target = $region17
    $region16: #{_lambda_.23} parent=1 // pred_region
      %34 = dma.done [#allocation3], 32
    $region17: #{_lambda_.23} parent=1 // pred_fallthru
      _
    // Predicated region
    $region18: #{_lambda_.23} parent=1 // pred_check
      _
    $region19: #{_lambda_.23} parent=1 // pred_check_branch
      %36 = sbr.rel (0) target = $region21
    $region20: #{_lambda_.23} parent=1 // pred_region
      %37 = dma.done [#allocation5], 64
    $region21: #{_lambda_.23} parent=1 // pred_fallthru
      _
    %v39 = vld [vmem:[#allocation2] sm:$0x3]
    %v40 = vld [vmem:[%s1] sm:$0xf]
    %v41 = vld [vmem:[%s1 + $0x4] sm:$0xf]
    %v42 = vld [vmem:[%s1 + $0x8] sm:$0xf]
    %v43 = vld [vmem:[%s1 + $0xc] sm:$0xf]
    %v44 = vld [vmem:[#allocation4] sm:$0xf]
    %46 = vset.pattern.permute.xlu0 0
    %47 = vperm.xlu0 %46, %v44
    %v48 = vpop.permute.xlu0 %47
    %v54 = vunpack.c.l.b16 %v40
    %v55 = vunpack.c.l.b16 %v41
    %v56 = vunpack.c.l.b16 %v42
    %v57 = vunpack.c.l.b16 %v43
    %v58 = vpack.c.b16 %v55, %v54
    %v59 = vpack.c.b16 %v57, %v56
    %vm62 = vcmask 261120
    %v64 = vsel %vm62, %v39, 0
    %66 = vmatprep.subr.bf16.mxu0 0
    %67 = vmatpush1.bf16.msra.mxu0 %v58
    %68 = vmatprep.subr.bf16.mxu0 0
    %69 = vmatpush1.bf16.msra.mxu0 %v59
    %70 = vmatprep.subr.bf16.mxu0 0
    %71 = vmatpush1.bf16.msra.mxu0 0
    %72 = vmatprep.subr.bf16.mxu0 0
    %73 = vmatpush1.bf16.msra.mxu0 0
    %74 = vmatprep.subr.bf16.mxu0 0
    %75 = vmatpush1.bf16.msra.mxu0 0
    %76 = vmatprep.subr.bf16.mxu0 0
    %77 = vmatpush1.bf16.msra.mxu0 0
    %78 = vmatprep.subr.bf16.mxu0 0
    %79 = vmatpush1.bf16.msra.mxu0 0
    %80 = vmatprep.subr.bf16.mxu0 0
    %81 = vmatpush1.bf16.msra.mxu0 0
    %82 = vmatprep.subr.bf16.mxu0 0
    %83 = vmatpush1.bf16.msra.mxu0 0
    %84 = vmatprep.subr.bf16.mxu0 0
    %85 = vmatpush1.bf16.msra.mxu0 0
    %86 = vmatprep.subr.bf16.mxu0 0
    %87 = vmatpush1.bf16.msra.mxu0 0
    %88 = vmatprep.subr.bf16.mxu0 0
    %89 = vmatpush1.bf16.msra.mxu0 0
    %90 = vmatprep.subr.bf16.mxu0 0
    %91 = vmatpush1.bf16.msra.mxu0 0
    %92 = vmatprep.subr.bf16.mxu0 0
    %93 = vmatpush1.bf16.msra.mxu0 0
    %94 = vmatprep.subr.bf16.mxu0 0
    %95 = vmatpush1.bf16.msra.mxu0 0
    %96 = vmatprep.subr.bf16.mxu0 0
    %97 = vmatpush1.bf16.msra.mxu0 0
    %98 = vmatprep.mubr.bf16.mxu0 0
    %99 = vmatmul.mubr.bf16.gmra.mrb[0].mxu0 %v64
    %v100 = vpop.f32.mrb[0].mxu0
    %v101 = vadd.f32 %v48, %v100
    %v102 = vpop.f32.mrb[0].mxu0
    %v103 = vpop.f32.mrb[0].mxu0
    %v104 = vpop.f32.mrb[0].mxu0
    %105 = vdwg.mxu0
    %vm106 = vcmp.ge.f32.partialorder %v101, 0.0
    %v107 = vmul.f32 %v101, 0.1
    %v108 = vsel %vm106, %v101, %v107
    %v109 = vpack.c.bf16 %v108, %v108
    %vm110 = vcmask 435200
    %111 = vst.msk [vmem:[%s3] sm:$0x3] %vm110, %v109
    // Predicated region
    $region22: #{_lambda_.23} parent=1 // pred_check
      _
    $region23: #{_lambda_.23} parent=1 // pred_check_branch
      %113 = sbr.rel (0) target = $region25
    $region24: #{_lambda_.23} parent=1 // pred_region
      _
    $region25: #{_lambda_.23} parent=1 // pred_fallthru
      _
    // Predicated region
    $region26: #{_lambda_.23} parent=1 // pred_check
      _
    $region27: #{_lambda_.23} parent=1 // pred_check_branch
      %115 = sbr.rel (0) target = $region29
    $region28: #{_lambda_.23} parent=1 // pred_region
      _
    $region29: #{_lambda_.23} parent=1 // pred_fallthru
      _
    %116 = vsyncpa [#allocation3], 1
    %117 = vsyncpa [#allocation5], 1

// kernel: _lambda_.25
$region0: #{_lambda_.25}
  #allocation0 [shape = 'u32[]', space=smem, size = 0x4, offset = 0x4, fixed_abs, tag = 'smem constant byte address 0x4 - core index']
  #allocation1 [shape = 'u32[144,128]{1,0:T(1,128)}', space=vmem, size = 0x12000, scoped, tag = 'internal scratch']
  %s0 = inlined_call_operand.hbm [shape: bf16[4,64], index: 0, kind: input, shape index: {}]
  %s1 = inlined_call_operand.vmem [shape: bf16[64,54], index: 1, kind: input, shape index: {}]
  %s2 = inlined_call_operand.hbm [shape: f32[4,1], index: 2, kind: input, shape index: {}]
  %s3 = inlined_call_operand.vmem [shape: bf16[4,54], index: 3, kind: output, shape index: {}]
  %s4 = sld [smem:[#allocation0]]
  $region30: #{_lambda_.25} parent=0
    _
  %s6 = ssub.s32 1, %s4
  %s7 = scalar_select 0, %s6, %s4
  $region1: #{_lambda_.25} parent=0
    #allocation2 [shape = 'u8[1024]{0}', space=vmem, size = 0x400, scoped, tag = 'input window, operand 0, single buffered']
    #allocation3 [shape = 's32[1]{0}', space=sflag, size = 0x4, scoped, tag = 'scoped memory for _lambda_.25']
    #allocation4 [shape = 'u8[2048]{0}', space=vmem, size = 0x800, scoped, tag = 'input window, operand 2, single buffered']
    #allocation5 [shape = 's32[1]{0}', space=sflag, size = 0x4, scoped, tag = 'scoped memory for _lambda_.25']
    %8 = vsyncpa [#allocation3], 0
    %9 = vsyncpa [#allocation5], 0
    // Predicated region
    $region2: #{_lambda_.25} parent=1 // pred_check
      _
    $region3: #{_lambda_.25} parent=1 // pred_check_branch
      %11 = sbr.rel (0) target = $region5
    $region4: #{_lambda_.25} parent=1 // pred_region
      %s13 = ssub.s32 32, 32
      %14 = vsyncadd [#allocation3], %s13
      %s16 = sshll.u32 [#allocation2], 4
      %s17 = int_to_ptr.vmem [resolvable:$true] %s16
      %19 = dma.hbm_to_vmem [thread:$0]  %s0, 32, %s17, [#allocation3]
    $region5: #{_lambda_.25} parent=1 // pred_fallthru
      _
    // Predicated region
    $region6: #{_lambda_.25} parent=1 // pred_check
      _
    $region7: #{_lambda_.25} parent=1 // pred_check_branch
      %21 = sbr.rel (0) target = $region9
    $region8: #{_lambda_.25} parent=1 // pred_region
      _
    $region9: #{_lambda_.25} parent=1 // pred_fallthru
      _
    // Predicated region
    $region10: #{_lambda_.25} parent=1 // pred_check
      _
    $region11: #{_lambda_.25} parent=1 // pred_check_branch
      %23 = sbr.rel (0) target = $region13
    $region12: #{_lambda_.25} parent=1 // pred_region
      %s25 = ssub.s32 64, 64
      %26 = vsyncadd [#allocation5], %s25
      %s28 = sshll.u32 [#allocation4], 4
      %s29 = int_to_ptr.vmem [resolvable:$true] %s28
      %31 = dma.hbm_to_vmem [thread:$0]  %s2, 64, %s29, [#allocation5]
    $region13: #{_lambda_.25} parent=1 // pred_fallthru
      _
    // Predicated region
    $region14: #{_lambda_.25} parent=1 // pred_check
      _
    $region15: #{_lambda_.25} parent=1 // pred_check_branch
      %33 = sbr.rel (0) target = $region17
    $region16: #{_lambda_.25} parent=1 // pred_region
      %34 = dma.done [#allocation3], 32
    $region17: #{_lambda_.25} parent=1 // pred_fallthru
      _
    // Predicated region
    $region18: #{_lambda_.25} parent=1 // pred_check
      _
    $region19: #{_lambda_.25} parent=1 // pred_check_branch
      %36 = sbr.rel (0) target = $region21
    $region20: #{_lambda_.25} parent=1 // pred_region
      %37 = dma.done [#allocation5], 64
    $region21: #{_lambda_.25} parent=1 // pred_fallthru
      _
    %v39 = vld [vmem:[#allocation2] sm:$0x3]
    %v40 = vld [vmem:[%s1] sm:$0xf]
    %v41 = vld [vmem:[%s1 + $0x4] sm:$0xf]
    %v42 = vld [vmem:[%s1 + $0x8] sm:$0xf]
    %v43 = vld [vmem:[%s1 + $0xc] sm:$0xf]
    %v44 = vld [vmem:[%s1 + $0x10] sm:$0xf]
    %v45 = vld [vmem:[%s1 + $0x14] sm:$0xf]
    %v46 = vld [vmem:[%s1 + $0x18] sm:$0xf]
    %v47 = vld [vmem:[%s1 + $0x1c] sm:$0xf]
    %v48 = vld [vmem:[#allocation4] sm:$0xf]
    %50 = vset.pattern.permute.xlu0 0
    %51 = vperm.xlu0 %50, %v48
    %v52 = vpop.permute.xlu0 %51
    %v62 = vunpack.c.l.b16 %v40
    %v63 = vunpack.c.l.b16 %v41
    %v64 = vunpack.c.l.b16 %v42
    %v65 = vunpack.c.l.b16 %v43
    %v66 = vunpack.c.l.b16 %v44
    %v67 = vunpack.c.l.b16 %v45
    %v68 = vunpack.c.l.b16 %v46
    %v69 = vunpack.c.l.b16 %v47
    %v70 = vpack.c.b16 %v63, %v62
    %v71 = vpack.c.b16 %v65, %v64
    %v72 = vpack.c.b16 %v67, %v66
    %v73 = vpack.c.b16 %v69, %v68
    %vm78 = vcmask 523264
    %v80 = vsel %vm78, %v39, 0
    %82 = vmatprep.subr.bf16.mxu0 0
    %83 = vmatpush1.bf16.msra.mxu0 %v70
    %84 = vmatprep.subr.bf16.mxu0 0
    %85 = vmatpush1.bf16.msra.mxu0 %v71
    %86 = vmatprep.subr.bf16.mxu0 0
    %87 = vmatpush1.bf16.msra.mxu0 %v72
    %88 = vmatprep.subr.bf16.mxu0 0
    %89 = vmatpush1.bf16.msra.mxu0 %v73
    %90 = vmatprep.subr.bf16.mxu0 0
    %91 = vmatpush1.bf16.msra.mxu0 0
    %92 = vmatprep.subr.bf16.mxu0 0
    %93 = vmatpush1.bf16.msra.mxu0 0
    %94 = vmatprep.subr.bf16.mxu0 0
    %95 = vmatpush1.bf16.msra.mxu0 0
    %96 = vmatprep.subr.bf16.mxu0 0
    %97 = vmatpush1.bf16.msra.mxu0 0
    %98 = vmatprep.subr.bf16.mxu0 0
    %99 = vmatpush1.bf16.msra.mxu0 0
    %100 = vmatprep.subr.bf16.mxu0 0
    %101 = vmatpush1.bf16.msra.mxu0 0
    %102 = vmatprep.subr.bf16.mxu0 0
    %103 = vmatpush1.bf16.msra.mxu0 0
    %104 = vmatprep.subr.bf16.mxu0 0
    %105 = vmatpush1.bf16.msra.mxu0 0
    %106 = vmatprep.subr.bf16.mxu0 0
    %107 = vmatpush1.bf16.msra.mxu0 0
    %108 = vmatprep.subr.bf16.mxu0 0
    %109 = vmatpush1.bf16.msra.mxu0 0
    %110 = vmatprep.subr.bf16.mxu0 0
    %111 = vmatpush1.bf16.msra.mxu0 0
    %112 = vmatprep.subr.bf16.mxu0 0
    %113 = vmatpush1.bf16.msra.mxu0 0
    %114 = vmatprep.mubr.bf16.mxu0 0
    %115 = vmatmul.mubr.bf16.gmra.mrb[0].mxu0 %v80
    %v116 = vpop.f32.mrb[0].mxu0
    %v117 = vadd.f32 %v52, %v116
    %v118 = vpop.f32.mrb[0].mxu0
    %v119 = vpop.f32.mrb[0].mxu0
    %v120 = vpop.f32.mrb[0].mxu0
    %121 = vdwg.mxu0
    %vm122 = vcmp.ge.f32.partialorder %v117, 0.0
    %v123 = vmul.f32 %v117, 0.1
    %v124 = vsel %vm122, %v117, %v123
    %v125 = vpack.c.bf16 %v124, %v124
    %vm126 = vcmask 435200
    %127 = vst.msk [vmem:[%s3] sm:$0x3] %vm126, %v125
    // Predicated region
    $region22: #{_lambda_.25} parent=1 // pred_check
      _
    $region23: #{_lambda_.25} parent=1 // pred_check_branch
      %129 = sbr.rel (0) target = $region25
    $region24: #{_lambda_.25} parent=1 // pred_region
      _
    $region25: #{_lambda_.25} parent=1 // pred_fallthru
      _
    // Predicated region
    $region26: #{_lambda_.25} parent=1 // pred_check
      _
    $region27: #{_lambda_.25} parent=1 // pred_check_branch
      %131 = sbr.rel (0) target = $region29
    $region28: #{_lambda_.25} parent=1 // pred_region
      _
    $region29: #{_lambda_.25} parent=1 // pred_fallthru
      _
    %132 = vsyncpa [#allocation3], 1
    %133 = vsyncpa [#allocation5], 1

// kernel: _lambda_.27
$region0: #{_lambda_.27}
  #allocation0 [shape = 'u32[]', space=smem, size = 0x4, offset = 0x4, fixed_abs, tag = 'smem constant byte address 0x4 - core index']
  #allocation1 [shape = 'u32[144,128]{1,0:T(1,128)}', space=vmem, size = 0x12000, scoped, tag = 'internal scratch']
  %s0 = inlined_call_operand.vmem [shape: bf16[2,8], index: 0, kind: input, shape index: {}]
  %s1 = inlined_call_operand.vmem [shape: bf16[8,504], index: 1, kind: input, shape index: {}]
  %s2 = inlined_call_operand.vmem [shape: f32[2,1], index: 2, kind: input, shape index: {}]
  %s3 = inlined_call_operand.vmem [shape: bf16[2,504], index: 3, kind: output, shape index: {}]
  %s4 = sld [smem:[#allocation0]]
  $region22: #{_lambda_.27} parent=0
    _
  %s6 = ssub.s32 1, %s4
  %s7 = scalar_select 0, %s6, %s4
  // Predicated region
  $region2: #{_lambda_.27} parent=0 // pred_check
    _
  $region3: #{_lambda_.27} parent=0 // pred_check_branch
    %9 = sbr.rel (0) target = $region5
  $region4: #{_lambda_.27} parent=0 // pred_region
    _
  $region5: #{_lambda_.27} parent=0 // pred_fallthru
    _
  // Predicated region
  $region6: #{_lambda_.27} parent=0 // pred_check
    _
  $region7: #{_lambda_.27} parent=0 // pred_check_branch
    %11 = sbr.rel (0) target = $region9
  $region8: #{_lambda_.27} parent=0 // pred_region
    _
  $region9: #{_lambda_.27} parent=0 // pred_fallthru
    _
  // Predicated region
  $region10: #{_lambda_.27} parent=0 // pred_check
    _
  $region11: #{_lambda_.27} parent=0 // pred_check_branch
    %13 = sbr.rel (0) target = $region13
  $region12: #{_lambda_.27} parent=0 // pred_region
    _
  $region13: #{_lambda_.27} parent=0 // pred_fallthru
    _
  %v15 = vld [vmem:[%s0] sm:$0x1]
  %v16 = vld [vmem:[%s1] sm:$0xff]
  %v17 = vld [vmem:[%s1 + $0x8] sm:$0xff]
  %v18 = vld [vmem:[%s2] sm:$0x3]
  %20 = vset.pattern.permute.xlu0 0
  %21 = vperm.xlu0 %20, %v18
  %v22 = vpop.permute.xlu0 %21
  %v26 = vunpack.c.l.b16 %v16
  %v27 = vunpack.c.h.b16 %v16
  %v28 = vunpack.c.l.b16 %v17
  %v29 = vunpack.c.h.b16 %v17
  %v30 = vpack.c.b16 %v26, %v26
  %v31 = vpack.c.b16 %v27, %v27
  %v32 = vpack.c.b16 %v28, %v28
  %v33 = vpack.c.b16 %v29, %v29
  %vm34 = vcmask 64512
  %v36 = vsel %vm34, %v15, 0
  %vm38 = vcmask 1043456
  %v40 = vsel %vm38, %v30, 0
  %v43 = vsel %vm38, %v31, 0
  %v46 = vsel %vm38, %v32, 0
  %v49 = vsel %vm38, %v33, 0
  %51 = vmatprep.subr.bf16.mxu0 %v43
  %52 = vmatpush1.bf16.msra.mxu0 %v40
  %53 = vmatprep.subr.bf16.mxu0 0
  %54 = vmatpush1.bf16.msra.mxu0 0
  %55 = vmatprep.subr.bf16.mxu0 0
  %56 = vmatpush1.bf16.msra.mxu0 0
  %57 = vmatprep.subr.bf16.mxu0 0
  %58 = vmatpush1.bf16.msra.mxu0 0
  %59 = vmatprep.subr.bf16.mxu0 0
  %60 = vmatpush1.bf16.msra.mxu0 0
  %61 = vmatprep.subr.bf16.mxu0 0
  %62 = vmatpush1.bf16.msra.mxu0 0
  %63 = vmatprep.subr.bf16.mxu0 0
  %64 = vmatpush1.bf16.msra.mxu0 0
  %65 = vmatprep.subr.bf16.mxu0 0
  %66 = vmatpush1.bf16.msra.mxu0 0
  %67 = vmatprep.subr.bf16.mxu0 0
  %68 = vmatpush1.bf16.msra.mxu0 0
  %69 = vmatprep.subr.bf16.mxu0 0
  %70 = vmatpush1.bf16.msra.mxu0 0
  %71 = vmatprep.subr.bf16.mxu0 0
  %72 = vmatpush1.bf16.msra.mxu0 0
  %73 = vmatprep.subr.bf16.mxu0 0
  %74 = vmatpush1.bf16.msra.mxu0 0
  %75 = vmatprep.subr.bf16.mxu0 0
  %76 = vmatpush1.bf16.msra.mxu0 0
  %77 = vmatprep.subr.bf16.mxu0 0
  %78 = vmatpush1.bf16.msra.mxu0 0
  %79 = vmatprep.subr.bf16.mxu0 0
  %80 = vmatpush1.bf16.msra.mxu0 0
  %81 = vmatprep.subr.bf16.mxu0 0
  %82 = vmatpush1.bf16.msra.mxu0 0
  %83 = vmatprep.mubr.bf16.mxu0 0
  %84 = vmatmul.mubr.bf16.gmra.mrb[0].mxu0 %v36
  %v85 = vpop.f32.mrb[0].mxu0
  %v86 = vadd.f32 %v22, %v85
  %v87 = vpop.f32.mrb[0].mxu0
  %v88 = vadd.f32 %v22, %v87
  %v89 = vpop.f32.mrb[0].mxu0
  %v90 = vpop.f32.mrb[0].mxu0
  %91 = vdwg.mxu0
  %92 = vmatprep.subr.bf16.mxu0 %v49
  %93 = vmatpush1.bf16.msra.mxu0 %v46
  %94 = vmatprep.subr.bf16.mxu0 0
  %95 = vmatpush1.bf16.msra.mxu0 0
  %96 = vmatprep.subr.bf16.mxu0 0
  %97 = vmatpush1.bf16.msra.mxu0 0
  %98 = vmatprep.subr.bf16.mxu0 0
  %99 = vmatpush1.bf16.msra.mxu0 0
  %100 = vmatprep.subr.bf16.mxu0 0
  %101 = vmatpush1.bf16.msra.mxu0 0
  %102 = vmatprep.subr.bf16.mxu0 0
  %103 = vmatpush1.bf16.msra.mxu0 0
  %104 = vmatprep.subr.bf16.mxu0 0
  %105 = vmatpush1.bf16.msra.mxu0 0
  %106 = vmatprep.subr.bf16.mxu0 0
  %107 = vmatpush1.bf16.msra.mxu0 0
  %108 = vmatprep.subr.bf16.mxu0 0
  %109 = vmatpush1.bf16.msra.mxu0 0
  %110 = vmatprep.subr.bf16.mxu0 0
  %111 = vmatpush1.bf16.msra.mxu0 0
  %112 = vmatprep.subr.bf16.mxu0 0
  %113 = vmatpush1.bf16.msra.mxu0 0
  %114 = vmatprep.subr.bf16.mxu0 0
  %115 = vmatpush1.bf16.msra.mxu0 0
  %116 = vmatprep.subr.bf16.mxu0 0
  %117 = vmatpush1.bf16.msra.mxu0 0
  %118 = vmatprep.subr.bf16.mxu0 0
  %119 = vmatpush1.bf16.msra.mxu0 0
  %120 = vmatprep.subr.bf16.mxu0 0
  %121 = vmatpush1.bf16.msra.mxu0 0
  %122 = vmatprep.subr.bf16.mxu0 0
  %123 = vmatpush1.bf16.msra.mxu0 0
  %124 = vmatprep.mubr.bf16.mxu0 0
  %125 = vmatmul.mubr.bf16.gmra.mrb[0].mxu0 %v36
  %v126 = vpop.f32.mrb[0].mxu0
  %v127 = vadd.f32 %v22, %v126
  %v128 = vpop.f32.mrb[0].mxu0
  %v129 = vadd.f32 %v22, %v128
  %v130 = vpop.f32.mrb[0].mxu0
  %v131 = vpop.f32.mrb[0].mxu0
  %132 = vdwg.mxu0
  %vm133 = vcmp.ge.f32.partialorder %v86, 0.0
  %vm134 = vcmp.ge.f32.partialorder %v88, 0.0
  %vm135 = vcmp.ge.f32.partialorder %v127, 0.0
  %vm136 = vcmp.ge.f32.partialorder %v129, 0.0
  %v137 = vmul.f32 %v86, 0.1
  %v138 = vmul.f32 %v88, 0.1
  %v139 = vmul.f32 %v127, 0.1
  %v140 = vmul.f32 %v129, 0.1
  %v141 = vsel %vm133, %v86, %v137
  %v142 = vsel %vm134, %v88, %v138
  %v143 = vsel %vm135, %v127, %v139
  %v144 = vsel %vm136, %v129, %v140
  %v145 = vpack.c.bf16 %v141, %v141
  %v146 = vpack.c.bf16 %v142, %v142
  %v147 = vpack.c.bf16 %v143, %v143
  %v148 = vpack.c.bf16 %v144, %v144
  %v153 = vcombine.low %v145, %v146
  %v154 = vcombine.low %v147, %v148
  %v156 = vunpack.c.l.s4 1966171168
  %v157 = vunpack.c.0.s8 %v156
  %v158 = vlaneseq
  %v159 = vshrl.u32 %v158, 7
  %v160 = vsub.s32 %v157, %v159
  %v161 = vrot.slane %v153, %v160
  %v163 = vunpack.c.l.s4 1966171168
  %v164 = vunpack.c.0.s8 %v163
  %v165 = vlaneseq
  %v166 = vshrl.u32 %v165, 7
  %v167 = vsub.s32 %v164, %v166
  %v168 = vrot.slane %v154, %v167
  %v169 = vcombine.low %v161, %v168
  %v171 = vunpack.c.l.s4 1966171168
  %v172 = vunpack.c.0.s8 %v171
  %v173 = vlaneseq
  %v174 = vshrl.u32 %v173, 7
  %v175 = vsub.s32 %v172, %v174
  %v176 = vrot.slane %v169, %v175
  %vm178 = vcmask 1040384
  %vm179 = vcmask 1041409
  %vm180 = vmor %vm179, %vm178
  %vm181 = vcmask 1042434
  %vm182 = vmor %vm181, %vm180
  %vm183 = vcmask 977923
  %vm184 = vmor %vm183, %vm182
  %185 = vst.msk [vmem:[%s3] sm:$0xf] %vm184, %v176
  // Predicated region
  $region14: #{_lambda_.27} parent=0 // pred_check
    _
  $region15: #{_lambda_.27} parent=0 // pred_check_branch
    %187 = sbr.rel (0) target = $region17
  $region16: #{_lambda_.27} parent=0 // pred_region
    _
  $region17: #{_lambda_.27} parent=0 // pred_fallthru
    _
  // Predicated region
  $region18: #{_lambda_.27} parent=0 // pred_check
    _
  $region19: #{_lambda_.27} parent=0 // pred_check_branch
    %189 = sbr.rel (0) target = $region21
  $region20: #{_lambda_.27} parent=0 // pred_region
    _
  $region21: #{_lambda_.27} parent=0 // pred_fallthru
    _

// kernel: _lambda_.26
$region0: #{_lambda_.26}
  #allocation0 [shape = 'u32[]', space=smem, size = 0x4, offset = 0x4, fixed_abs, tag = 'smem constant byte address 0x4 - core index']
  #allocation1 [shape = 'u32[144,128]{1,0:T(1,128)}', space=vmem, size = 0x12000, scoped, tag = 'internal scratch']
  %s0 = inlined_call_operand.vmem [shape: bf16[4,108], index: 0, kind: input, shape index: {}]
  %s1 = inlined_call_operand.vmem [shape: bf16[108,504], index: 1, kind: input, shape index: {}]
  %s2 = inlined_call_operand.vmem [shape: f32[4,1], index: 2, kind: input, shape index: {}]
  %s3 = inlined_call_operand.vmem [shape: bf16[4,504], index: 3, kind: output, shape index: {}]
  %s4 = sld [smem:[#allocation0]]
  $region22: #{_lambda_.26} parent=0
    _
  %s6 = ssub.s32 1, %s4
  %s7 = scalar_select 0, %s6, %s4
  // Predicated region
  $region2: #{_lambda_.26} parent=0 // pred_check
    _
  $region3: #{_lambda_.26} parent=0 // pred_check_branch
    %9 = sbr.rel (0) target = $region5
  $region4: #{_lambda_.26} parent=0 // pred_region
    _
  $region5: #{_lambda_.26} parent=0 // pred_fallthru
    _
  // Predicated region
  $region6: #{_lambda_.26} parent=0 // pred_check
    _
  $region7: #{_lambda_.26} parent=0 // pred_check_branch
    %11 = sbr.rel (0) target = $region9
  $region8: #{_lambda_.26} parent=0 // pred_region
    _
  $region9: #{_lambda_.26} parent=0 // pred_fallthru
    _
  // Predicated region
  $region10: #{_lambda_.26} parent=0 // pred_check
    _
  $region11: #{_lambda_.26} parent=0 // pred_check_branch
    %13 = sbr.rel (0) target = $region13
  $region12: #{_lambda_.26} parent=0 // pred_region
    _
  $region13: #{_lambda_.26} parent=0 // pred_fallthru
    _
  %v15 = vld [vmem:[%s0] sm:$0x3]
  %v16 = vld [vmem:[%s1] sm:$0xff]
  %v17 = vld [vmem:[%s1 + $0x8] sm:$0xff]
  %v18 = vld [vmem:[%s1 + $0x10] sm:$0xff]
  %v19 = vld [vmem:[%s1 + $0x18] sm:$0xff]
  %v20 = vld [vmem:[%s1 + $0x20] sm:$0xff]
  %v21 = vld [vmem:[%s1 + $0x28] sm:$0xff]
  %v22 = vld [vmem:[%s1 + $0x30] sm:$0xff]
  %v23 = vld [vmem:[%s1 + $0x38] sm:$0xff]
  %v24 = vld [vmem:[%s1 + $0x40] sm:$0xff]
  %v25 = vld [vmem:[%s1 + $0x48] sm:$0xff]
  %v26 = vld [vmem:[%s1 + $0x50] sm:$0xff]
  %v27 = vld [vmem:[%s1 + $0x58] sm:$0xff]
  %v28 = vld [vmem:[%s1 + $0x60] sm:$0xff]
  %v29 = vld [vmem:[%s1 + $0x68] sm:$0xff]
  %v30 = vld [vmem:[%s1 + $0x70] sm:$0xff]
  %v31 = vld [vmem:[%s1 + $0x78] sm:$0xff]
  %v32 = vld [vmem:[%s1 + $0x80] sm:$0xff]
  %v33 = vld [vmem:[%s1 + $0x88] sm:$0xff]
  %v34 = vld [vmem:[%s1 + $0x90] sm:$0xff]
  %v35 = vld [vmem:[%s1 + $0x98] sm:$0xff]
  %v36 = vld [vmem:[%s1 + $0xa0] sm:$0xff]
  %v37 = vld [vmem:[%s1 + $0xa8] sm:$0xff]
  %v38 = vld [vmem:[%s1 + $0xb0] sm:$0xff]
  %v39 = vld [vmem:[%s1 + $0xb8] sm:$0xff]
  %v40 = vld [vmem:[%s1 + $0xc0] sm:$0xff]
  %v41 = vld [vmem:[%s1 + $0xc8] sm:$0xff]
  %v42 = vld [vmem:[%s1 + $0xd0] sm:$0x33]
  %v43 = vld [vmem:[%s1 + $0xd8] sm:$0x33]
  %v44 = vld [vmem:[%s2] sm:$0xf]
  %46 = vset.pattern.permute.xlu0 0
  %47 = vperm.xlu0 %46, %v44
  %v48 = vpop.permute.xlu0 %47
  %v78 = vunpack.c.l.b16 %v16
  %v79 = vunpack.c.h.b16 %v16
  %v80 = vunpack.c.l.b16 %v17
  %v81 = vunpack.c.h.b16 %v17
  %v82 = vunpack.c.l.b16 %v18
  %v83 = vunpack.c.h.b16 %v18
  %v84 = vunpack.c.l.b16 %v19
  %v85 = vunpack.c.h.b16 %v19
  %v86 = vunpack.c.l.b16 %v20
  %v87 = vunpack.c.h.b16 %v20
  %v88 = vunpack.c.l.b16 %v21
  %v89 = vunpack.c.h.b16 %v21
  %v90 = vunpack.c.l.b16 %v22
  %v91 = vunpack.c.h.b16 %v22
  %v92 = vunpack.c.l.b16 %v23
  %v93 = vunpack.c.h.b16 %v23
  %v94 = vunpack.c.l.b16 %v24
  %v95 = vunpack.c.h.b16 %v24
  %v96 = vunpack.c.l.b16 %v25
  %v97 = vunpack.c.h.b16 %v25
  %v98 = vunpack.c.l.b16 %v26
  %v99 = vunpack.c.h.b16 %v26
  %v100 = vunpack.c.l.b16 %v27
  %v101 = vunpack.c.h.b16 %v27
  %v102 = vunpack.c.l.b16 %v28
  %v103 = vunpack.c.h.b16 %v28
  %v104 = vunpack.c.l.b16 %v29
  %v105 = vunpack.c.h.b16 %v29
  %v106 = vunpack.c.l.b16 %v30
  %v107 = vunpack.c.h.b16 %v30
  %v108 = vunpack.c.l.b16 %v31
  %v109 = vunpack.c.h.b16 %v31
  %v110 = vunpack.c.l.b16 %v32
  %v111 = vunpack.c.h.b16 %v32
  %v112 = vunpack.c.l.b16 %v33
  %v113 = vunpack.c.h.b16 %v33
  %v114 = vunpack.c.l.b16 %v34
  %v115 = vunpack.c.h.b16 %v34
  %v116 = vunpack.c.l.b16 %v35
  %v117 = vunpack.c.h.b16 %v35
  %v118 = vunpack.c.l.b16 %v36
  %v119 = vunpack.c.h.b16 %v36
  %v120 = vunpack.c.l.b16 %v37
  %v121 = vunpack.c.h.b16 %v37
  %v122 = vunpack.c.l.b16 %v38
  %v123 = vunpack.c.h.b16 %v38
  %v124 = vunpack.c.l.b16 %v39
  %v125 = vunpack.c.h.b16 %v39
  %v126 = vunpack.c.l.b16 %v40
  %v127 = vunpack.c.h.b16 %v40
  %v128 = vunpack.c.l.b16 %v41
  %v129 = vunpack.c.h.b16 %v41
  %v130 = vunpack.c.l.b16 %v42
  %v131 = vunpack.c.h.b16 %v42
  %v132 = vunpack.c.l.b16 %v43
  %v133 = vunpack.c.h.b16 %v43
  %v134 = vpack.c.b16 %v82, %v78
  %v135 = vpack.c.b16 %v83, %v79
  %v136 = vpack.c.b16 %v84, %v80
  %v137 = vpack.c.b16 %v85, %v81
  %v138 = vpack.c.b16 %v90, %v86
  %v139 = vpack.c.b16 %v91, %v87
  %v140 = vpack.c.b16 %v92, %v88
  %v141 = vpack.c.b16 %v93, %v89
  %v142 = vpack.c.b16 %v98, %v94
  %v143 = vpack.c.b16 %v99, %v95
  %v144 = vpack.c.b16 %v100, %v96
  %v145 = vpack.c.b16 %v101, %v97
  %v146 = vpack.c.b16 %v106, %v102
  %v147 = vpack.c.b16 %v107, %v103
  %v148 = vpack.c.b16 %v108, %v104
  %v149 = vpack.c.b16 %v109, %v105
  %v150 = vpack.c.b16 %v114, %v110
  %v151 = vpack.c.b16 %v115, %v111
  %v152 = vpack.c.b16 %v116, %v112
  %v153 = vpack.c.b16 %v117, %v113
  %v154 = vpack.c.b16 %v122, %v118
  %v155 = vpack.c.b16 %v123, %v119
  %v156 = vpack.c.b16 %v124, %v120
  %v157 = vpack.c.b16 %v125, %v121
  %v158 = vpack.c.b16 %v130, %v126
  %v159 = vpack.c.b16 %v131, %v127
  %v160 = vpack.c.b16 %v132, %v128
  %v161 = vpack.c.b16 %v133, %v129
  %vm186 = vcmask 883712
  %v188 = vsel %vm186, %v15, 0
  %vm190 = vcmask 1045504
  %v192 = vsel %vm190, %v158, 0
  %v195 = vsel %vm190, %v159, 0
  %v198 = vsel %vm190, %v160, 0
  %v201 = vsel %vm190, %v161, 0
  %203 = vmatprep.subr.bf16.mxu0 %v135
  %204 = vmatpush1.bf16.msra.mxu0 %v134
  %205 = vmatprep.subr.bf16.mxu0 %v139
  %206 = vmatpush1.bf16.msra.mxu0 %v138
  %207 = vmatprep.subr.bf16.mxu0 %v143
  %208 = vmatpush1.bf16.msra.mxu0 %v142
  %209 = vmatprep.subr.bf16.mxu0 %v147
  %210 = vmatpush1.bf16.msra.mxu0 %v146
  %211 = vmatprep.subr.bf16.mxu0 %v151
  %212 = vmatpush1.bf16.msra.mxu0 %v150
  %213 = vmatprep.subr.bf16.mxu0 %v155
  %214 = vmatpush1.bf16.msra.mxu0 %v154
  %215 = vmatprep.subr.bf16.mxu0 %v195
  %216 = vmatpush1.bf16.msra.mxu0 %v192
  %217 = vmatprep.subr.bf16.mxu0 0
  %218 = vmatpush1.bf16.msra.mxu0 0
  %219 = vmatprep.subr.bf16.mxu0 0
  %220 = vmatpush1.bf16.msra.mxu0 0
  %221 = vmatprep.subr.bf16.mxu0 0
  %222 = vmatpush1.bf16.msra.mxu0 0
  %223 = vmatprep.subr.bf16.mxu0 0
  %224 = vmatpush1.bf16.msra.mxu0 0
  %225 = vmatprep.subr.bf16.mxu0 0
  %226 = vmatpush1.bf16.msra.mxu0 0
  %227 = vmatprep.subr.bf16.mxu0 0
  %228 = vmatpush1.bf16.msra.mxu0 0
  %229 = vmatprep.subr.bf16.mxu0 0
  %230 = vmatpush1.bf16.msra.mxu0 0
  %231 = vmatprep.subr.bf16.mxu0 0
  %232 = vmatpush1.bf16.msra.mxu0 0
  %233 = vmatprep.subr.bf16.mxu0 0
  %234 = vmatpush1.bf16.msra.mxu0 0
  %235 = vmatprep.mubr.bf16.mxu0 0
  %236 = vmatmul.mubr.bf16.gmra.mrb[0].mxu0 %v188
  %v237 = vpop.f32.mrb[0].mxu0
  %v238 = vadd.f32 %v48, %v237
  %v239 = vpop.f32.mrb[0].mxu0
  %v240 = vadd.f32 %v48, %v239
  %v241 = vpop.f32.mrb[0].mxu0
  %v242 = vpop.f32.mrb[0].mxu0
  %243 = vdwg.mxu0
  %244 = vmatprep.subr.bf16.mxu0 %v137
  %245 = vmatpush1.bf16.msra.mxu0 %v136
  %246 = vmatprep.subr.bf16.mxu0 %v141
  %247 = vmatpush1.bf16.msra.mxu0 %v140
  %248 = vmatprep.subr.bf16.mxu0 %v145
  %249 = vmatpush1.bf16.msra.mxu0 %v144
  %250 = vmatprep.subr.bf16.mxu0 %v149
  %251 = vmatpush1.bf16.msra.mxu0 %v148
  %252 = vmatprep.subr.bf16.mxu0 %v153
  %253 = vmatpush1.bf16.msra.mxu0 %v152
  %254 = vmatprep.subr.bf16.mxu0 %v157
  %255 = vmatpush1.bf16.msra.mxu0 %v156
  %256 = vmatprep.subr.bf16.mxu0 %v201
  %257 = vmatpush1.bf16.msra.mxu0 %v198
  %258 = vmatprep.subr.bf16.mxu0 0
  %259 = vmatpush1.bf16.msra.mxu0 0
  %260 = vmatprep.subr.bf16.mxu0 0
  %261 = vmatpush1.bf16.msra.mxu0 0
  %262 = vmatprep.subr.bf16.mxu0 0
  %263 = vmatpush1.bf16.msra.mxu0 0
  %264 = vmatprep.subr.bf16.mxu0 0
  %265 = vmatpush1.bf16.msra.mxu0 0
  %266 = vmatprep.subr.bf16.mxu0 0
  %267 = vmatpush1.bf16.msra.mxu0 0
  %268 = vmatprep.subr.bf16.mxu0 0
  %269 = vmatpush1.bf16.msra.mxu0 0
  %270 = vmatprep.subr.bf16.mxu0 0
  %271 = vmatpush1.bf16.msra.mxu0 0
  %272 = vmatprep.subr.bf16.mxu0 0
  %273 = vmatpush1.bf16.msra.mxu0 0
  %274 = vmatprep.subr.bf16.mxu0 0
  %275 = vmatpush1.bf16.msra.mxu0 0
  %276 = vmatprep.mubr.bf16.mxu0 0
  %277 = vmatmul.mubr.bf16.gmra.mrb[0].mxu0 %v188
  %v278 = vpop.f32.mrb[0].mxu0
  %v279 = vadd.f32 %v48, %v278
  %v280 = vpop.f32.mrb[0].mxu0
  %v281 = vadd.f32 %v48, %v280
  %v282 = vpop.f32.mrb[0].mxu0
  %v283 = vpop.f32.mrb[0].mxu0
  %284 = vdwg.mxu0
  %v285 = vpack.c.bf16 %v238, %v238
  %v286 = vpack.c.bf16 %v240, %v240
  %v287 = vpack.c.bf16 %v279, %v279
  %v288 = vpack.c.bf16 %v281, %v281
  %v293 = vcombine.low %v285, %v286
  %v294 = vcombine.low %v287, %v288
  %v296 = vunpack.c.l.s4 1983009808
  %v297 = vunpack.c.0.s8 %v296
  %v298 = vlaneseq
  %v299 = vshrl.u32 %v298, 7
  %v300 = vsub.s32 %v297, %v299
  %v301 = vrot.slane %v293, %v300
  %v303 = vunpack.c.l.s4 1983009808
  %v304 = vunpack.c.0.s8 %v303
  %v305 = vlaneseq
  %v306 = vshrl.u32 %v305, 7
  %v307 = vsub.s32 %v304, %v306
  %v308 = vrot.slane %v294, %v307
  %v309 = vcombine.low %v301, %v308
  %vm311 = vcmask 1041408
  %vm312 = vcmask 1043458
  %vm313 = vmor %vm312, %vm311
  %vm314 = vcmask 1045508
  %vm315 = vmor %vm314, %vm313
  %vm316 = vcmask 982022
  %vm317 = vmor %vm316, %vm315
  %318 = vst.msk [vmem:[%s3] sm:$0xff] %vm317, %v309
  // Predicated region
  $region14: #{_lambda_.26} parent=0 // pred_check
    _
  $region15: #{_lambda_.26} parent=0 // pred_check_branch
    %320 = sbr.rel (0) target = $region17
  $region16: #{_lambda_.26} parent=0 // pred_region
    _
  $region17: #{_lambda_.26} parent=0 // pred_fallthru
    _
  // Predicated region
  $region18: #{_lambda_.26} parent=0 // pred_check
    _
  $region19: #{_lambda_.26} parent=0 // pred_check_branch
    %322 = sbr.rel (0) target = $region21
  $region20: #{_lambda_.26} parent=0 // pred_region
    _
  $region21: #{_lambda_.26} parent=0 // pred_fallthru
    _

// kernel: _lambda_.28
$region0: #{_lambda_.28}
  #allocation0 [shape = 'u32[]', space=smem, size = 0x4, offset = 0x4, fixed_abs, tag = 'smem constant byte address 0x4 - core index']
  #allocation1 [shape = 'u32[144,128]{1,0:T(1,128)}', space=vmem, size = 0x12000, scoped, tag = 'internal scratch']
  %s0 = inlined_call_operand.vmem [shape: bf16[2,16], index: 0, kind: input, shape index: {}]
  %s1 = inlined_call_operand.vmem [shape: bf16[16,504], index: 1, kind: input, shape index: {}]
  %s2 = inlined_call_operand.vmem [shape: f32[2,1], index: 2, kind: input, shape index: {}]
  %s3 = inlined_call_operand.vmem [shape: bf16[2,504], index: 3, kind: output, shape index: {}]
  %s4 = sld [smem:[#allocation0]]
  $region22: #{_lambda_.28} parent=0
    _
  %s6 = ssub.s32 1, %s4
  %s7 = scalar_select 0, %s6, %s4
  // Predicated region
  $region2: #{_lambda_.28} parent=0 // pred_check
    _
  $region3: #{_lambda_.28} parent=0 // pred_check_branch
    %9 = sbr.rel (0) target = $region5
  $region4: #{_lambda_.28} parent=0 // pred_region
    _
  $region5: #{_lambda_.28} parent=0 // pred_fallthru
    _
  // Predicated region
  $region6: #{_lambda_.28} parent=0 // pred_check
    _
  $region7: #{_lambda_.28} parent=0 // pred_check_branch
    %11 = sbr.rel (0) target = $region9
  $region8: #{_lambda_.28} parent=0 // pred_region
    _
  $region9: #{_lambda_.28} parent=0 // pred_fallthru
    _
  // Predicated region
  $region10: #{_lambda_.28} parent=0 // pred_check
    _
  $region11: #{_lambda_.28} parent=0 // pred_check_branch
    %13 = sbr.rel (0) target = $region13
  $region12: #{_lambda_.28} parent=0 // pred_region
    _
  $region13: #{_lambda_.28} parent=0 // pred_fallthru
    _
  %v15 = vld [vmem:[%s0] sm:$0x1]
  %v16 = vld [vmem:[%s1] sm:$0xff]
  %v17 = vld [vmem:[%s1 + $0x8] sm:$0xff]
  %v18 = vld [vmem:[%s1 + $0x10] sm:$0xff]
  %v19 = vld [vmem:[%s1 + $0x18] sm:$0xff]
  %v20 = vld [vmem:[%s2] sm:$0x3]
  %22 = vset.pattern.permute.xlu0 0
  %23 = vperm.xlu0 %22, %v20
  %v24 = vpop.permute.xlu0 %23
  %v30 = vunpack.c.l.b16 %v16
  %v31 = vunpack.c.h.b16 %v16
  %v32 = vunpack.c.l.b16 %v17
  %v33 = vunpack.c.h.b16 %v17
  %v34 = vunpack.c.l.b16 %v18
  %v35 = vunpack.c.h.b16 %v18
  %v36 = vunpack.c.l.b16 %v19
  %v37 = vunpack.c.h.b16 %v19
  %v38 = vpack.c.b16 %v34, %v30
  %v39 = vpack.c.b16 %v35, %v31
  %v40 = vpack.c.b16 %v36, %v32
  %v41 = vpack.c.b16 %v37, %v33
  %vm46 = vcmask 130048
  %v48 = vsel %vm46, %v15, 0
  %50 = vmatprep.subr.bf16.mxu0 %v39
  %51 = vmatpush1.bf16.msra.mxu0 %v38
  %52 = vmatprep.subr.bf16.mxu0 0
  %53 = vmatpush1.bf16.msra.mxu0 0
  %54 = vmatprep.subr.bf16.mxu0 0
  %55 = vmatpush1.bf16.msra.mxu0 0
  %56 = vmatprep.subr.bf16.mxu0 0
  %57 = vmatpush1.bf16.msra.mxu0 0
  %58 = vmatprep.subr.bf16.mxu0 0
  %59 = vmatpush1.bf16.msra.mxu0 0
  %60 = vmatprep.subr.bf16.mxu0 0
  %61 = vmatpush1.bf16.msra.mxu0 0
  %62 = vmatprep.subr.bf16.mxu0 0
  %63 = vmatpush1.bf16.msra.mxu0 0
  %64 = vmatprep.subr.bf16.mxu0 0
  %65 = vmatpush1.bf16.msra.mxu0 0
  %66 = vmatprep.subr.bf16.mxu0 0
  %67 = vmatpush1.bf16.msra.mxu0 0
  %68 = vmatprep.subr.bf16.mxu0 0
  %69 = vmatpush1.bf16.msra.mxu0 0
  %70 = vmatprep.subr.bf16.mxu0 0
  %71 = vmatpush1.bf16.msra.mxu0 0
  %72 = vmatprep.subr.bf16.mxu0 0
  %73 = vmatpush1.bf16.msra.mxu0 0
  %74 = vmatprep.subr.bf16.mxu0 0
  %75 = vmatpush1.bf16.msra.mxu0 0
  %76 = vmatprep.subr.bf16.mxu0 0
  %77 = vmatpush1.bf16.msra.mxu0 0
  %78 = vmatprep.subr.bf16.mxu0 0
  %79 = vmatpush1.bf16.msra.mxu0 0
  %80 = vmatprep.subr.bf16.mxu0 0
  %81 = vmatpush1.bf16.msra.mxu0 0
  %82 = vmatprep.mubr.bf16.mxu0 0
  %83 = vmatmul.mubr.bf16.gmra.mrb[0].mxu0 %v48
  %v84 = vpop.f32.mrb[0].mxu0
  %v85 = vadd.f32 %v24, %v84
  %v86 = vpop.f32.mrb[0].mxu0
  %v87 = vadd.f32 %v24, %v86
  %v88 = vpop.f32.mrb[0].mxu0
  %v89 = vpop.f32.mrb[0].mxu0
  %90 = vdwg.mxu0
  %91 = vmatprep.subr.bf16.mxu0 %v41
  %92 = vmatpush1.bf16.msra.mxu0 %v40
  %93 = vmatprep.subr.bf16.mxu0 0
  %94 = vmatpush1.bf16.msra.mxu0 0
  %95 = vmatprep.subr.bf16.mxu0 0
  %96 = vmatpush1.bf16.msra.mxu0 0
  %97 = vmatprep.subr.bf16.mxu0 0
  %98 = vmatpush1.bf16.msra.mxu0 0
  %99 = vmatprep.subr.bf16.mxu0 0
  %100 = vmatpush1.bf16.msra.mxu0 0
  %101 = vmatprep.subr.bf16.mxu0 0
  %102 = vmatpush1.bf16.msra.mxu0 0
  %103 = vmatprep.subr.bf16.mxu0 0
  %104 = vmatpush1.bf16.msra.mxu0 0
  %105 = vmatprep.subr.bf16.mxu0 0
  %106 = vmatpush1.bf16.msra.mxu0 0
  %107 = vmatprep.subr.bf16.mxu0 0
  %108 = vmatpush1.bf16.msra.mxu0 0
  %109 = vmatprep.subr.bf16.mxu0 0
  %110 = vmatpush1.bf16.msra.mxu0 0
  %111 = vmatprep.subr.bf16.mxu0 0
  %112 = vmatpush1.bf16.msra.mxu0 0
  %113 = vmatprep.subr.bf16.mxu0 0
  %114 = vmatpush1.bf16.msra.mxu0 0
  %115 = vmatprep.subr.bf16.mxu0 0
  %116 = vmatpush1.bf16.msra.mxu0 0
  %117 = vmatprep.subr.bf16.mxu0 0
  %118 = vmatpush1.bf16.msra.mxu0 0
  %119 = vmatprep.subr.bf16.mxu0 0
  %120 = vmatpush1.bf16.msra.mxu0 0
  %121 = vmatprep.subr.bf16.mxu0 0
  %122 = vmatpush1.bf16.msra.mxu0 0
  %123 = vmatprep.mubr.bf16.mxu0 0
  %124 = vmatmul.mubr.bf16.gmra.mrb[0].mxu0 %v48
  %v125 = vpop.f32.mrb[0].mxu0
  %v126 = vadd.f32 %v24, %v125
  %v127 = vpop.f32.mrb[0].mxu0
  %v128 = vadd.f32 %v24, %v127
  %v129 = vpop.f32.mrb[0].mxu0
  %v130 = vpop.f32.mrb[0].mxu0
  %131 = vdwg.mxu0
  %vm132 = vcmp.ge.f32.partialorder %v85, 0.0
  %vm133 = vcmp.ge.f32.partialorder %v87, 0.0
  %vm134 = vcmp.ge.f32.partialorder %v126, 0.0
  %vm135 = vcmp.ge.f32.partialorder %v128, 0.0
  %v136 = vmul.f32 %v85, 0.1
  %v137 = vmul.f32 %v87, 0.1
  %v138 = vmul.f32 %v126, 0.1
  %v139 = vmul.f32 %v128, 0.1
  %v140 = vsel %vm132, %v85, %v136
  %v141 = vsel %vm133, %v87, %v137
  %v142 = vsel %vm134, %v126, %v138
  %v143 = vsel %vm135, %v128, %v139
  %v144 = vpack.c.bf16 %v140, %v140
  %v145 = vpack.c.bf16 %v141, %v141
  %v146 = vpack.c.bf16 %v142, %v142
  %v147 = vpack.c.bf16 %v143, %v143
  %v152 = vcombine.low %v144, %v145
  %v153 = vcombine.low %v146, %v147
  %v155 = vunpack.c.l.s4 1966171168
  %v156 = vunpack.c.0.s8 %v155
  %v157 = vlaneseq
  %v158 = vshrl.u32 %v157, 7
  %v159 = vsub.s32 %v156, %v158
  %v160 = vrot.slane %v152, %v159
  %v162 = vunpack.c.l.s4 1966171168
  %v163 = vunpack.c.0.s8 %v162
  %v164 = vlaneseq
  %v165 = vshrl.u32 %v164, 7
  %v166 = vsub.s32 %v163, %v165
  %v167 = vrot.slane %v153, %v166
  %v168 = vcombine.low %v160, %v167
  %v170 = vunpack.c.l.s4 1966171168
  %v171 = vunpack.c.0.s8 %v170
  %v172 = vlaneseq
  %v173 = vshrl.u32 %v172, 7
  %v174 = vsub.s32 %v171, %v173
  %v175 = vrot.slane %v168, %v174
  %vm177 = vcmask 1040384
  %vm178 = vcmask 1041409
  %vm179 = vmor %vm178, %vm177
  %vm180 = vcmask 1042434
  %vm181 = vmor %vm180, %vm179
  %vm182 = vcmask 977923
  %vm183 = vmor %vm182, %vm181
  %184 = vst.msk [vmem:[%s3] sm:$0xf] %vm183, %v175
  // Predicated region
  $region14: #{_lambda_.28} parent=0 // pred_check
    _
  $region15: #{_lambda_.28} parent=0 // pred_check_branch
    %186 = sbr.rel (0) target = $region17
  $region16: #{_lambda_.28} parent=0 // pred_region
    _
  $region17: #{_lambda_.28} parent=0 // pred_fallthru
    _
  // Predicated region
  $region18: #{_lambda_.28} parent=0 // pred_check
    _
  $region19: #{_lambda_.28} parent=0 // pred_check_branch
    %188 = sbr.rel (0) target = $region21
  $region20: #{_lambda_.28} parent=0 // pred_region
    _
  $region21: #{_lambda_.28} parent=0 // pred_fallthru
    _

// kernel: _lambda_.32
$region0: #{_lambda_.32}
  #allocation0 [shape = 'u32[]', space=smem, size = 0x4, offset = 0x4, fixed_abs, tag = 'smem constant byte address 0x4 - core index']
  #allocation1 [shape = 'u32[144,128]{1,0:T(1,128)}', space=vmem, size = 0x12000, scoped, tag = 'internal scratch']
  %s0 = inlined_call_operand.vmem [shape: bf16[2,32], index: 0, kind: input, shape index: {}]
  %s1 = inlined_call_operand.vmem [shape: bf16[32,420], index: 1, kind: input, shape index: {}]
  %s2 = inlined_call_operand.vmem [shape: f32[2,1], index: 2, kind: input, shape index: {}]
  %s3 = inlined_call_operand.vmem [shape: bf16[2,420], index: 3, kind: output, shape index: {}]
  %s4 = sld [smem:[#allocation0]]
  $region22: #{_lambda_.32} parent=0
    _
  %s6 = ssub.s32 1, %s4
  %s7 = scalar_select 0, %s6, %s4
  // Predicated region
  $region2: #{_lambda_.32} parent=0 // pred_check
    _
  $region3: #{_lambda_.32} parent=0 // pred_check_branch
    %9 = sbr.rel (0) target = $region5
  $region4: #{_lambda_.32} parent=0 // pred_region
    _
  $region5: #{_lambda_.32} parent=0 // pred_fallthru
    _
  // Predicated region
  $region6: #{_lambda_.32} parent=0 // pred_check
    _
  $region7: #{_lambda_.32} parent=0 // pred_check_branch
    %11 = sbr.rel (0) target = $region9
  $region8: #{_lambda_.32} parent=0 // pred_region
    _
  $region9: #{_lambda_.32} parent=0 // pred_fallthru
    _
  // Predicated region
  $region10: #{_lambda_.32} parent=0 // pred_check
    _
  $region11: #{_lambda_.32} parent=0 // pred_check_branch
    %13 = sbr.rel (0) target = $region13
  $region12: #{_lambda_.32} parent=0 // pred_region
    _
  $region13: #{_lambda_.32} parent=0 // pred_fallthru
    _
  %v15 = vld [vmem:[%s0] sm:$0x1]
  %v16 = vld [vmem:[%s1] sm:$0xff]
  %v17 = vld [vmem:[%s1 + $0x8] sm:$0xff]
  %v18 = vld [vmem:[%s1 + $0x10] sm:$0xff]
  %v19 = vld [vmem:[%s1 + $0x18] sm:$0xff]
  %v20 = vld [vmem:[%s1 + $0x20] sm:$0xff]
  %v21 = vld [vmem:[%s1 + $0x28] sm:$0xff]
  %v22 = vld [vmem:[%s1 + $0x30] sm:$0xff]
  %v23 = vld [vmem:[%s1 + $0x38] sm:$0xff]
  %v24 = vld [vmem:[%s2] sm:$0x3]
  %26 = vset.pattern.permute.xlu0 0
  %27 = vperm.xlu0 %26, %v24
  %v28 = vpop.permute.xlu0 %27
  %v38 = vunpack.c.l.b16 %v16
  %v39 = vunpack.c.h.b16 %v16
  %v40 = vunpack.c.l.b16 %v17
  %v41 = vunpack.c.h.b16 %v17
  %v42 = vunpack.c.l.b16 %v18
  %v43 = vunpack.c.h.b16 %v18
  %v44 = vunpack.c.l.b16 %v19
  %v45 = vunpack.c.h.b16 %v19
  %v46 = vunpack.c.l.b16 %v20
  %v47 = vunpack.c.h.b16 %v20
  %v48 = vunpack.c.l.b16 %v21
  %v49 = vunpack.c.h.b16 %v21
  %v50 = vunpack.c.l.b16 %v22
  %v51 = vunpack.c.h.b16 %v22
  %v52 = vunpack.c.l.b16 %v23
  %v53 = vunpack.c.h.b16 %v23
  %v54 = vpack.c.b16 %v42, %v38
  %v55 = vpack.c.b16 %v43, %v39
  %v56 = vpack.c.b16 %v44, %v40
  %v57 = vpack.c.b16 %v45, %v41
  %v58 = vpack.c.b16 %v50, %v46
  %v59 = vpack.c.b16 %v51, %v47
  %v60 = vpack.c.b16 %v52, %v48
  %v61 = vpack.c.b16 %v53, %v49
  %vm70 = vcmask 261120
  %v72 = vsel %vm70, %v15, 0
  %74 = vmatprep.subr.bf16.mxu0 %v55
  %75 = vmatpush1.bf16.msra.mxu0 %v54
  %76 = vmatprep.subr.bf16.mxu0 %v59
  %77 = vmatpush1.bf16.msra.mxu0 %v58
  %78 = vmatprep.subr.bf16.mxu0 0
  %79 = vmatpush1.bf16.msra.mxu0 0
  %80 = vmatprep.subr.bf16.mxu0 0
  %81 = vmatpush1.bf16.msra.mxu0 0
  %82 = vmatprep.subr.bf16.mxu0 0
  %83 = vmatpush1.bf16.msra.mxu0 0
  %84 = vmatprep.subr.bf16.mxu0 0
  %85 = vmatpush1.bf16.msra.mxu0 0
  %86 = vmatprep.subr.bf16.mxu0 0
  %87 = vmatpush1.bf16.msra.mxu0 0
  %88 = vmatprep.subr.bf16.mxu0 0
  %89 = vmatpush1.bf16.msra.mxu0 0
  %90 = vmatprep.subr.bf16.mxu0 0
  %91 = vmatpush1.bf16.msra.mxu0 0
  %92 = vmatprep.subr.bf16.mxu0 0
  %93 = vmatpush1.bf16.msra.mxu0 0
  %94 = vmatprep.subr.bf16.mxu0 0
  %95 = vmatpush1.bf16.msra.mxu0 0
  %96 = vmatprep.subr.bf16.mxu0 0
  %97 = vmatpush1.bf16.msra.mxu0 0
  %98 = vmatprep.subr.bf16.mxu0 0
  %99 = vmatpush1.bf16.msra.mxu0 0
  %100 = vmatprep.subr.bf16.mxu0 0
  %101 = vmatpush1.bf16.msra.mxu0 0
  %102 = vmatprep.subr.bf16.mxu0 0
  %103 = vmatpush1.bf16.msra.mxu0 0
  %104 = vmatprep.subr.bf16.mxu0 0
  %105 = vmatpush1.bf16.msra.mxu0 0
  %106 = vmatprep.mubr.bf16.mxu0 0
  %107 = vmatmul.mubr.bf16.gmra.mrb[0].mxu0 %v72
  %v108 = vpop.f32.mrb[0].mxu0
  %v109 = vadd.f32 %v28, %v108
  %v110 = vpop.f32.mrb[0].mxu0
  %v111 = vadd.f32 %v28, %v110
  %v112 = vpop.f32.mrb[0].mxu0
  %v113 = vpop.f32.mrb[0].mxu0
  %114 = vdwg.mxu0
  %115 = vmatprep.subr.bf16.mxu0 %v57
  %116 = vmatpush1.bf16.msra.mxu0 %v56
  %117 = vmatprep.subr.bf16.mxu0 %v61
  %118 = vmatpush1.bf16.msra.mxu0 %v60
  %119 = vmatprep.subr.bf16.mxu0 0
  %120 = vmatpush1.bf16.msra.mxu0 0
  %121 = vmatprep.subr.bf16.mxu0 0
  %122 = vmatpush1.bf16.msra.mxu0 0
  %123 = vmatprep.subr.bf16.mxu0 0
  %124 = vmatpush1.bf16.msra.mxu0 0
  %125 = vmatprep.subr.bf16.mxu0 0
  %126 = vmatpush1.bf16.msra.mxu0 0
  %127 = vmatprep.subr.bf16.mxu0 0
  %128 = vmatpush1.bf16.msra.mxu0 0
  %129 = vmatprep.subr.bf16.mxu0 0
  %130 = vmatpush1.bf16.msra.mxu0 0
  %131 = vmatprep.subr.bf16.mxu0 0
  %132 = vmatpush1.bf16.msra.mxu0 0
  %133 = vmatprep.subr.bf16.mxu0 0
  %134 = vmatpush1.bf16.msra.mxu0 0
  %135 = vmatprep.subr.bf16.mxu0 0
  %136 = vmatpush1.bf16.msra.mxu0 0
  %137 = vmatprep.subr.bf16.mxu0 0
  %138 = vmatpush1.bf16.msra.mxu0 0
  %139 = vmatprep.subr.bf16.mxu0 0
  %140 = vmatpush1.bf16.msra.mxu0 0
  %141 = vmatprep.subr.bf16.mxu0 0
  %142 = vmatpush1.bf16.msra.mxu0 0
  %143 = vmatprep.subr.bf16.mxu0 0
  %144 = vmatpush1.bf16.msra.mxu0 0
  %145 = vmatprep.subr.bf16.mxu0 0
  %146 = vmatpush1.bf16.msra.mxu0 0
  %147 = vmatprep.mubr.bf16.mxu0 0
  %148 = vmatmul.mubr.bf16.gmra.mrb[0].mxu0 %v72
  %v149 = vpop.f32.mrb[0].mxu0
  %v150 = vadd.f32 %v28, %v149
  %v151 = vpop.f32.mrb[0].mxu0
  %v152 = vadd.f32 %v28, %v151
  %v153 = vpop.f32.mrb[0].mxu0
  %v154 = vpop.f32.mrb[0].mxu0
  %155 = vdwg.mxu0
  %vm156 = vcmp.ge.f32.partialorder %v109, 0.0
  %vm157 = vcmp.ge.f32.partialorder %v111, 0.0
  %vm158 = vcmp.ge.f32.partialorder %v150, 0.0
  %vm159 = vcmp.ge.f32.partialorder %v152, 0.0
  %v160 = vmul.f32 %v109, 0.1
  %v161 = vmul.f32 %v111, 0.1
  %v162 = vmul.f32 %v150, 0.1
  %v163 = vmul.f32 %v152, 0.1
  %v164 = vsel %vm156, %v109, %v160
  %v165 = vsel %vm157, %v111, %v161
  %v166 = vsel %vm158, %v150, %v162
  %v167 = vsel %vm159, %v152, %v163
  %v168 = vpack.c.bf16 %v164, %v164
  %v169 = vpack.c.bf16 %v165, %v165
  %v170 = vpack.c.bf16 %v166, %v166
  %v171 = vpack.c.bf16 %v167, %v167
  %v176 = vcombine.low %v168, %v169
  %v177 = vcombine.low %v170, %v171
  %v179 = vunpack.c.l.s4 1966171168
  %v180 = vunpack.c.0.s8 %v179
  %v181 = vlaneseq
  %v182 = vshrl.u32 %v181, 7
  %v183 = vsub.s32 %v180, %v182
  %v184 = vrot.slane %v176, %v183
  %v186 = vunpack.c.l.s4 1966171168
  %v187 = vunpack.c.0.s8 %v186
  %v188 = vlaneseq
  %v189 = vshrl.u32 %v188, 7
  %v190 = vsub.s32 %v187, %v189
  %v191 = vrot.slane %v177, %v190
  %v192 = vcombine.low %v184, %v191
  %v194 = vunpack.c.l.s4 1966171168
  %v195 = vunpack.c.0.s8 %v194
  %v196 = vlaneseq
  %v197 = vshrl.u32 %v196, 7
  %v198 = vsub.s32 %v195, %v197
  %v199 = vrot.slane %v192, %v198
  %vm201 = vcmask 1040384
  %vm202 = vcmask 1041409
  %vm203 = vmor %vm202, %vm201
  %vm204 = vcmask 1042434
  %vm205 = vmor %vm204, %vm203
  %vm206 = vcmask 289795
  %vm207 = vmor %vm206, %vm205
  %208 = vst.msk [vmem:[%s3] sm:$0xf] %vm207, %v199
  // Predicated region
  $region14: #{_lambda_.32} parent=0 // pred_check
    _
  $region15: #{_lambda_.32} parent=0 // pred_check_branch
    %210 = sbr.rel (0) target = $region17
  $region16: #{_lambda_.32} parent=0 // pred_region
    _
  $region17: #{_lambda_.32} parent=0 // pred_fallthru
    _
  // Predicated region
  $region18: #{_lambda_.32} parent=0 // pred_check
    _
  $region19: #{_lambda_.32} parent=0 // pred_check_branch
    %212 = sbr.rel (0) target = $region21
  $region20: #{_lambda_.32} parent=0 // pred_region
    _
  $region21: #{_lambda_.32} parent=0 // pred_fallthru
    _

// kernel: _lambda_.31
$region0: #{_lambda_.31}
  #allocation0 [shape = 'u32[]', space=smem, size = 0x4, offset = 0x4, fixed_abs, tag = 'smem constant byte address 0x4 - core index']
  #allocation1 [shape = 'u32[144,128]{1,0:T(1,128)}', space=vmem, size = 0x12000, scoped, tag = 'internal scratch']
  %s0 = inlined_call_operand.vmem [shape: bf16[2,16], index: 0, kind: input, shape index: {}]
  %s1 = inlined_call_operand.vmem [shape: bf16[16,420], index: 1, kind: input, shape index: {}]
  %s2 = inlined_call_operand.vmem [shape: f32[2,1], index: 2, kind: input, shape index: {}]
  %s3 = inlined_call_operand.vmem [shape: bf16[2,420], index: 3, kind: output, shape index: {}]
  %s4 = sld [smem:[#allocation0]]
  $region22: #{_lambda_.31} parent=0
    _
  %s6 = ssub.s32 1, %s4
  %s7 = scalar_select 0, %s6, %s4
  // Predicated region
  $region2: #{_lambda_.31} parent=0 // pred_check
    _
  $region3: #{_lambda_.31} parent=0 // pred_check_branch
    %9 = sbr.rel (0) target = $region5
  $region4: #{_lambda_.31} parent=0 // pred_region
    _
  $region5: #{_lambda_.31} parent=0 // pred_fallthru
    _
  // Predicated region
  $region6: #{_lambda_.31} parent=0 // pred_check
    _
  $region7: #{_lambda_.31} parent=0 // pred_check_branch
    %11 = sbr.rel (0) target = $region9
  $region8: #{_lambda_.31} parent=0 // pred_region
    _
  $region9: #{_lambda_.31} parent=0 // pred_fallthru
    _
  // Predicated region
  $region10: #{_lambda_.31} parent=0 // pred_check
    _
  $region11: #{_lambda_.31} parent=0 // pred_check_branch
    %13 = sbr.rel (0) target = $region13
  $region12: #{_lambda_.31} parent=0 // pred_region
    _
  $region13: #{_lambda_.31} parent=0 // pred_fallthru
    _
  %v15 = vld [vmem:[%s0] sm:$0x1]
  %v16 = vld [vmem:[%s1] sm:$0xff]
  %v17 = vld [vmem:[%s1 + $0x8] sm:$0xff]
  %v18 = vld [vmem:[%s1 + $0x10] sm:$0xff]
  %v19 = vld [vmem:[%s1 + $0x18] sm:$0xff]
  %v20 = vld [vmem:[%s2] sm:$0x3]
  %22 = vset.pattern.permute.xlu0 0
  %23 = vperm.xlu0 %22, %v20
  %v24 = vpop.permute.xlu0 %23
  %v30 = vunpack.c.l.b16 %v16
  %v31 = vunpack.c.h.b16 %v16
  %v32 = vunpack.c.l.b16 %v17
  %v33 = vunpack.c.h.b16 %v17
  %v34 = vunpack.c.l.b16 %v18
  %v35 = vunpack.c.h.b16 %v18
  %v36 = vunpack.c.l.b16 %v19
  %v37 = vunpack.c.h.b16 %v19
  %v38 = vpack.c.b16 %v34, %v30
  %v39 = vpack.c.b16 %v35, %v31
  %v40 = vpack.c.b16 %v36, %v32
  %v41 = vpack.c.b16 %v37, %v33
  %vm46 = vcmask 130048
  %v48 = vsel %vm46, %v15, 0
  %50 = vmatprep.subr.bf16.mxu0 %v39
  %51 = vmatpush1.bf16.msra.mxu0 %v38
  %52 = vmatprep.subr.bf16.mxu0 0
  %53 = vmatpush1.bf16.msra.mxu0 0
  %54 = vmatprep.subr.bf16.mxu0 0
  %55 = vmatpush1.bf16.msra.mxu0 0
  %56 = vmatprep.subr.bf16.mxu0 0
  %57 = vmatpush1.bf16.msra.mxu0 0
  %58 = vmatprep.subr.bf16.mxu0 0
  %59 = vmatpush1.bf16.msra.mxu0 0
  %60 = vmatprep.subr.bf16.mxu0 0
  %61 = vmatpush1.bf16.msra.mxu0 0
  %62 = vmatprep.subr.bf16.mxu0 0
  %63 = vmatpush1.bf16.msra.mxu0 0
  %64 = vmatprep.subr.bf16.mxu0 0
  %65 = vmatpush1.bf16.msra.mxu0 0
  %66 = vmatprep.subr.bf16.mxu0 0
  %67 = vmatpush1.bf16.msra.mxu0 0
  %68 = vmatprep.subr.bf16.mxu0 0
  %69 = vmatpush1.bf16.msra.mxu0 0
  %70 = vmatprep.subr.bf16.mxu0 0
  %71 = vmatpush1.bf16.msra.mxu0 0
  %72 = vmatprep.subr.bf16.mxu0 0
  %73 = vmatpush1.bf16.msra.mxu0 0
  %74 = vmatprep.subr.bf16.mxu0 0
  %75 = vmatpush1.bf16.msra.mxu0 0
  %76 = vmatprep.subr.bf16.mxu0 0
  %77 = vmatpush1.bf16.msra.mxu0 0
  %78 = vmatprep.subr.bf16.mxu0 0
  %79 = vmatpush1.bf16.msra.mxu0 0
  %80 = vmatprep.subr.bf16.mxu0 0
  %81 = vmatpush1.bf16.msra.mxu0 0
  %82 = vmatprep.mubr.bf16.mxu0 0
  %83 = vmatmul.mubr.bf16.gmra.mrb[0].mxu0 %v48
  %v84 = vpop.f32.mrb[0].mxu0
  %v85 = vadd.f32 %v24, %v84
  %v86 = vpop.f32.mrb[0].mxu0
  %v87 = vadd.f32 %v24, %v86
  %v88 = vpop.f32.mrb[0].mxu0
  %v89 = vpop.f32.mrb[0].mxu0
  %90 = vdwg.mxu0
  %91 = vmatprep.subr.bf16.mxu0 %v41
  %92 = vmatpush1.bf16.msra.mxu0 %v40
  %93 = vmatprep.subr.bf16.mxu0 0
  %94 = vmatpush1.bf16.msra.mxu0 0
  %95 = vmatprep.subr.bf16.mxu0 0
  %96 = vmatpush1.bf16.msra.mxu0 0
  %97 = vmatprep.subr.bf16.mxu0 0
  %98 = vmatpush1.bf16.msra.mxu0 0
  %99 = vmatprep.subr.bf16.mxu0 0
  %100 = vmatpush1.bf16.msra.mxu0 0
  %101 = vmatprep.subr.bf16.mxu0 0
  %102 = vmatpush1.bf16.msra.mxu0 0
  %103 = vmatprep.subr.bf16.mxu0 0
  %104 = vmatpush1.bf16.msra.mxu0 0
  %105 = vmatprep.subr.bf16.mxu0 0
  %106 = vmatpush1.bf16.msra.mxu0 0
  %107 = vmatprep.subr.bf16.mxu0 0
  %108 = vmatpush1.bf16.msra.mxu0 0
  %109 = vmatprep.subr.bf16.mxu0 0
  %110 = vmatpush1.bf16.msra.mxu0 0
  %111 = vmatprep.subr.bf16.mxu0 0
  %112 = vmatpush1.bf16.msra.mxu0 0
  %113 = vmatprep.subr.bf16.mxu0 0
  %114 = vmatpush1.bf16.msra.mxu0 0
  %115 = vmatprep.subr.bf16.mxu0 0
  %116 = vmatpush1.bf16.msra.mxu0 0
  %117 = vmatprep.subr.bf16.mxu0 0
  %118 = vmatpush1.bf16.msra.mxu0 0
  %119 = vmatprep.subr.bf16.mxu0 0
  %120 = vmatpush1.bf16.msra.mxu0 0
  %121 = vmatprep.subr.bf16.mxu0 0
  %122 = vmatpush1.bf16.msra.mxu0 0
  %123 = vmatprep.mubr.bf16.mxu0 0
  %124 = vmatmul.mubr.bf16.gmra.mrb[0].mxu0 %v48
  %v125 = vpop.f32.mrb[0].mxu0
  %v126 = vadd.f32 %v24, %v125
  %v127 = vpop.f32.mrb[0].mxu0
  %v128 = vadd.f32 %v24, %v127
  %v129 = vpop.f32.mrb[0].mxu0
  %v130 = vpop.f32.mrb[0].mxu0
  %131 = vdwg.mxu0
  %vm132 = vcmp.ge.f32.partialorder %v85, 0.0
  %vm133 = vcmp.ge.f32.partialorder %v87, 0.0
  %vm134 = vcmp.ge.f32.partialorder %v126, 0.0
  %vm135 = vcmp.ge.f32.partialorder %v128, 0.0
  %v136 = vmul.f32 %v85, 0.1
  %v137 = vmul.f32 %v87, 0.1
  %v138 = vmul.f32 %v126, 0.1
  %v139 = vmul.f32 %v128, 0.1
  %v140 = vsel %vm132, %v85, %v136
  %v141 = vsel %vm133, %v87, %v137
  %v142 = vsel %vm134, %v126, %v138
  %v143 = vsel %vm135, %v128, %v139
  %v144 = vpack.c.bf16 %v140, %v140
  %v145 = vpack.c.bf16 %v141, %v141
  %v146 = vpack.c.bf16 %v142, %v142
  %v147 = vpack.c.bf16 %v143, %v143
  %v152 = vcombine.low %v144, %v145
  %v153 = vcombine.low %v146, %v147
  %v155 = vunpack.c.l.s4 1966171168
  %v156 = vunpack.c.0.s8 %v155
  %v157 = vlaneseq
  %v158 = vshrl.u32 %v157, 7
  %v159 = vsub.s32 %v156, %v158
  %v160 = vrot.slane %v152, %v159
  %v162 = vunpack.c.l.s4 1966171168
  %v163 = vunpack.c.0.s8 %v162
  %v164 = vlaneseq
  %v165 = vshrl.u32 %v164, 7
  %v166 = vsub.s32 %v163, %v165
  %v167 = vrot.slane %v153, %v166
  %v168 = vcombine.low %v160, %v167
  %v170 = vunpack.c.l.s4 1966171168
  %v171 = vunpack.c.0.s8 %v170
  %v172 = vlaneseq
  %v173 = vshrl.u32 %v172, 7
  %v174 = vsub.s32 %v171, %v173
  %v175 = vrot.slane %v168, %v174
  %vm177 = vcmask 1040384
  %vm178 = vcmask 1041409
  %vm179 = vmor %vm178, %vm177
  %vm180 = vcmask 1042434
  %vm181 = vmor %vm180, %vm179
  %vm182 = vcmask 289795
  %vm183 = vmor %vm182, %vm181
  %184 = vst.msk [vmem:[%s3] sm:$0xf] %vm183, %v175
  // Predicated region
  $region14: #{_lambda_.31} parent=0 // pred_check
    _
  $region15: #{_lambda_.31} parent=0 // pred_check_branch
    %186 = sbr.rel (0) target = $region17
  $region16: #{_lambda_.31} parent=0 // pred_region
    _
  $region17: #{_lambda_.31} parent=0 // pred_fallthru
    _
  // Predicated region
  $region18: #{_lambda_.31} parent=0 // pred_check
    _
  $region19: #{_lambda_.31} parent=0 // pred_check_branch
    %188 = sbr.rel (0) target = $region21
  $region20: #{_lambda_.31} parent=0 // pred_region
    _
  $region21: #{_lambda_.31} parent=0 // pred_fallthru
    _

// kernel: _lambda_.34
$region0: #{_lambda_.34}
  #allocation0 [shape = 'u32[]', space=smem, size = 0x4, offset = 0x4, fixed_abs, tag = 'smem constant byte address 0x4 - core index']
  #allocation1 [shape = 'u32[144,128]{1,0:T(1,128)}', space=vmem, size = 0x12000, scoped, tag = 'internal scratch']
  %s0 = inlined_call_operand.vmem [shape: bf16[2,64], index: 0, kind: input, shape index: {}]
  %s1 = inlined_call_operand.vmem [shape: bf16[64,350], index: 1, kind: input, shape index: {}]
  %s2 = inlined_call_operand.vmem [shape: f32[2,1], index: 2, kind: input, shape index: {}]
  %s3 = inlined_call_operand.vmem [shape: bf16[2,350], index: 3, kind: output, shape index: {}]
  %s4 = sld [smem:[#allocation0]]
  $region22: #{_lambda_.34} parent=0
    _
  %s6 = ssub.s32 1, %s4
  %s7 = scalar_select 0, %s6, %s4
  // Predicated region
  $region2: #{_lambda_.34} parent=0 // pred_check
    _
  $region3: #{_lambda_.34} parent=0 // pred_check_branch
    %9 = sbr.rel (0) target = $region5
  $region4: #{_lambda_.34} parent=0 // pred_region
    _
  $region5: #{_lambda_.34} parent=0 // pred_fallthru
    _
  // Predicated region
  $region6: #{_lambda_.34} parent=0 // pred_check
    _
  $region7: #{_lambda_.34} parent=0 // pred_check_branch
    %11 = sbr.rel (0) target = $region9
  $region8: #{_lambda_.34} parent=0 // pred_region
    _
  $region9: #{_lambda_.34} parent=0 // pred_fallthru
    _
  // Predicated region
  $region10: #{_lambda_.34} parent=0 // pred_check
    _
  $region11: #{_lambda_.34} parent=0 // pred_check_branch
    %13 = sbr.rel (0) target = $region13
  $region12: #{_lambda_.34} parent=0 // pred_region
    _
  $region13: #{_lambda_.34} parent=0 // pred_fallthru
    _
  %v15 = vld [vmem:[%s0] sm:$0x1]
  %v16 = vld [vmem:[%s1] sm:$0xff]
  %v17 = vld [vmem:[%s1 + $0x8] sm:$0xf]
  %v18 = vld [vmem:[%s1 + $0xc] sm:$0xff]
  %v19 = vld [vmem:[%s1 + $0x14] sm:$0xf]
  %v20 = vld [vmem:[%s1 + $0x18] sm:$0xff]
  %v21 = vld [vmem:[%s1 + $0x20] sm:$0xf]
  %v22 = vld [vmem:[%s1 + $0x24] sm:$0xff]
  %v23 = vld [vmem:[%s1 + $0x2c] sm:$0xf]
  %v24 = vld [vmem:[%s1 + $0x30] sm:$0xff]
  %v25 = vld [vmem:[%s1 + $0x38] sm:$0xf]
  %v26 = vld [vmem:[%s1 + $0x3c] sm:$0xff]
  %v27 = vld [vmem:[%s1 + $0x44] sm:$0xf]
  %v28 = vld [vmem:[%s1 + $0x48] sm:$0xff]
  %v29 = vld [vmem:[%s1 + $0x50] sm:$0xf]
  %v30 = vld [vmem:[%s1 + $0x54] sm:$0xff]
  %v31 = vld [vmem:[%s1 + $0x5c] sm:$0xf]
  %v32 = vld [vmem:[%s2] sm:$0x3]
  %34 = vset.pattern.permute.xlu0 0
  %35 = vperm.xlu0 %34, %v32
  %v36 = vpop.permute.xlu0 %35
  %v54 = vunpack.c.l.b16 %v16
  %v55 = vunpack.c.h.b16 %v16
  %v56 = vunpack.c.l.b16 %v17
  %v57 = vunpack.c.l.b16 %v18
  %v58 = vunpack.c.h.b16 %v18
  %v59 = vunpack.c.l.b16 %v19
  %v60 = vunpack.c.l.b16 %v20
  %v61 = vunpack.c.h.b16 %v20
  %v62 = vunpack.c.l.b16 %v21
  %v63 = vunpack.c.l.b16 %v22
  %v64 = vunpack.c.h.b16 %v22
  %v65 = vunpack.c.l.b16 %v23
  %v66 = vunpack.c.l.b16 %v24
  %v67 = vunpack.c.h.b16 %v24
  %v68 = vunpack.c.l.b16 %v25
  %v69 = vunpack.c.l.b16 %v26
  %v70 = vunpack.c.h.b16 %v26
  %v71 = vunpack.c.l.b16 %v27
  %v72 = vunpack.c.l.b16 %v28
  %v73 = vunpack.c.h.b16 %v28
  %v74 = vunpack.c.l.b16 %v29
  %v75 = vunpack.c.l.b16 %v30
  %v76 = vunpack.c.h.b16 %v30
  %v77 = vunpack.c.l.b16 %v31
  %v78 = vpack.c.b16 %v57, %v54
  %v79 = vpack.c.b16 %v58, %v55
  %v80 = vpack.c.b16 %v59, %v56
  %v81 = vpack.c.b16 %v63, %v60
  %v82 = vpack.c.b16 %v64, %v61
  %v83 = vpack.c.b16 %v65, %v62
  %v84 = vpack.c.b16 %v69, %v66
  %v85 = vpack.c.b16 %v70, %v67
  %v86 = vpack.c.b16 %v71, %v68
  %v87 = vpack.c.b16 %v75, %v72
  %v88 = vpack.c.b16 %v76, %v73
  %v89 = vpack.c.b16 %v77, %v74
  %vm102 = vcmask 523264
  %v104 = vsel %vm102, %v15, 0
  %106 = vmatprep.subr.bf16.mxu0 %v79
  %107 = vmatpush1.bf16.msra.mxu0 %v78
  %108 = vmatprep.subr.bf16.mxu0 %v82
  %109 = vmatpush1.bf16.msra.mxu0 %v81
  %110 = vmatprep.subr.bf16.mxu0 %v85
  %111 = vmatpush1.bf16.msra.mxu0 %v84
  %112 = vmatprep.subr.bf16.mxu0 %v88
  %113 = vmatpush1.bf16.msra.mxu0 %v87
  %114 = vmatprep.subr.bf16.mxu0 0
  %115 = vmatpush1.bf16.msra.mxu0 0
  %116 = vmatprep.subr.bf16.mxu0 0
  %117 = vmatpush1.bf16.msra.mxu0 0
  %118 = vmatprep.subr.bf16.mxu0 0
  %119 = vmatpush1.bf16.msra.mxu0 0
  %120 = vmatprep.subr.bf16.mxu0 0
  %121 = vmatpush1.bf16.msra.mxu0 0
  %122 = vmatprep.subr.bf16.mxu0 0
  %123 = vmatpush1.bf16.msra.mxu0 0
  %124 = vmatprep.subr.bf16.mxu0 0
  %125 = vmatpush1.bf16.msra.mxu0 0
  %126 = vmatprep.subr.bf16.mxu0 0
  %127 = vmatpush1.bf16.msra.mxu0 0
  %128 = vmatprep.subr.bf16.mxu0 0
  %129 = vmatpush1.bf16.msra.mxu0 0
  %130 = vmatprep.subr.bf16.mxu0 0
  %131 = vmatpush1.bf16.msra.mxu0 0
  %132 = vmatprep.subr.bf16.mxu0 0
  %133 = vmatpush1.bf16.msra.mxu0 0
  %134 = vmatprep.subr.bf16.mxu0 0
  %135 = vmatpush1.bf16.msra.mxu0 0
  %136 = vmatprep.subr.bf16.mxu0 0
  %137 = vmatpush1.bf16.msra.mxu0 0
  %138 = vmatprep.mubr.bf16.mxu0 0
  %139 = vmatmul.mubr.bf16.gmra.mrb[0].mxu0 %v104
  %v140 = vpop.f32.mrb[0].mxu0
  %v141 = vadd.f32 %v36, %v140
  %v142 = vpop.f32.mrb[0].mxu0
  %v143 = vadd.f32 %v36, %v142
  %v144 = vpop.f32.mrb[0].mxu0
  %v145 = vpop.f32.mrb[0].mxu0
  %146 = vdwg.mxu0
  %147 = vmatprep.subr.bf16.mxu0 0
  %148 = vmatpush1.bf16.msra.mxu0 %v80
  %149 = vmatprep.subr.bf16.mxu0 0
  %150 = vmatpush1.bf16.msra.mxu0 %v83
  %151 = vmatprep.subr.bf16.mxu0 0
  %152 = vmatpush1.bf16.msra.mxu0 %v86
  %153 = vmatprep.subr.bf16.mxu0 0
  %154 = vmatpush1.bf16.msra.mxu0 %v89
  %155 = vmatprep.subr.bf16.mxu0 0
  %156 = vmatpush1.bf16.msra.mxu0 0
  %157 = vmatprep.subr.bf16.mxu0 0
  %158 = vmatpush1.bf16.msra.mxu0 0
  %159 = vmatprep.subr.bf16.mxu0 0
  %160 = vmatpush1.bf16.msra.mxu0 0
  %161 = vmatprep.subr.bf16.mxu0 0
  %162 = vmatpush1.bf16.msra.mxu0 0
  %163 = vmatprep.subr.bf16.mxu0 0
  %164 = vmatpush1.bf16.msra.mxu0 0
  %165 = vmatprep.subr.bf16.mxu0 0
  %166 = vmatpush1.bf16.msra.mxu0 0
  %167 = vmatprep.subr.bf16.mxu0 0
  %168 = vmatpush1.bf16.msra.mxu0 0
  %169 = vmatprep.subr.bf16.mxu0 0
  %170 = vmatpush1.bf16.msra.mxu0 0
  %171 = vmatprep.subr.bf16.mxu0 0
  %172 = vmatpush1.bf16.msra.mxu0 0
  %173 = vmatprep.subr.bf16.mxu0 0
  %174 = vmatpush1.bf16.msra.mxu0 0
  %175 = vmatprep.subr.bf16.mxu0 0
  %176 = vmatpush1.bf16.msra.mxu0 0
  %177 = vmatprep.subr.bf16.mxu0 0
  %178 = vmatpush1.bf16.msra.mxu0 0
  %179 = vmatprep.mubr.bf16.mxu0 0
  %180 = vmatmul.mubr.bf16.gmra.mrb[0].mxu0 %v104
  %v181 = vpop.f32.mrb[0].mxu0
  %v182 = vadd.f32 %v36, %v181
  %v183 = vpop.f32.mrb[0].mxu0
  %v184 = vpop.f32.mrb[0].mxu0
  %v185 = vpop.f32.mrb[0].mxu0
  %186 = vdwg.mxu0
  %vm187 = vcmp.ge.f32.partialorder %v141, 0.0
  %vm188 = vcmp.ge.f32.partialorder %v143, 0.0
  %vm189 = vcmp.ge.f32.partialorder %v182, 0.0
  %v190 = vmul.f32 %v141, 0.1
  %v191 = vmul.f32 %v143, 0.1
  %v192 = vmul.f32 %v182, 0.1
  %v193 = vsel %vm187, %v141, %v190
  %v194 = vsel %vm188, %v143, %v191
  %v195 = vsel %vm189, %v182, %v192
  %v196 = vpack.c.bf16 %v193, %v193
  %v197 = vpack.c.bf16 %v194, %v194
  %v198 = vpack.c.bf16 %v195, %v195
  %v202 = vcombine.low %v196, %v197
  %v204 = vunpack.c.l.s4 1966171168
  %v205 = vunpack.c.0.s8 %v204
  %v206 = vlaneseq
  %v207 = vshrl.u32 %v206, 7
  %v208 = vsub.s32 %v205, %v207
  %v209 = vrot.slane %v202, %v208
  %v211 = vunpack.c.l.s4 1966171168
  %v212 = vunpack.c.0.s8 %v211
  %v213 = vlaneseq
  %v214 = vshrl.u32 %v213, 7
  %v215 = vsub.s32 %v212, %v214
  %v216 = vrot.slane %v198, %v215
  %v217 = vcombine.low %v209, %v216
  %v219 = vunpack.c.l.s4 1966171168
  %v220 = vunpack.c.0.s8 %v219
  %v221 = vlaneseq
  %v222 = vshrl.u32 %v221, 7
  %v223 = vsub.s32 %v220, %v222
  %v224 = vrot.slane %v217, %v223
  %vm226 = vcmask 1040384
  %vm227 = vcmask 1041409
  %vm228 = vmor %vm227, %vm226
  %vm229 = vcmask 763906
  %vm230 = vmor %vm229, %vm228
  %231 = vst.msk [vmem:[%s3] sm:$0x7] %vm230, %v224
  // Predicated region
  $region14: #{_lambda_.34} parent=0 // pred_check
    _
  $region15: #{_lambda_.34} parent=0 // pred_check_branch
    %233 = sbr.rel (0) target = $region17
  $region16: #{_lambda_.34} parent=0 // pred_region
    _
  $region17: #{_lambda_.34} parent=0 // pred_fallthru
    _
  // Predicated region
  $region18: #{_lambda_.34} parent=0 // pred_check
    _
  $region19: #{_lambda_.34} parent=0 // pred_check_branch
    %235 = sbr.rel (0) target = $region21
  $region20: #{_lambda_.34} parent=0 // pred_region
    _
  $region21: #{_lambda_.34} parent=0 // pred_fallthru
    _

// kernel: _lambda_.33
$region0: #{_lambda_.33}
  #allocation0 [shape = 'u32[]', space=smem, size = 0x4, offset = 0x4, fixed_abs, tag = 'smem constant byte address 0x4 - core index']
  #allocation1 [shape = 'u32[144,128]{1,0:T(1,128)}', space=vmem, size = 0x12000, scoped, tag = 'internal scratch']
  %s0 = inlined_call_operand.vmem [shape: bf16[2,32], index: 0, kind: input, shape index: {}]
  %s1 = inlined_call_operand.vmem [shape: bf16[32,350], index: 1, kind: input, shape index: {}]
  %s2 = inlined_call_operand.vmem [shape: f32[2,1], index: 2, kind: input, shape index: {}]
  %s3 = inlined_call_operand.vmem [shape: bf16[2,350], index: 3, kind: output, shape index: {}]
  %s4 = sld [smem:[#allocation0]]
  $region22: #{_lambda_.33} parent=0
    _
  %s6 = ssub.s32 1, %s4
  %s7 = scalar_select 0, %s6, %s4
  // Predicated region
  $region2: #{_lambda_.33} parent=0 // pred_check
    _
  $region3: #{_lambda_.33} parent=0 // pred_check_branch
    %9 = sbr.rel (0) target = $region5
  $region4: #{_lambda_.33} parent=0 // pred_region
    _
  $region5: #{_lambda_.33} parent=0 // pred_fallthru
    _
  // Predicated region
  $region6: #{_lambda_.33} parent=0 // pred_check
    _
  $region7: #{_lambda_.33} parent=0 // pred_check_branch
    %11 = sbr.rel (0) target = $region9
  $region8: #{_lambda_.33} parent=0 // pred_region
    _
  $region9: #{_lambda_.33} parent=0 // pred_fallthru
    _
  // Predicated region
  $region10: #{_lambda_.33} parent=0 // pred_check
    _
  $region11: #{_lambda_.33} parent=0 // pred_check_branch
    %13 = sbr.rel (0) target = $region13
  $region12: #{_lambda_.33} parent=0 // pred_region
    _
  $region13: #{_lambda_.33} parent=0 // pred_fallthru
    _
  %v15 = vld [vmem:[%s0] sm:$0x1]
  %v16 = vld [vmem:[%s1] sm:$0xff]
  %v17 = vld [vmem:[%s1 + $0x8] sm:$0xf]
  %v18 = vld [vmem:[%s1 + $0xc] sm:$0xff]
  %v19 = vld [vmem:[%s1 + $0x14] sm:$0xf]
  %v20 = vld [vmem:[%s1 + $0x18] sm:$0xff]
  %v21 = vld [vmem:[%s1 + $0x20] sm:$0xf]
  %v22 = vld [vmem:[%s1 + $0x24] sm:$0xff]
  %v23 = vld [vmem:[%s1 + $0x2c] sm:$0xf]
  %v24 = vld [vmem:[%s2] sm:$0x3]
  %26 = vset.pattern.permute.xlu0 0
  %27 = vperm.xlu0 %26, %v24
  %v28 = vpop.permute.xlu0 %27
  %v38 = vunpack.c.l.b16 %v16
  %v39 = vunpack.c.h.b16 %v16
  %v40 = vunpack.c.l.b16 %v17
  %v41 = vunpack.c.l.b16 %v18
  %v42 = vunpack.c.h.b16 %v18
  %v43 = vunpack.c.l.b16 %v19
  %v44 = vunpack.c.l.b16 %v20
  %v45 = vunpack.c.h.b16 %v20
  %v46 = vunpack.c.l.b16 %v21
  %v47 = vunpack.c.l.b16 %v22
  %v48 = vunpack.c.h.b16 %v22
  %v49 = vunpack.c.l.b16 %v23
  %v50 = vpack.c.b16 %v41, %v38
  %v51 = vpack.c.b16 %v42, %v39
  %v52 = vpack.c.b16 %v43, %v40
  %v53 = vpack.c.b16 %v47, %v44
  %v54 = vpack.c.b16 %v48, %v45
  %v55 = vpack.c.b16 %v49, %v46
  %vm62 = vcmask 261120
  %v64 = vsel %vm62, %v15, 0
  %66 = vmatprep.subr.bf16.mxu0 %v51
  %67 = vmatpush1.bf16.msra.mxu0 %v50
  %68 = vmatprep.subr.bf16.mxu0 %v54
  %69 = vmatpush1.bf16.msra.mxu0 %v53
  %70 = vmatprep.subr.bf16.mxu0 0
  %71 = vmatpush1.bf16.msra.mxu0 0
  %72 = vmatprep.subr.bf16.mxu0 0
  %73 = vmatpush1.bf16.msra.mxu0 0
  %74 = vmatprep.subr.bf16.mxu0 0
  %75 = vmatpush1.bf16.msra.mxu0 0
  %76 = vmatprep.subr.bf16.mxu0 0
  %77 = vmatpush1.bf16.msra.mxu0 0
  %78 = vmatprep.subr.bf16.mxu0 0
  %79 = vmatpush1.bf16.msra.mxu0 0
  %80 = vmatprep.subr.bf16.mxu0 0
  %81 = vmatpush1.bf16.msra.mxu0 0
  %82 = vmatprep.subr.bf16.mxu0 0
  %83 = vmatpush1.bf16.msra.mxu0 0
  %84 = vmatprep.subr.bf16.mxu0 0
  %85 = vmatpush1.bf16.msra.mxu0 0
  %86 = vmatprep.subr.bf16.mxu0 0
  %87 = vmatpush1.bf16.msra.mxu0 0
  %88 = vmatprep.subr.bf16.mxu0 0
  %89 = vmatpush1.bf16.msra.mxu0 0
  %90 = vmatprep.subr.bf16.mxu0 0
  %91 = vmatpush1.bf16.msra.mxu0 0
  %92 = vmatprep.subr.bf16.mxu0 0
  %93 = vmatpush1.bf16.msra.mxu0 0
  %94 = vmatprep.subr.bf16.mxu0 0
  %95 = vmatpush1.bf16.msra.mxu0 0
  %96 = vmatprep.subr.bf16.mxu0 0
  %97 = vmatpush1.bf16.msra.mxu0 0
  %98 = vmatprep.mubr.bf16.mxu0 0
  %99 = vmatmul.mubr.bf16.gmra.mrb[0].mxu0 %v64
  %v100 = vpop.f32.mrb[0].mxu0
  %v101 = vadd.f32 %v28, %v100
  %v102 = vpop.f32.mrb[0].mxu0
  %v103 = vadd.f32 %v28, %v102
  %v104 = vpop.f32.mrb[0].mxu0
  %v105 = vpop.f32.mrb[0].mxu0
  %106 = vdwg.mxu0
  %107 = vmatprep.subr.bf16.mxu0 0
  %108 = vmatpush1.bf16.msra.mxu0 %v52
  %109 = vmatprep.subr.bf16.mxu0 0
  %110 = vmatpush1.bf16.msra.mxu0 %v55
  %111 = vmatprep.subr.bf16.mxu0 0
  %112 = vmatpush1.bf16.msra.mxu0 0
  %113 = vmatprep.subr.bf16.mxu0 0
  %114 = vmatpush1.bf16.msra.mxu0 0
  %115 = vmatprep.subr.bf16.mxu0 0
  %116 = vmatpush1.bf16.msra.mxu0 0
  %117 = vmatprep.subr.bf16.mxu0 0
  %118 = vmatpush1.bf16.msra.mxu0 0
  %119 = vmatprep.subr.bf16.mxu0 0
  %120 = vmatpush1.bf16.msra.mxu0 0
  %121 = vmatprep.subr.bf16.mxu0 0
  %122 = vmatpush1.bf16.msra.mxu0 0
  %123 = vmatprep.subr.bf16.mxu0 0
  %124 = vmatpush1.bf16.msra.mxu0 0
  %125 = vmatprep.subr.bf16.mxu0 0
  %126 = vmatpush1.bf16.msra.mxu0 0
  %127 = vmatprep.subr.bf16.mxu0 0
  %128 = vmatpush1.bf16.msra.mxu0 0
  %129 = vmatprep.subr.bf16.mxu0 0
  %130 = vmatpush1.bf16.msra.mxu0 0
  %131 = vmatprep.subr.bf16.mxu0 0
  %132 = vmatpush1.bf16.msra.mxu0 0
  %133 = vmatprep.subr.bf16.mxu0 0
  %134 = vmatpush1.bf16.msra.mxu0 0
  %135 = vmatprep.subr.bf16.mxu0 0
  %136 = vmatpush1.bf16.msra.mxu0 0
  %137 = vmatprep.subr.bf16.mxu0 0
  %138 = vmatpush1.bf16.msra.mxu0 0
  %139 = vmatprep.mubr.bf16.mxu0 0
  %140 = vmatmul.mubr.bf16.gmra.mrb[0].mxu0 %v64
  %v141 = vpop.f32.mrb[0].mxu0
  %v142 = vadd.f32 %v28, %v141
  %v143 = vpop.f32.mrb[0].mxu0
  %v144 = vpop.f32.mrb[0].mxu0
  %v145 = vpop.f32.mrb[0].mxu0
  %146 = vdwg.mxu0
  %vm147 = vcmp.ge.f32.partialorder %v101, 0.0
  %vm148 = vcmp.ge.f32.partialorder %v103, 0.0
  %vm149 = vcmp.ge.f32.partialorder %v142, 0.0
  %v150 = vmul.f32 %v101, 0.1
  %v151 = vmul.f32 %v103, 0.1
  %v152 = vmul.f32 %v142, 0.1
  %v153 = vsel %vm147, %v101, %v150
  %v154 = vsel %vm148, %v103, %v151
  %v155 = vsel %vm149, %v142, %v152
  %v156 = vpack.c.bf16 %v153, %v153
  %v157 = vpack.c.bf16 %v154, %v154
  %v158 = vpack.c.bf16 %v155, %v155
  %v162 = vcombine.low %v156, %v157
  %v164 = vunpack.c.l.s4 1966171168
  %v165 = vunpack.c.0.s8 %v164
  %v166 = vlaneseq
  %v167 = vshrl.u32 %v166, 7
  %v168 = vsub.s32 %v165, %v167
  %v169 = vrot.slane %v162, %v168
  %v171 = vunpack.c.l.s4 1966171168
  %v172 = vunpack.c.0.s8 %v171
  %v173 = vlaneseq
  %v174 = vshrl.u32 %v173, 7
  %v175 = vsub.s32 %v172, %v174
  %v176 = vrot.slane %v158, %v175
  %v177 = vcombine.low %v169, %v176
  %v179 = vunpack.c.l.s4 1966171168
  %v180 = vunpack.c.0.s8 %v179
  %v181 = vlaneseq
  %v182 = vshrl.u32 %v181, 7
  %v183 = vsub.s32 %v180, %v182
  %v184 = vrot.slane %v177, %v183
  %vm186 = vcmask 1040384
  %vm187 = vcmask 1041409
  %vm188 = vmor %vm187, %vm186
  %vm189 = vcmask 763906
  %vm190 = vmor %vm189, %vm188
  %191 = vst.msk [vmem:[%s3] sm:$0x7] %vm190, %v184
  // Predicated region
  $region14: #{_lambda_.33} parent=0 // pred_check
    _
  $region15: #{_lambda_.33} parent=0 // pred_check_branch
    %193 = sbr.rel (0) target = $region17
  $region16: #{_lambda_.33} parent=0 // pred_region
    _
  $region17: #{_lambda_.33} parent=0 // pred_fallthru
    _
  // Predicated region
  $region18: #{_lambda_.33} parent=0 // pred_check
    _
  $region19: #{_lambda_.33} parent=0 // pred_check_branch
    %195 = sbr.rel (0) target = $region21
  $region20: #{_lambda_.33} parent=0 // pred_region
    _
  $region21: #{_lambda_.33} parent=0 // pred_fallthru
    _

// kernel: _lambda_.35
$region0: #{_lambda_.35}
  #allocation0 [shape = 'u32[]', space=smem, size = 0x4, offset = 0x4, fixed_abs, tag = 'smem constant byte address 0x4 - core index']
  #allocation1 [shape = 'u32[144,128]{1,0:T(1,128)}', space=vmem, size = 0x12000, scoped, tag = 'internal scratch']
  %s0 = inlined_call_operand.vmem [shape: bf16[2,54], index: 0, kind: input, shape index: {}]
  %s1 = inlined_call_operand.vmem [shape: bf16[54,3388], index: 1, kind: input, shape index: {}]
  %s2 = inlined_call_operand.vmem [shape: f32[2,1], index: 2, kind: input, shape index: {}]
  %s3 = inlined_call_operand.vmem [shape: f32[2,3388], index: 3, kind: output, shape index: {}]
  %s4 = sld [smem:[#allocation0]]
  $region22: #{_lambda_.35} parent=0
    _
  %s6 = ssub.s32 1, %s4
  %s7 = scalar_select 0, %s6, %s4
  // Predicated region
  $region2: #{_lambda_.35} parent=0 // pred_check
    _
  $region3: #{_lambda_.35} parent=0 // pred_check_branch
    %9 = sbr.rel (0) target = $region5
  $region4: #{_lambda_.35} parent=0 // pred_region
    _
  $region5: #{_lambda_.35} parent=0 // pred_fallthru
    _
  // Predicated region
  $region6: #{_lambda_.35} parent=0 // pred_check
    _
  $region7: #{_lambda_.35} parent=0 // pred_check_branch
    %11 = sbr.rel (0) target = $region9
  $region8: #{_lambda_.35} parent=0 // pred_region
    _
  $region9: #{_lambda_.35} parent=0 // pred_fallthru
    _
  // Predicated region
  $region10: #{_lambda_.35} parent=0 // pred_check
    _
  $region11: #{_lambda_.35} parent=0 // pred_check_branch
    %13 = sbr.rel (0) target = $region13
  $region12: #{_lambda_.35} parent=0 // pred_region
    _
  $region13: #{_lambda_.35} parent=0 // pred_fallthru
    _
  %v15 = vld [vmem:[%s0] sm:$0x1]
  %v16 = vld [vmem:[%s1] sm:$0xff]
  %v17 = vld [vmem:[%s1 + $0x8] sm:$0xff]
  %v18 = vld [vmem:[%s1 + $0x10] sm:$0xff]
  %v19 = vld [vmem:[%s1 + $0x18] sm:$0xff]
  %v20 = vld [vmem:[%s1 + $0x20] sm:$0xff]
  %v21 = vld [vmem:[%s1 + $0x28] sm:$0xff]
  %v22 = vld [vmem:[%s1 + $0x30] sm:$0xff]
  %v23 = vld [vmem:[%s1 + $0x38] sm:$0xff]
  %v24 = vld [vmem:[%s1 + $0x40] sm:$0xff]
  %v25 = vld [vmem:[%s1 + $0x48] sm:$0xff]
  %v26 = vld [vmem:[%s1 + $0x50] sm:$0xff]
  %v27 = vld [vmem:[%s1 + $0x58] sm:$0xff]
  %v28 = vld [vmem:[%s1 + $0x60] sm:$0xff]
  %v29 = vld [vmem:[%s1 + $0x68] sm:$0xf]
  %v30 = vld [vmem:[%s1 + $0x6c] sm:$0xff]
  %v31 = vld [vmem:[%s1 + $0x74] sm:$0xff]
  %v32 = vld [vmem:[%s1 + $0x7c] sm:$0xff]
  %v33 = vld [vmem:[%s1 + $0x84] sm:$0xff]
  %v34 = vld [vmem:[%s1 + $0x8c] sm:$0xff]
  %v35 = vld [vmem:[%s1 + $0x94] sm:$0xff]
  %v36 = vld [vmem:[%s1 + $0x9c] sm:$0xff]
  %v37 = vld [vmem:[%s1 + $0xa4] sm:$0xff]
  %v38 = vld [vmem:[%s1 + $0xac] sm:$0xff]
  %v39 = vld [vmem:[%s1 + $0xb4] sm:$0xff]
  %v40 = vld [vmem:[%s1 + $0xbc] sm:$0xff]
  %v41 = vld [vmem:[%s1 + $0xc4] sm:$0xff]
  %v42 = vld [vmem:[%s1 + $0xcc] sm:$0xff]
  %v43 = vld [vmem:[%s1 + $0xd4] sm:$0xf]
  %v44 = vld [vmem:[%s1 + $0xd8] sm:$0xff]
  %v45 = vld [vmem:[%s1 + $0xe0] sm:$0xff]
  %v46 = vld [vmem:[%s1 + $0xe8] sm:$0xff]
  %v47 = vld [vmem:[%s1 + $0xf0] sm:$0xff]
  %v48 = vld [vmem:[%s1 + $0xf8] sm:$0xff]
  %v49 = vld [vmem:[%s1 + $0x100] sm:$0xff]
  %v50 = vld [vmem:[%s1 + $0x108] sm:$0xff]
  %v51 = vld [vmem:[%s1 + $0x110] sm:$0xff]
  %v52 = vld [vmem:[%s1 + $0x118] sm:$0xff]
  %v53 = vld [vmem:[%s1 + $0x120] sm:$0xff]
  %v54 = vld [vmem:[%s1 + $0x128] sm:$0xff]
  %v55 = vld [vmem:[%s1 + $0x130] sm:$0xff]
  %v56 = vld [vmem:[%s1 + $0x138] sm:$0xff]
  %v57 = vld [vmem:[%s1 + $0x140] sm:$0xf]
  %v58 = vld [vmem:[%s1 + $0x144] sm:$0xff]
  %v59 = vld [vmem:[%s1 + $0x14c] sm:$0xff]
  %v60 = vld [vmem:[%s1 + $0x154] sm:$0xff]
  %v61 = vld [vmem:[%s1 + $0x15c] sm:$0xff]
  %v62 = vld [vmem:[%s1 + $0x164] sm:$0xff]
  %v63 = vld [vmem:[%s1 + $0x16c] sm:$0xff]
  %v64 = vld [vmem:[%s1 + $0x174] sm:$0xff]
  %v65 = vld [vmem:[%s1 + $0x17c] sm:$0xff]
  %v66 = vld [vmem:[%s1 + $0x184] sm:$0xff]
  %v67 = vld [vmem:[%s1 + $0x18c] sm:$0xff]
  %v68 = vld [vmem:[%s1 + $0x194] sm:$0xff]
  %v69 = vld [vmem:[%s1 + $0x19c] sm:$0xff]
  %v70 = vld [vmem:[%s1 + $0x1a4] sm:$0xff]
  %v71 = vld [vmem:[%s1 + $0x1ac] sm:$0xf]
  %v72 = vld [vmem:[%s1 + $0x1b0] sm:$0xff]
  %v73 = vld [vmem:[%s1 + $0x1b8] sm:$0xff]
  %v74 = vld [vmem:[%s1 + $0x1c0] sm:$0xff]
  %v75 = vld [vmem:[%s1 + $0x1c8] sm:$0xff]
  %v76 = vld [vmem:[%s1 + $0x1d0] sm:$0xff]
  %v77 = vld [vmem:[%s1 + $0x1d8] sm:$0xff]
  %v78 = vld [vmem:[%s1 + $0x1e0] sm:$0xff]
  %v79 = vld [vmem:[%s1 + $0x1e8] sm:$0xff]
  %v80 = vld [vmem:[%s1 + $0x1f0] sm:$0xff]
  %v81 = vld [vmem:[%s1 + $0x1f8] sm:$0xff]
  %v82 = vld [vmem:[%s1 + $0x200] sm:$0xff]
  %v83 = vld [vmem:[%s1 + $0x208] sm:$0xff]
  %v84 = vld [vmem:[%s1 + $0x210] sm:$0xff]
  %v85 = vld [vmem:[%s1 + $0x218] sm:$0xf]
  %v86 = vld [vmem:[%s1 + $0x21c] sm:$0xff]
  %v87 = vld [vmem:[%s1 + $0x224] sm:$0xff]
  %v88 = vld [vmem:[%s1 + $0x22c] sm:$0xff]
  %v89 = vld [vmem:[%s1 + $0x234] sm:$0xff]
  %v90 = vld [vmem:[%s1 + $0x23c] sm:$0xff]
  %v91 = vld [vmem:[%s1 + $0x244] sm:$0xff]
  %v92 = vld [vmem:[%s1 + $0x24c] sm:$0xff]
  %v93 = vld [vmem:[%s1 + $0x254] sm:$0xff]
  %v94 = vld [vmem:[%s1 + $0x25c] sm:$0xff]
  %v95 = vld [vmem:[%s1 + $0x264] sm:$0xff]
  %v96 = vld [vmem:[%s1 + $0x26c] sm:$0xff]
  %v97 = vld [vmem:[%s1 + $0x274] sm:$0xff]
  %v98 = vld [vmem:[%s1 + $0x27c] sm:$0xff]
  %v99 = vld [vmem:[%s1 + $0x284] sm:$0xf]
  %v100 = vld [vmem:[%s1 + $0x288] sm:$0x77]
  %v101 = vld [vmem:[%s1 + $0x290] sm:$0x77]
  %v102 = vld [vmem:[%s1 + $0x298] sm:$0x77]
  %v103 = vld [vmem:[%s1 + $0x2a0] sm:$0x77]
  %v104 = vld [vmem:[%s1 + $0x2a8] sm:$0x77]
  %v105 = vld [vmem:[%s1 + $0x2b0] sm:$0x77]
  %v106 = vld [vmem:[%s1 + $0x2b8] sm:$0x77]
  %v107 = vld [vmem:[%s1 + $0x2c0] sm:$0x77]
  %v108 = vld [vmem:[%s1 + $0x2c8] sm:$0x77]
  %v109 = vld [vmem:[%s1 + $0x2d0] sm:$0x77]
  %v110 = vld [vmem:[%s1 + $0x2d8] sm:$0x77]
  %v111 = vld [vmem:[%s1 + $0x2e0] sm:$0x77]
  %v112 = vld [vmem:[%s1 + $0x2e8] sm:$0x77]
  %v113 = vld [vmem:[%s1 + $0x2f0] sm:$0x7]
  %v114 = vld [vmem:[%s2] sm:$0x3]
  %116 = vset.pattern.permute.xlu0 0
  %117 = vperm.xlu0 %116, %v114
  %v118 = vpop.permute.xlu0 %117
  %v218 = vunpack.c.l.b16 %v16
  %v219 = vunpack.c.h.b16 %v16
  %v220 = vunpack.c.l.b16 %v17
  %v221 = vunpack.c.h.b16 %v17
  %v222 = vunpack.c.l.b16 %v18
  %v223 = vunpack.c.h.b16 %v18
  %v224 = vunpack.c.l.b16 %v19
  %v225 = vunpack.c.h.b16 %v19
  %v226 = vunpack.c.l.b16 %v20
  %v227 = vunpack.c.h.b16 %v20
  %v228 = vunpack.c.l.b16 %v21
  %v229 = vunpack.c.h.b16 %v21
  %v230 = vunpack.c.l.b16 %v22
  %v231 = vunpack.c.h.b16 %v22
  %v232 = vunpack.c.l.b16 %v23
  %v233 = vunpack.c.h.b16 %v23
  %v234 = vunpack.c.l.b16 %v24
  %v235 = vunpack.c.h.b16 %v24
  %v236 = vunpack.c.l.b16 %v25
  %v237 = vunpack.c.h.b16 %v25
  %v238 = vunpack.c.l.b16 %v26
  %v239 = vunpack.c.h.b16 %v26
  %v240 = vunpack.c.l.b16 %v27
  %v241 = vunpack.c.h.b16 %v27
  %v242 = vunpack.c.l.b16 %v28
  %v243 = vunpack.c.h.b16 %v28
  %v244 = vunpack.c.l.b16 %v29
  %v245 = vunpack.c.l.b16 %v30
  %v246 = vunpack.c.h.b16 %v30
  %v247 = vunpack.c.l.b16 %v31
  %v248 = vunpack.c.h.b16 %v31
  %v249 = vunpack.c.l.b16 %v32
  %v250 = vunpack.c.h.b16 %v32
  %v251 = vunpack.c.l.b16 %v33
  %v252 = vunpack.c.h.b16 %v33
  %v253 = vunpack.c.l.b16 %v34
  %v254 = vunpack.c.h.b16 %v34
  %v255 = vunpack.c.l.b16 %v35
  %v256 = vunpack.c.h.b16 %v35
  %v257 = vunpack.c.l.b16 %v36
  %v258 = vunpack.c.h.b16 %v36
  %v259 = vunpack.c.l.b16 %v37
  %v260 = vunpack.c.h.b16 %v37
  %v261 = vunpack.c.l.b16 %v38
  %v262 = vunpack.c.h.b16 %v38
  %v263 = vunpack.c.l.b16 %v39
  %v264 = vunpack.c.h.b16 %v39
  %v265 = vunpack.c.l.b16 %v40
  %v266 = vunpack.c.h.b16 %v40
  %v267 = vunpack.c.l.b16 %v41
  %v268 = vunpack.c.h.b16 %v41
  %v269 = vunpack.c.l.b16 %v42
  %v270 = vunpack.c.h.b16 %v42
  %v271 = vunpack.c.l.b16 %v43
  %v272 = vunpack.c.l.b16 %v44
  %v273 = vunpack.c.h.b16 %v44
  %v274 = vunpack.c.l.b16 %v45
  %v275 = vunpack.c.h.b16 %v45
  %v276 = vunpack.c.l.b16 %v46
  %v277 = vunpack.c.h.b16 %v46
  %v278 = vunpack.c.l.b16 %v47
  %v279 = vunpack.c.h.b16 %v47
  %v280 = vunpack.c.l.b16 %v48
  %v281 = vunpack.c.h.b16 %v48
  %v282 = vunpack.c.l.b16 %v49
  %v283 = vunpack.c.h.b16 %v49
  %v284 = vunpack.c.l.b16 %v50
  %v285 = vunpack.c.h.b16 %v50
  %v286 = vunpack.c.l.b16 %v51
  %v287 = vunpack.c.h.b16 %v51
  %v288 = vunpack.c.l.b16 %v52
  %v289 = vunpack.c.h.b16 %v52
  %v290 = vunpack.c.l.b16 %v53
  %v291 = vunpack.c.h.b16 %v53
  %v292 = vunpack.c.l.b16 %v54
  %v293 = vunpack.c.h.b16 %v54
  %v294 = vunpack.c.l.b16 %v55
  %v295 = vunpack.c.h.b16 %v55
  %v296 = vunpack.c.l.b16 %v56
  %v297 = vunpack.c.h.b16 %v56
  %v298 = vunpack.c.l.b16 %v57
  %v299 = vunpack.c.l.b16 %v58
  %v300 = vunpack.c.h.b16 %v58
  %v301 = vunpack.c.l.b16 %v59
  %v302 = vunpack.c.h.b16 %v59
  %v303 = vunpack.c.l.b16 %v60
  %v304 = vunpack.c.h.b16 %v60
  %v305 = vunpack.c.l.b16 %v61
  %v306 = vunpack.c.h.b16 %v61
  %v307 = vunpack.c.l.b16 %v62
  %v308 = vunpack.c.h.b16 %v62
  %v309 = vunpack.c.l.b16 %v63
  %v310 = vunpack.c.h.b16 %v63
  %v311 = vunpack.c.l.b16 %v64
  %v312 = vunpack.c.h.b16 %v64
  %v313 = vunpack.c.l.b16 %v65
  %v314 = vunpack.c.h.b16 %v65
  %v315 = vunpack.c.l.b16 %v66
  %v316 = vunpack.c.h.b16 %v66
  %v317 = vunpack.c.l.b16 %v67
  %v318 = vunpack.c.h.b16 %v67
  %v319 = vunpack.c.l.b16 %v68
  %v320 = vunpack.c.h.b16 %v68
  %v321 = vunpack.c.l.b16 %v69
  %v322 = vunpack.c.h.b16 %v69
  %v323 = vunpack.c.l.b16 %v70
  %v324 = vunpack.c.h.b16 %v70
  %v325 = vunpack.c.l.b16 %v71
  %v326 = vunpack.c.l.b16 %v72
  %v327 = vunpack.c.h.b16 %v72
  %v328 = vunpack.c.l.b16 %v73
  %v329 = vunpack.c.h.b16 %v73
  %v330 = vunpack.c.l.b16 %v74
  %v331 = vunpack.c.h.b16 %v74
  %v332 = vunpack.c.l.b16 %v75
  %v333 = vunpack.c.h.b16 %v75
  %v334 = vunpack.c.l.b16 %v76
  %v335 = vunpack.c.h.b16 %v76
  %v336 = vunpack.c.l.b16 %v77
  %v337 = vunpack.c.h.b16 %v77
  %v338 = vunpack.c.l.b16 %v78
  %v339 = vunpack.c.h.b16 %v78
  %v340 = vunpack.c.l.b16 %v79
  %v341 = vunpack.c.h.b16 %v79
  %v342 = vunpack.c.l.b16 %v80
  %v343 = vunpack.c.h.b16 %v80
  %v344 = vunpack.c.l.b16 %v81
  %v345 = vunpack.c.h.b16 %v81
  %v346 = vunpack.c.l.b16 %v82
  %v347 = vunpack.c.h.b16 %v82
  %v348 = vunpack.c.l.b16 %v83
  %v349 = vunpack.c.h.b16 %v83
  %v350 = vunpack.c.l.b16 %v84
  %v351 = vunpack.c.h.b16 %v84
  %v352 = vunpack.c.l.b16 %v85
  %v353 = vunpack.c.l.b16 %v86
  %v354 = vunpack.c.h.b16 %v86
  %v355 = vunpack.c.l.b16 %v87
  %v356 = vunpack.c.h.b16 %v87
  %v357 = vunpack.c.l.b16 %v88
  %v358 = vunpack.c.h.b16 %v88
  %v359 = vunpack.c.l.b16 %v89
  %v360 = vunpack.c.h.b16 %v89
  %v361 = vunpack.c.l.b16 %v90
  %v362 = vunpack.c.h.b16 %v90
  %v363 = vunpack.c.l.b16 %v91
  %v364 = vunpack.c.h.b16 %v91
  %v365 = vunpack.c.l.b16 %v92
  %v366 = vunpack.c.h.b16 %v92
  %v367 = vunpack.c.l.b16 %v93
  %v368 = vunpack.c.h.b16 %v93
  %v369 = vunpack.c.l.b16 %v94
  %v370 = vunpack.c.h.b16 %v94
  %v371 = vunpack.c.l.b16 %v95
  %v372 = vunpack.c.h.b16 %v95
  %v373 = vunpack.c.l.b16 %v96
  %v374 = vunpack.c.h.b16 %v96
  %v375 = vunpack.c.l.b16 %v97
  %v376 = vunpack.c.h.b16 %v97
  %v377 = vunpack.c.l.b16 %v98
  %v378 = vunpack.c.h.b16 %v98
  %v379 = vunpack.c.l.b16 %v99
  %v380 = vunpack.c.l.b16 %v100
  %v381 = vunpack.c.h.b16 %v100
  %v382 = vunpack.c.l.b16 %v101
  %v383 = vunpack.c.h.b16 %v101
  %v384 = vunpack.c.l.b16 %v102
  %v385 = vunpack.c.h.b16 %v102
  %v386 = vunpack.c.l.b16 %v103
  %v387 = vunpack.c.h.b16 %v103
  %v388 = vunpack.c.l.b16 %v104
  %v389 = vunpack.c.h.b16 %v104
  %v390 = vunpack.c.l.b16 %v105
  %v391 = vunpack.c.h.b16 %v105
  %v392 = vunpack.c.l.b16 %v106
  %v393 = vunpack.c.h.b16 %v106
  %v394 = vunpack.c.l.b16 %v107
  %v395 = vunpack.c.h.b16 %v107
  %v396 = vunpack.c.l.b16 %v108
  %v397 = vunpack.c.h.b16 %v108
  %v398 = vunpack.c.l.b16 %v109
  %v399 = vunpack.c.h.b16 %v109
  %v400 = vunpack.c.l.b16 %v110
  %v401 = vunpack.c.h.b16 %v110
  %v402 = vunpack.c.l.b16 %v111
  %v403 = vunpack.c.h.b16 %v111
  %v404 = vunpack.c.l.b16 %v112
  %v405 = vunpack.c.h.b16 %v112
  %v406 = vunpack.c.l.b16 %v113
  %v407 = vpack.c.b16 %v245, %v218
  %v408 = vpack.c.b16 %v246, %v219
  %v409 = vpack.c.b16 %v247, %v220
  %v410 = vpack.c.b16 %v248, %v221
  %v411 = vpack.c.b16 %v249, %v222
  %v412 = vpack.c.b16 %v250, %v223
  %v413 = vpack.c.b16 %v251, %v224
  %v414 = vpack.c.b16 %v252, %v225
  %v415 = vpack.c.b16 %v253, %v226
  %v416 = vpack.c.b16 %v254, %v227
  %v417 = vpack.c.b16 %v255, %v228
  %v418 = vpack.c.b16 %v256, %v229
  %v419 = vpack.c.b16 %v257, %v230
  %v420 = vpack.c.b16 %v258, %v231
  %v421 = vpack.c.b16 %v259, %v232
  %v422 = vpack.c.b16 %v260, %v233
  %v423 = vpack.c.b16 %v261, %v234
  %v424 = vpack.c.b16 %v262, %v235
  %v425 = vpack.c.b16 %v263, %v236
  %v426 = vpack.c.b16 %v264, %v237
  %v427 = vpack.c.b16 %v265, %v238
  %v428 = vpack.c.b16 %v266, %v239
  %v429 = vpack.c.b16 %v267, %v240
  %v430 = vpack.c.b16 %v268, %v241
  %v431 = vpack.c.b16 %v269, %v242
  %v432 = vpack.c.b16 %v270, %v243
  %v433 = vpack.c.b16 %v271, %v244
  %v434 = vpack.c.b16 %v299, %v272
  %v435 = vpack.c.b16 %v300, %v273
  %v436 = vpack.c.b16 %v301, %v274
  %v437 = vpack.c.b16 %v302, %v275
  %v438 = vpack.c.b16 %v303, %v276
  %v439 = vpack.c.b16 %v304, %v277
  %v440 = vpack.c.b16 %v305, %v278
  %v441 = vpack.c.b16 %v306, %v279
  %v442 = vpack.c.b16 %v307, %v280
  %v443 = vpack.c.b16 %v308, %v281
  %v444 = vpack.c.b16 %v309, %v282
  %v445 = vpack.c.b16 %v310, %v283
  %v446 = vpack.c.b16 %v311, %v284
  %v447 = vpack.c.b16 %v312, %v285
  %v448 = vpack.c.b16 %v313, %v286
  %v449 = vpack.c.b16 %v314, %v287
  %v450 = vpack.c.b16 %v315, %v288
  %v451 = vpack.c.b16 %v316, %v289
  %v452 = vpack.c.b16 %v317, %v290
  %v453 = vpack.c.b16 %v318, %v291
  %v454 = vpack.c.b16 %v319, %v292
  %v455 = vpack.c.b16 %v320, %v293
  %v456 = vpack.c.b16 %v321, %v294
  %v457 = vpack.c.b16 %v322, %v295
  %v458 = vpack.c.b16 %v323, %v296
  %v459 = vpack.c.b16 %v324, %v297
  %v460 = vpack.c.b16 %v325, %v298
  %v461 = vpack.c.b16 %v353, %v326
  %v462 = vpack.c.b16 %v354, %v327
  %v463 = vpack.c.b16 %v355, %v328
  %v464 = vpack.c.b16 %v356, %v329
  %v465 = vpack.c.b16 %v357, %v330
  %v466 = vpack.c.b16 %v358, %v331
  %v467 = vpack.c.b16 %v359, %v332
  %v468 = vpack.c.b16 %v360, %v333
  %v469 = vpack.c.b16 %v361, %v334
  %v470 = vpack.c.b16 %v362, %v335
  %v471 = vpack.c.b16 %v363, %v336
  %v472 = vpack.c.b16 %v364, %v337
  %v473 = vpack.c.b16 %v365, %v338
  %v474 = vpack.c.b16 %v366, %v339
  %v475 = vpack.c.b16 %v367, %v340
  %v476 = vpack.c.b16 %v368, %v341
  %v477 = vpack.c.b16 %v369, %v342
  %v478 = vpack.c.b16 %v370, %v343
  %v479 = vpack.c.b16 %v371, %v344
  %v480 = vpack.c.b16 %v372, %v345
  %v481 = vpack.c.b16 %v373, %v346
  %v482 = vpack.c.b16 %v374, %v347
  %v483 = vpack.c.b16 %v375, %v348
  %v484 = vpack.c.b16 %v376, %v349
  %v485 = vpack.c.b16 %v377, %v350
  %v486 = vpack.c.b16 %v378, %v351
  %v487 = vpack.c.b16 %v379, %v352
  %v488 = vpack.c.b16 %v380, %v380
  %v489 = vpack.c.b16 %v381, %v381
  %v490 = vpack.c.b16 %v382, %v382
  %v491 = vpack.c.b16 %v383, %v383
  %v492 = vpack.c.b16 %v384, %v384
  %v493 = vpack.c.b16 %v385, %v385
  %v494 = vpack.c.b16 %v386, %v386
  %v495 = vpack.c.b16 %v387, %v387
  %v496 = vpack.c.b16 %v388, %v388
  %v497 = vpack.c.b16 %v389, %v389
  %v498 = vpack.c.b16 %v390, %v390
  %v499 = vpack.c.b16 %v391, %v391
  %v500 = vpack.c.b16 %v392, %v392
  %v501 = vpack.c.b16 %v393, %v393
  %v502 = vpack.c.b16 %v394, %v394
  %v503 = vpack.c.b16 %v395, %v395
  %v504 = vpack.c.b16 %v396, %v396
  %v505 = vpack.c.b16 %v397, %v397
  %v506 = vpack.c.b16 %v398, %v398
  %v507 = vpack.c.b16 %v399, %v399
  %v508 = vpack.c.b16 %v400, %v400
  %v509 = vpack.c.b16 %v401, %v401
  %v510 = vpack.c.b16 %v402, %v402
  %v511 = vpack.c.b16 %v403, %v403
  %v512 = vpack.c.b16 %v404, %v404
  %v513 = vpack.c.b16 %v405, %v405
  %v514 = vpack.c.b16 %v406, %v406
  %vm596 = vcmask 441344
  %v598 = vsel %vm596, %v15, 0
  %vm600 = vcmask 1042432
  %v602 = vsel %vm600, %v488, 0
  %v605 = vsel %vm600, %v489, 0
  %v608 = vsel %vm600, %v490, 0
  %v611 = vsel %vm600, %v491, 0
  %v614 = vsel %vm600, %v492, 0
  %v617 = vsel %vm600, %v493, 0
  %v620 = vsel %vm600, %v494, 0
  %v623 = vsel %vm600, %v495, 0
  %v626 = vsel %vm600, %v496, 0
  %v629 = vsel %vm600, %v497, 0
  %v632 = vsel %vm600, %v498, 0
  %v635 = vsel %vm600, %v499, 0
  %v638 = vsel %vm600, %v500, 0
  %v641 = vsel %vm600, %v501, 0
  %v644 = vsel %vm600, %v502, 0
  %v647 = vsel %vm600, %v503, 0
  %v650 = vsel %vm600, %v504, 0
  %v653 = vsel %vm600, %v505, 0
  %v656 = vsel %vm600, %v506, 0
  %v659 = vsel %vm600, %v507, 0
  %v662 = vsel %vm600, %v508, 0
  %v665 = vsel %vm600, %v509, 0
  %v668 = vsel %vm600, %v510, 0
  %v671 = vsel %vm600, %v511, 0
  %v674 = vsel %vm600, %v512, 0
  %v677 = vsel %vm600, %v513, 0
  %v680 = vsel %vm600, %v514, 0
  %682 = vmatprep.subr.bf16.mxu0 %v408
  %683 = vmatpush1.bf16.msra.mxu0 %v407
  %684 = vmatprep.subr.bf16.mxu0 %v435
  %685 = vmatpush1.bf16.msra.mxu0 %v434
  %686 = vmatprep.subr.bf16.mxu0 %v462
  %687 = vmatpush1.bf16.msra.mxu0 %v461
  %688 = vmatprep.subr.bf16.mxu0 %v605
  %689 = vmatpush1.bf16.msra.mxu0 %v602
  %690 = vmatprep.subr.bf16.mxu0 0
  %691 = vmatpush1.bf16.msra.mxu0 0
  %692 = vmatprep.subr.bf16.mxu0 0
  %693 = vmatpush1.bf16.msra.mxu0 0
  %694 = vmatprep.subr.bf16.mxu0 0
  %695 = vmatpush1.bf16.msra.mxu0 0
  %696 = vmatprep.subr.bf16.mxu0 0
  %697 = vmatpush1.bf16.msra.mxu0 0
  %698 = vmatprep.subr.bf16.mxu0 0
  %699 = vmatpush1.bf16.msra.mxu0 0
  %700 = vmatprep.subr.bf16.mxu0 0
  %701 = vmatpush1.bf16.msra.mxu0 0
  %702 = vmatprep.subr.bf16.mxu0 0
  %703 = vmatpush1.bf16.msra.mxu0 0
  %704 = vmatprep.subr.bf16.mxu0 0
  %705 = vmatpush1.bf16.msra.mxu0 0
  %706 = vmatprep.subr.bf16.mxu0 0
  %707 = vmatpush1.bf16.msra.mxu0 0
  %708 = vmatprep.subr.bf16.mxu0 0
  %709 = vmatpush1.bf16.msra.mxu0 0
  %710 = vmatprep.subr.bf16.mxu0 0
  %711 = vmatpush1.bf16.msra.mxu0 0
  %712 = vmatprep.subr.bf16.mxu0 0
  %713 = vmatpush1.bf16.msra.mxu0 0
  %714 = vmatprep.mubr.bf16.mxu0 0
  %715 = vmatmul.mubr.bf16.gmra.mrb[0].mxu0 %v598
  %v716 = vpop.f32.mrb[0].mxu0
  %v717 = vadd.f32 %v118, %v716
  %v718 = vpop.f32.mrb[0].mxu0
  %v719 = vadd.f32 %v118, %v718
  %v720 = vpop.f32.mrb[0].mxu0
  %v721 = vpop.f32.mrb[0].mxu0
  %722 = vdwg.mxu0
  %723 = vmatprep.subr.bf16.mxu0 %v410
  %724 = vmatpush1.bf16.msra.mxu0 %v409
  %725 = vmatprep.subr.bf16.mxu0 %v437
  %726 = vmatpush1.bf16.msra.mxu0 %v436
  %727 = vmatprep.subr.bf16.mxu0 %v464
  %728 = vmatpush1.bf16.msra.mxu0 %v463
  %729 = vmatprep.subr.bf16.mxu0 %v611
  %730 = vmatpush1.bf16.msra.mxu0 %v608
  %731 = vmatprep.subr.bf16.mxu0 0
  %732 = vmatpush1.bf16.msra.mxu0 0
  %733 = vmatprep.subr.bf16.mxu0 0
  %734 = vmatpush1.bf16.msra.mxu0 0
  %735 = vmatprep.subr.bf16.mxu0 0
  %736 = vmatpush1.bf16.msra.mxu0 0
  %737 = vmatprep.subr.bf16.mxu0 0
  %738 = vmatpush1.bf16.msra.mxu0 0
  %739 = vmatprep.subr.bf16.mxu0 0
  %740 = vmatpush1.bf16.msra.mxu0 0
  %741 = vmatprep.subr.bf16.mxu0 0
  %742 = vmatpush1.bf16.msra.mxu0 0
  %743 = vmatprep.subr.bf16.mxu0 0
  %744 = vmatpush1.bf16.msra.mxu0 0
  %745 = vmatprep.subr.bf16.mxu0 0
  %746 = vmatpush1.bf16.msra.mxu0 0
  %747 = vmatprep.subr.bf16.mxu0 0
  %748 = vmatpush1.bf16.msra.mxu0 0
  %749 = vmatprep.subr.bf16.mxu0 0
  %750 = vmatpush1.bf16.msra.mxu0 0
  %751 = vmatprep.subr.bf16.mxu0 0
  %752 = vmatpush1.bf16.msra.mxu0 0
  %753 = vmatprep.subr.bf16.mxu0 0
  %754 = vmatpush1.bf16.msra.mxu0 0
  %755 = vmatprep.mubr.bf16.mxu0 0
  %756 = vmatmul.mubr.bf16.gmra.mrb[0].mxu0 %v598
  %v757 = vpop.f32.mrb[0].mxu0
  %v758 = vadd.f32 %v118, %v757
  %v759 = vpop.f32.mrb[0].mxu0
  %v760 = vadd.f32 %v118, %v759
  %v761 = vpop.f32.mrb[0].mxu0
  %v762 = vpop.f32.mrb[0].mxu0
  %763 = vdwg.mxu0
  %764 = vmatprep.subr.bf16.mxu0 %v412
  %765 = vmatpush1.bf16.msra.mxu0 %v411
  %766 = vmatprep.subr.bf16.mxu0 %v439
  %767 = vmatpush1.bf16.msra.mxu0 %v438
  %768 = vmatprep.subr.bf16.mxu0 %v466
  %769 = vmatpush1.bf16.msra.mxu0 %v465
  %770 = vmatprep.subr.bf16.mxu0 %v617
  %771 = vmatpush1.bf16.msra.mxu0 %v614
  %772 = vmatprep.subr.bf16.mxu0 0
  %773 = vmatpush1.bf16.msra.mxu0 0
  %774 = vmatprep.subr.bf16.mxu0 0
  %775 = vmatpush1.bf16.msra.mxu0 0
  %776 = vmatprep.subr.bf16.mxu0 0
  %777 = vmatpush1.bf16.msra.mxu0 0
  %778 = vmatprep.subr.bf16.mxu0 0
  %779 = vmatpush1.bf16.msra.mxu0 0
  %780 = vmatprep.subr.bf16.mxu0 0
  %781 = vmatpush1.bf16.msra.mxu0 0
  %782 = vmatprep.subr.bf16.mxu0 0
  %783 = vmatpush1.bf16.msra.mxu0 0
  %784 = vmatprep.subr.bf16.mxu0 0
  %785 = vmatpush1.bf16.msra.mxu0 0
  %786 = vmatprep.subr.bf16.mxu0 0
  %787 = vmatpush1.bf16.msra.mxu0 0
  %788 = vmatprep.subr.bf16.mxu0 0
  %789 = vmatpush1.bf16.msra.mxu0 0
  %790 = vmatprep.subr.bf16.mxu0 0
  %791 = vmatpush1.bf16.msra.mxu0 0
  %792 = vmatprep.subr.bf16.mxu0 0
  %793 = vmatpush1.bf16.msra.mxu0 0
  %794 = vmatprep.subr.bf16.mxu0 0
  %795 = vmatpush1.bf16.msra.mxu0 0
  %796 = vmatprep.mubr.bf16.mxu0 0
  %797 = vmatmul.mubr.bf16.gmra.mrb[0].mxu0 %v598
  %v798 = vpop.f32.mrb[0].mxu0
  %v799 = vadd.f32 %v118, %v798
  %v800 = vpop.f32.mrb[0].mxu0
  %v801 = vadd.f32 %v118, %v800
  %v802 = vpop.f32.mrb[0].mxu0
  %v803 = vpop.f32.mrb[0].mxu0
  %804 = vdwg.mxu0
  %805 = vmatprep.subr.bf16.mxu0 %v414
  %806 = vmatpush1.bf16.msra.mxu0 %v413
  %807 = vmatprep.subr.bf16.mxu0 %v441
  %808 = vmatpush1.bf16.msra.mxu0 %v440
  %809 = vmatprep.subr.bf16.mxu0 %v468
  %810 = vmatpush1.bf16.msra.mxu0 %v467
  %811 = vmatprep.subr.bf16.mxu0 %v623
  %812 = vmatpush1.bf16.msra.mxu0 %v620
  %813 = vmatprep.subr.bf16.mxu0 0
  %814 = vmatpush1.bf16.msra.mxu0 0
  %815 = vmatprep.subr.bf16.mxu0 0
  %816 = vmatpush1.bf16.msra.mxu0 0
  %817 = vmatprep.subr.bf16.mxu0 0
  %818 = vmatpush1.bf16.msra.mxu0 0
  %819 = vmatprep.subr.bf16.mxu0 0
  %820 = vmatpush1.bf16.msra.mxu0 0
  %821 = vmatprep.subr.bf16.mxu0 0
  %822 = vmatpush1.bf16.msra.mxu0 0
  %823 = vmatprep.subr.bf16.mxu0 0
  %824 = vmatpush1.bf16.msra.mxu0 0
  %825 = vmatprep.subr.bf16.mxu0 0
  %826 = vmatpush1.bf16.msra.mxu0 0
  %827 = vmatprep.subr.bf16.mxu0 0
  %828 = vmatpush1.bf16.msra.mxu0 0
  %829 = vmatprep.subr.bf16.mxu0 0
  %830 = vmatpush1.bf16.msra.mxu0 0
  %831 = vmatprep.subr.bf16.mxu0 0
  %832 = vmatpush1.bf16.msra.mxu0 0
  %833 = vmatprep.subr.bf16.mxu0 0
  %834 = vmatpush1.bf16.msra.mxu0 0
  %835 = vmatprep.subr.bf16.mxu0 0
  %836 = vmatpush1.bf16.msra.mxu0 0
  %837 = vmatprep.mubr.bf16.mxu0 0
  %838 = vmatmul.mubr.bf16.gmra.mrb[0].mxu0 %v598
  %v839 = vpop.f32.mrb[0].mxu0
  %v840 = vadd.f32 %v118, %v839
  %v841 = vpop.f32.mrb[0].mxu0
  %v842 = vadd.f32 %v118, %v841
  %v843 = vpop.f32.mrb[0].mxu0
  %v844 = vpop.f32.mrb[0].mxu0
  %845 = vdwg.mxu0
  %846 = vmatprep.subr.bf16.mxu0 %v416
  %847 = vmatpush1.bf16.msra.mxu0 %v415
  %848 = vmatprep.subr.bf16.mxu0 %v443
  %849 = vmatpush1.bf16.msra.mxu0 %v442
  %850 = vmatprep.subr.bf16.mxu0 %v470
  %851 = vmatpush1.bf16.msra.mxu0 %v469
  %852 = vmatprep.subr.bf16.mxu0 %v629
  %853 = vmatpush1.bf16.msra.mxu0 %v626
  %854 = vmatprep.subr.bf16.mxu0 0
  %855 = vmatpush1.bf16.msra.mxu0 0
  %856 = vmatprep.subr.bf16.mxu0 0
  %857 = vmatpush1.bf16.msra.mxu0 0
  %858 = vmatprep.subr.bf16.mxu0 0
  %859 = vmatpush1.bf16.msra.mxu0 0
  %860 = vmatprep.subr.bf16.mxu0 0
  %861 = vmatpush1.bf16.msra.mxu0 0
  %862 = vmatprep.subr.bf16.mxu0 0
  %863 = vmatpush1.bf16.msra.mxu0 0
  %864 = vmatprep.subr.bf16.mxu0 0
  %865 = vmatpush1.bf16.msra.mxu0 0
  %866 = vmatprep.subr.bf16.mxu0 0
  %867 = vmatpush1.bf16.msra.mxu0 0
  %868 = vmatprep.subr.bf16.mxu0 0
  %869 = vmatpush1.bf16.msra.mxu0 0
  %870 = vmatprep.subr.bf16.mxu0 0
  %871 = vmatpush1.bf16.msra.mxu0 0
  %872 = vmatprep.subr.bf16.mxu0 0
  %873 = vmatpush1.bf16.msra.mxu0 0
  %874 = vmatprep.subr.bf16.mxu0 0
  %875 = vmatpush1.bf16.msra.mxu0 0
  %876 = vmatprep.subr.bf16.mxu0 0
  %877 = vmatpush1.bf16.msra.mxu0 0
  %878 = vmatprep.mubr.bf16.mxu0 0
  %879 = vmatmul.mubr.bf16.gmra.mrb[0].mxu0 %v598
  %v880 = vpop.f32.mrb[0].mxu0
  %v881 = vadd.f32 %v118, %v880
  %v882 = vpop.f32.mrb[0].mxu0
  %v883 = vadd.f32 %v118, %v882
  %v884 = vpop.f32.mrb[0].mxu0
  %v885 = vpop.f32.mrb[0].mxu0
  %886 = vdwg.mxu0
  %887 = vmatprep.subr.bf16.mxu0 %v418
  %888 = vmatpush1.bf16.msra.mxu0 %v417
  %889 = vmatprep.subr.bf16.mxu0 %v445
  %890 = vmatpush1.bf16.msra.mxu0 %v444
  %891 = vmatprep.subr.bf16.mxu0 %v472
  %892 = vmatpush1.bf16.msra.mxu0 %v471
  %893 = vmatprep.subr.bf16.mxu0 %v635
  %894 = vmatpush1.bf16.msra.mxu0 %v632
  %895 = vmatprep.subr.bf16.mxu0 0
  %896 = vmatpush1.bf16.msra.mxu0 0
  %897 = vmatprep.subr.bf16.mxu0 0
  %898 = vmatpush1.bf16.msra.mxu0 0
  %899 = vmatprep.subr.bf16.mxu0 0
  %900 = vmatpush1.bf16.msra.mxu0 0
  %901 = vmatprep.subr.bf16.mxu0 0
  %902 = vmatpush1.bf16.msra.mxu0 0
  %903 = vmatprep.subr.bf16.mxu0 0
  %904 = vmatpush1.bf16.msra.mxu0 0
  %905 = vmatprep.subr.bf16.mxu0 0
  %906 = vmatpush1.bf16.msra.mxu0 0
  %907 = vmatprep.subr.bf16.mxu0 0
  %908 = vmatpush1.bf16.msra.mxu0 0
  %909 = vmatprep.subr.bf16.mxu0 0
  %910 = vmatpush1.bf16.msra.mxu0 0
  %911 = vmatprep.subr.bf16.mxu0 0
  %912 = vmatpush1.bf16.msra.mxu0 0
  %913 = vmatprep.subr.bf16.mxu0 0
  %914 = vmatpush1.bf16.msra.mxu0 0
  %915 = vmatprep.subr.bf16.mxu0 0
  %916 = vmatpush1.bf16.msra.mxu0 0
  %917 = vmatprep.subr.bf16.mxu0 0
  %918 = vmatpush1.bf16.msra.mxu0 0
  %919 = vmatprep.mubr.bf16.mxu0 0
  %920 = vmatmul.mubr.bf16.gmra.mrb[0].mxu0 %v598
  %v921 = vpop.f32.mrb[0].mxu0
  %v922 = vadd.f32 %v118, %v921
  %v923 = vpop.f32.mrb[0].mxu0
  %v924 = vadd.f32 %v118, %v923
  %v925 = vpop.f32.mrb[0].mxu0
  %v926 = vpop.f32.mrb[0].mxu0
  %927 = vdwg.mxu0
  %928 = vmatprep.subr.bf16.mxu0 %v420
  %929 = vmatpush1.bf16.msra.mxu0 %v419
  %930 = vmatprep.subr.bf16.mxu0 %v447
  %931 = vmatpush1.bf16.msra.mxu0 %v446
  %932 = vmatprep.subr.bf16.mxu0 %v474
  %933 = vmatpush1.bf16.msra.mxu0 %v473
  %934 = vmatprep.subr.bf16.mxu0 %v641
  %935 = vmatpush1.bf16.msra.mxu0 %v638
  %936 = vmatprep.subr.bf16.mxu0 0
  %937 = vmatpush1.bf16.msra.mxu0 0
  %938 = vmatprep.subr.bf16.mxu0 0
  %939 = vmatpush1.bf16.msra.mxu0 0
  %940 = vmatprep.subr.bf16.mxu0 0
  %941 = vmatpush1.bf16.msra.mxu0 0
  %942 = vmatprep.subr.bf16.mxu0 0
  %943 = vmatpush1.bf16.msra.mxu0 0
  %944 = vmatprep.subr.bf16.mxu0 0
  %945 = vmatpush1.bf16.msra.mxu0 0
  %946 = vmatprep.subr.bf16.mxu0 0
  %947 = vmatpush1.bf16.msra.mxu0 0
  %948 = vmatprep.subr.bf16.mxu0 0
  %949 = vmatpush1.bf16.msra.mxu0 0
  %950 = vmatprep.subr.bf16.mxu0 0
  %951 = vmatpush1.bf16.msra.mxu0 0
  %952 = vmatprep.subr.bf16.mxu0 0
  %953 = vmatpush1.bf16.msra.mxu0 0
  %954 = vmatprep.subr.bf16.mxu0 0
  %955 = vmatpush1.bf16.msra.mxu0 0
  %956 = vmatprep.subr.bf16.mxu0 0
  %957 = vmatpush1.bf16.msra.mxu0 0
  %958 = vmatprep.subr.bf16.mxu0 0
  %959 = vmatpush1.bf16.msra.mxu0 0
  %960 = vmatprep.mubr.bf16.mxu0 0
  %961 = vmatmul.mubr.bf16.gmra.mrb[0].mxu0 %v598
  %v962 = vpop.f32.mrb[0].mxu0
  %v963 = vadd.f32 %v118, %v962
  %v964 = vpop.f32.mrb[0].mxu0
  %v965 = vadd.f32 %v118, %v964
  %v966 = vpop.f32.mrb[0].mxu0
  %v967 = vpop.f32.mrb[0].mxu0
  %968 = vdwg.mxu0
  %969 = vmatprep.subr.bf16.mxu0 %v422
  %970 = vmatpush1.bf16.msra.mxu0 %v421
  %971 = vmatprep.subr.bf16.mxu0 %v449
  %972 = vmatpush1.bf16.msra.mxu0 %v448
  %973 = vmatprep.subr.bf16.mxu0 %v476
  %974 = vmatpush1.bf16.msra.mxu0 %v475
  %975 = vmatprep.subr.bf16.mxu0 %v647
  %976 = vmatpush1.bf16.msra.mxu0 %v644
  %977 = vmatprep.subr.bf16.mxu0 0
  %978 = vmatpush1.bf16.msra.mxu0 0
  %979 = vmatprep.subr.bf16.mxu0 0
  %980 = vmatpush1.bf16.msra.mxu0 0
  %981 = vmatprep.subr.bf16.mxu0 0
  %982 = vmatpush1.bf16.msra.mxu0 0
  %983 = vmatprep.subr.bf16.mxu0 0
  %984 = vmatpush1.bf16.msra.mxu0 0
  %985 = vmatprep.subr.bf16.mxu0 0
  %986 = vmatpush1.bf16.msra.mxu0 0
  %987 = vmatprep.subr.bf16.mxu0 0
  %988 = vmatpush1.bf16.msra.mxu0 0
  %989 = vmatprep.subr.bf16.mxu0 0
  %990 = vmatpush1.bf16.msra.mxu0 0
  %991 = vmatprep.subr.bf16.mxu0 0
  %992 = vmatpush1.bf16.msra.mxu0 0
  %993 = vmatprep.subr.bf16.mxu0 0
  %994 = vmatpush1.bf16.msra.mxu0 0
  %995 = vmatprep.subr.bf16.mxu0 0
  %996 = vmatpush1.bf16.msra.mxu0 0
  %997 = vmatprep.subr.bf16.mxu0 0
  %998 = vmatpush1.bf16.msra.mxu0 0
  %999 = vmatprep.subr.bf16.mxu0 0
  %1000 = vmatpush1.bf16.msra.mxu0 0
  %1001 = vmatprep.mubr.bf16.mxu0 0
  %1002 = vmatmul.mubr.bf16.gmra.mrb[0].mxu0 %v598
  %v1003 = vpop.f32.mrb[0].mxu0
  %v1004 = vadd.f32 %v118, %v1003
  %v1005 = vpop.f32.mrb[0].mxu0
  %v1006 = vadd.f32 %v118, %v1005
  %v1007 = vpop.f32.mrb[0].mxu0
  %v1008 = vpop.f32.mrb[0].mxu0
  %1009 = vdwg.mxu0
  %1010 = vmatprep.subr.bf16.mxu0 %v424
  %1011 = vmatpush1.bf16.msra.mxu0 %v423
  %1012 = vmatprep.subr.bf16.mxu0 %v451
  %1013 = vmatpush1.bf16.msra.mxu0 %v450
  %1014 = vmatprep.subr.bf16.mxu0 %v478
  %1015 = vmatpush1.bf16.msra.mxu0 %v477
  %1016 = vmatprep.subr.bf16.mxu0 %v653
  %1017 = vmatpush1.bf16.msra.mxu0 %v650
  %1018 = vmatprep.subr.bf16.mxu0 0
  %1019 = vmatpush1.bf16.msra.mxu0 0
  %1020 = vmatprep.subr.bf16.mxu0 0
  %1021 = vmatpush1.bf16.msra.mxu0 0
  %1022 = vmatprep.subr.bf16.mxu0 0
  %1023 = vmatpush1.bf16.msra.mxu0 0
  %1024 = vmatprep.subr.bf16.mxu0 0
  %1025 = vmatpush1.bf16.msra.mxu0 0
  %1026 = vmatprep.subr.bf16.mxu0 0
  %1027 = vmatpush1.bf16.msra.mxu0 0
  %1028 = vmatprep.subr.bf16.mxu0 0
  %1029 = vmatpush1.bf16.msra.mxu0 0
  %1030 = vmatprep.subr.bf16.mxu0 0
  %1031 = vmatpush1.bf16.msra.mxu0 0
  %1032 = vmatprep.subr.bf16.mxu0 0
  %1033 = vmatpush1.bf16.msra.mxu0 0
  %1034 = vmatprep.subr.bf16.mxu0 0
  %1035 = vmatpush1.bf16.msra.mxu0 0
  %1036 = vmatprep.subr.bf16.mxu0 0
  %1037 = vmatpush1.bf16.msra.mxu0 0
  %1038 = vmatprep.subr.bf16.mxu0 0
  %1039 = vmatpush1.bf16.msra.mxu0 0
  %1040 = vmatprep.subr.bf16.mxu0 0
  %1041 = vmatpush1.bf16.msra.mxu0 0
  %1042 = vmatprep.mubr.bf16.mxu0 0
  %1043 = vmatmul.mubr.bf16.gmra.mrb[0].mxu0 %v598
  %v1044 = vpop.f32.mrb[0].mxu0
  %v1045 = vadd.f32 %v118, %v1044
  %v1046 = vpop.f32.mrb[0].mxu0
  %v1047 = vadd.f32 %v118, %v1046
  %v1048 = vpop.f32.mrb[0].mxu0
  %v1049 = vpop.f32.mrb[0].mxu0
  %1050 = vdwg.mxu0
  %1051 = vmatprep.subr.bf16.mxu0 %v426
  %1052 = vmatpush1.bf16.msra.mxu0 %v425
  %1053 = vmatprep.subr.bf16.mxu0 %v453
  %1054 = vmatpush1.bf16.msra.mxu0 %v452
  %1055 = vmatprep.subr.bf16.mxu0 %v480
  %1056 = vmatpush1.bf16.msra.mxu0 %v479
  %1057 = vmatprep.subr.bf16.mxu0 %v659
  %1058 = vmatpush1.bf16.msra.mxu0 %v656
  %1059 = vmatprep.subr.bf16.mxu0 0
  %1060 = vmatpush1.bf16.msra.mxu0 0
  %1061 = vmatprep.subr.bf16.mxu0 0
  %1062 = vmatpush1.bf16.msra.mxu0 0
  %1063 = vmatprep.subr.bf16.mxu0 0
  %1064 = vmatpush1.bf16.msra.mxu0 0
  %1065 = vmatprep.subr.bf16.mxu0 0
  %1066 = vmatpush1.bf16.msra.mxu0 0
  %1067 = vmatprep.subr.bf16.mxu0 0
  %1068 = vmatpush1.bf16.msra.mxu0 0
  %1069 = vmatprep.subr.bf16.mxu0 0
  %1070 = vmatpush1.bf16.msra.mxu0 0
  %1071 = vmatprep.subr.bf16.mxu0 0
  %1072 = vmatpush1.bf16.msra.mxu0 0
  %1073 = vmatprep.subr.bf16.mxu0 0
  %1074 = vmatpush1.bf16.msra.mxu0 0
  %1075 = vmatprep.subr.bf16.mxu0 0
  %1076 = vmatpush1.bf16.msra.mxu0 0
  %1077 = vmatprep.subr.bf16.mxu0 0
  %1078 = vmatpush1.bf16.msra.mxu0 0
  %1079 = vmatprep.subr.bf16.mxu0 0
  %1080 = vmatpush1.bf16.msra.mxu0 0
  %1081 = vmatprep.subr.bf16.mxu0 0
  %1082 = vmatpush1.bf16.msra.mxu0 0
  %1083 = vmatprep.mubr.bf16.mxu0 0
  %1084 = vmatmul.mubr.bf16.gmra.mrb[0].mxu0 %v598
  %v1085 = vpop.f32.mrb[0].mxu0
  %v1086 = vadd.f32 %v118, %v1085
  %v1087 = vpop.f32.mrb[0].mxu0
  %v1088 = vadd.f32 %v118, %v1087
  %v1089 = vpop.f32.mrb[0].mxu0
  %v1090 = vpop.f32.mrb[0].mxu0
  %1091 = vdwg.mxu0
  %1092 = vmatprep.subr.bf16.mxu0 %v428
  %1093 = vmatpush1.bf16.msra.mxu0 %v427
  %1094 = vmatprep.subr.bf16.mxu0 %v455
  %1095 = vmatpush1.bf16.msra.mxu0 %v454
  %1096 = vmatprep.subr.bf16.mxu0 %v482
  %1097 = vmatpush1.bf16.msra.mxu0 %v481
  %1098 = vmatprep.subr.bf16.mxu0 %v665
  %1099 = vmatpush1.bf16.msra.mxu0 %v662
  %1100 = vmatprep.subr.bf16.mxu0 0
  %1101 = vmatpush1.bf16.msra.mxu0 0
  %1102 = vmatprep.subr.bf16.mxu0 0
  %1103 = vmatpush1.bf16.msra.mxu0 0
  %1104 = vmatprep.subr.bf16.mxu0 0
  %1105 = vmatpush1.bf16.msra.mxu0 0
  %1106 = vmatprep.subr.bf16.mxu0 0
  %1107 = vmatpush1.bf16.msra.mxu0 0
  %1108 = vmatprep.subr.bf16.mxu0 0
  %1109 = vmatpush1.bf16.msra.mxu0 0
  %1110 = vmatprep.subr.bf16.mxu0 0
  %1111 = vmatpush1.bf16.msra.mxu0 0
  %1112 = vmatprep.subr.bf16.mxu0 0
  %1113 = vmatpush1.bf16.msra.mxu0 0
  %1114 = vmatprep.subr.bf16.mxu0 0
  %1115 = vmatpush1.bf16.msra.mxu0 0
  %1116 = vmatprep.subr.bf16.mxu0 0
  %1117 = vmatpush1.bf16.msra.mxu0 0
  %1118 = vmatprep.subr.bf16.mxu0 0
  %1119 = vmatpush1.bf16.msra.mxu0 0
  %1120 = vmatprep.subr.bf16.mxu0 0
  %1121 = vmatpush1.bf16.msra.mxu0 0
  %1122 = vmatprep.subr.bf16.mxu0 0
  %1123 = vmatpush1.bf16.msra.mxu0 0
  %1124 = vmatprep.mubr.bf16.mxu0 0
  %1125 = vmatmul.mubr.bf16.gmra.mrb[0].mxu0 %v598
  %v1126 = vpop.f32.mrb[0].mxu0
  %v1127 = vadd.f32 %v118, %v1126
  %v1128 = vpop.f32.mrb[0].mxu0
  %v1129 = vadd.f32 %v118, %v1128
  %v1130 = vpop.f32.mrb[0].mxu0
  %v1131 = vpop.f32.mrb[0].mxu0
  %1132 = vdwg.mxu0
  %1133 = vmatprep.subr.bf16.mxu0 %v430
  %1134 = vmatpush1.bf16.msra.mxu0 %v429
  %1135 = vmatprep.subr.bf16.mxu0 %v457
  %1136 = vmatpush1.bf16.msra.mxu0 %v456
  %1137 = vmatprep.subr.bf16.mxu0 %v484
  %1138 = vmatpush1.bf16.msra.mxu0 %v483
  %1139 = vmatprep.subr.bf16.mxu0 %v671
  %1140 = vmatpush1.bf16.msra.mxu0 %v668
  %1141 = vmatprep.subr.bf16.mxu0 0
  %1142 = vmatpush1.bf16.msra.mxu0 0
  %1143 = vmatprep.subr.bf16.mxu0 0
  %1144 = vmatpush1.bf16.msra.mxu0 0
  %1145 = vmatprep.subr.bf16.mxu0 0
  %1146 = vmatpush1.bf16.msra.mxu0 0
  %1147 = vmatprep.subr.bf16.mxu0 0
  %1148 = vmatpush1.bf16.msra.mxu0 0
  %1149 = vmatprep.subr.bf16.mxu0 0
  %1150 = vmatpush1.bf16.msra.mxu0 0
  %1151 = vmatprep.subr.bf16.mxu0 0
  %1152 = vmatpush1.bf16.msra.mxu0 0
  %1153 = vmatprep.subr.bf16.mxu0 0
  %1154 = vmatpush1.bf16.msra.mxu0 0
  %1155 = vmatprep.subr.bf16.mxu0 0
  %1156 = vmatpush1.bf16.msra.mxu0 0
  %1157 = vmatprep.subr.bf16.mxu0 0
  %1158 = vmatpush1.bf16.msra.mxu0 0
  %1159 = vmatprep.subr.bf16.mxu0 0
  %1160 = vmatpush1.bf16.msra.mxu0 0
  %1161 = vmatprep.subr.bf16.mxu0 0
  %1162 = vmatpush1.bf16.msra.mxu0 0
  %1163 = vmatprep.subr.bf16.mxu0 0
  %1164 = vmatpush1.bf16.msra.mxu0 0
  %1165 = vmatprep.mubr.bf16.mxu0 0
  %1166 = vmatmul.mubr.bf16.gmra.mrb[0].mxu0 %v598
  %v1167 = vpop.f32.mrb[0].mxu0
  %v1168 = vadd.f32 %v118, %v1167
  %v1169 = vpop.f32.mrb[0].mxu0
  %v1170 = vadd.f32 %v118, %v1169
  %v1171 = vpop.f32.mrb[0].mxu0
  %v1172 = vpop.f32.mrb[0].mxu0
  %1173 = vdwg.mxu0
  %1174 = vmatprep.subr.bf16.mxu0 %v432
  %1175 = vmatpush1.bf16.msra.mxu0 %v431
  %1176 = vmatprep.subr.bf16.mxu0 %v459
  %1177 = vmatpush1.bf16.msra.mxu0 %v458
  %1178 = vmatprep.subr.bf16.mxu0 %v486
  %1179 = vmatpush1.bf16.msra.mxu0 %v485
  %1180 = vmatprep.subr.bf16.mxu0 %v677
  %1181 = vmatpush1.bf16.msra.mxu0 %v674
  %1182 = vmatprep.subr.bf16.mxu0 0
  %1183 = vmatpush1.bf16.msra.mxu0 0
  %1184 = vmatprep.subr.bf16.mxu0 0
  %1185 = vmatpush1.bf16.msra.mxu0 0
  %1186 = vmatprep.subr.bf16.mxu0 0
  %1187 = vmatpush1.bf16.msra.mxu0 0
  %1188 = vmatprep.subr.bf16.mxu0 0
  %1189 = vmatpush1.bf16.msra.mxu0 0
  %1190 = vmatprep.subr.bf16.mxu0 0
  %1191 = vmatpush1.bf16.msra.mxu0 0
  %1192 = vmatprep.subr.bf16.mxu0 0
  %1193 = vmatpush1.bf16.msra.mxu0 0
  %1194 = vmatprep.subr.bf16.mxu0 0
  %1195 = vmatpush1.bf16.msra.mxu0 0
  %1196 = vmatprep.subr.bf16.mxu0 0
  %1197 = vmatpush1.bf16.msra.mxu0 0
  %1198 = vmatprep.subr.bf16.mxu0 0
  %1199 = vmatpush1.bf16.msra.mxu0 0
  %1200 = vmatprep.subr.bf16.mxu0 0
  %1201 = vmatpush1.bf16.msra.mxu0 0
  %1202 = vmatprep.subr.bf16.mxu0 0
  %1203 = vmatpush1.bf16.msra.mxu0 0
  %1204 = vmatprep.subr.bf16.mxu0 0
  %1205 = vmatpush1.bf16.msra.mxu0 0
  %1206 = vmatprep.mubr.bf16.mxu0 0
  %1207 = vmatmul.mubr.bf16.gmra.mrb[0].mxu0 %v598
  %v1208 = vpop.f32.mrb[0].mxu0
  %v1209 = vadd.f32 %v118, %v1208
  %v1210 = vpop.f32.mrb[0].mxu0
  %v1211 = vadd.f32 %v118, %v1210
  %v1212 = vpop.f32.mrb[0].mxu0
  %v1213 = vpop.f32.mrb[0].mxu0
  %1214 = vdwg.mxu0
  %1215 = vmatprep.subr.bf16.mxu0 0
  %1216 = vmatpush1.bf16.msra.mxu0 %v433
  %1217 = vmatprep.subr.bf16.mxu0 0
  %1218 = vmatpush1.bf16.msra.mxu0 %v460
  %1219 = vmatprep.subr.bf16.mxu0 0
  %1220 = vmatpush1.bf16.msra.mxu0 %v487
  %1221 = vmatprep.subr.bf16.mxu0 0
  %1222 = vmatpush1.bf16.msra.mxu0 %v680
  %1223 = vmatprep.subr.bf16.mxu0 0
  %1224 = vmatpush1.bf16.msra.mxu0 0
  %1225 = vmatprep.subr.bf16.mxu0 0
  %1226 = vmatpush1.bf16.msra.mxu0 0
  %1227 = vmatprep.subr.bf16.mxu0 0
  %1228 = vmatpush1.bf16.msra.mxu0 0
  %1229 = vmatprep.subr.bf16.mxu0 0
  %1230 = vmatpush1.bf16.msra.mxu0 0
  %1231 = vmatprep.subr.bf16.mxu0 0
  %1232 = vmatpush1.bf16.msra.mxu0 0
  %1233 = vmatprep.subr.bf16.mxu0 0
  %1234 = vmatpush1.bf16.msra.mxu0 0
  %1235 = vmatprep.subr.bf16.mxu0 0
  %1236 = vmatpush1.bf16.msra.mxu0 0
  %1237 = vmatprep.subr.bf16.mxu0 0
  %1238 = vmatpush1.bf16.msra.mxu0 0
  %1239 = vmatprep.subr.bf16.mxu0 0
  %1240 = vmatpush1.bf16.msra.mxu0 0
  %1241 = vmatprep.subr.bf16.mxu0 0
  %1242 = vmatpush1.bf16.msra.mxu0 0
  %1243 = vmatprep.subr.bf16.mxu0 0
  %1244 = vmatpush1.bf16.msra.mxu0 0
  %1245 = vmatprep.subr.bf16.mxu0 0
  %1246 = vmatpush1.bf16.msra.mxu0 0
  %1247 = vmatprep.mubr.bf16.mxu0 0
  %1248 = vmatmul.mubr.bf16.gmra.mrb[0].mxu0 %v598
  %v1249 = vpop.f32.mrb[0].mxu0
  %v1250 = vadd.f32 %v118, %v1249
  %v1251 = vpop.f32.mrb[0].mxu0
  %v1252 = vpop.f32.mrb[0].mxu0
  %v1253 = vpop.f32.mrb[0].mxu0
  %1254 = vdwg.mxu0
  %v1255 = vmax.f32 %v717, -5.0
  %v1256 = vmax.f32 %v719, -5.0
  %v1257 = vmax.f32 %v758, -5.0
  %v1258 = vmax.f32 %v760, -5.0
  %v1259 = vmax.f32 %v799, -5.0
  %v1260 = vmax.f32 %v801, -5.0
  %v1261 = vmax.f32 %v840, -5.0
  %v1262 = vmax.f32 %v842, -5.0
  %v1263 = vmax.f32 %v881, -5.0
  %v1264 = vmax.f32 %v883, -5.0
  %v1265 = vmax.f32 %v922, -5.0
  %v1266 = vmax.f32 %v924, -5.0
  %v1267 = vmax.f32 %v963, -5.0
  %v1268 = vmax.f32 %v965, -5.0
  %v1269 = vmax.f32 %v1004, -5.0
  %v1270 = vmax.f32 %v1006, -5.0
  %v1271 = vmax.f32 %v1045, -5.0
  %v1272 = vmax.f32 %v1047, -5.0
  %v1273 = vmax.f32 %v1086, -5.0
  %v1274 = vmax.f32 %v1088, -5.0
  %v1275 = vmax.f32 %v1127, -5.0
  %v1276 = vmax.f32 %v1129, -5.0
  %v1277 = vmax.f32 %v1168, -5.0
  %v1278 = vmax.f32 %v1170, -5.0
  %v1279 = vmax.f32 %v1209, -5.0
  %v1280 = vmax.f32 %v1211, -5.0
  %v1281 = vmax.f32 %v1250, -5.0
  %v1282 = vmin.f32 %v1255, 5.0
  %v1283 = vmin.f32 %v1256, 5.0
  %v1284 = vmin.f32 %v1257, 5.0
  %v1285 = vmin.f32 %v1258, 5.0
  %v1286 = vmin.f32 %v1259, 5.0
  %v1287 = vmin.f32 %v1260, 5.0
  %v1288 = vmin.f32 %v1261, 5.0
  %v1289 = vmin.f32 %v1262, 5.0
  %v1290 = vmin.f32 %v1263, 5.0
  %v1291 = vmin.f32 %v1264, 5.0
  %v1292 = vmin.f32 %v1265, 5.0
  %v1293 = vmin.f32 %v1266, 5.0
  %v1294 = vmin.f32 %v1267, 5.0
  %v1295 = vmin.f32 %v1268, 5.0
  %v1296 = vmin.f32 %v1269, 5.0
  %v1297 = vmin.f32 %v1270, 5.0
  %v1298 = vmin.f32 %v1271, 5.0
  %v1299 = vmin.f32 %v1272, 5.0
  %v1300 = vmin.f32 %v1273, 5.0
  %v1301 = vmin.f32 %v1274, 5.0
  %v1302 = vmin.f32 %v1275, 5.0
  %v1303 = vmin.f32 %v1276, 5.0
  %v1304 = vmin.f32 %v1277, 5.0
  %v1305 = vmin.f32 %v1278, 5.0
  %v1306 = vmin.f32 %v1279, 5.0
  %v1307 = vmin.f32 %v1280, 5.0
  %v1308 = vmin.f32 %v1281, 5.0
  %v1336 = vcombine.low %v1282, %v1283
  %v1337 = vcombine.low %v1284, %v1285
  %v1339 = vunpack.c.l.s4 1983009808
  %v1340 = vunpack.c.0.s8 %v1339
  %v1341 = vlaneseq
  %v1342 = vshrl.u32 %v1341, 7
  %v1343 = vsub.s32 %v1340, %v1342
  %v1344 = vrot.slane %v1336, %v1343
  %v1346 = vunpack.c.l.s4 1983009808
  %v1347 = vunpack.c.0.s8 %v1346
  %v1348 = vlaneseq
  %v1349 = vshrl.u32 %v1348, 7
  %v1350 = vsub.s32 %v1347, %v1349
  %v1351 = vrot.slane %v1337, %v1350
  %v1352 = vcombine.low %v1344, %v1351
  %v1353 = vcombine.low %v1286, %v1287
  %v1354 = vcombine.low %v1288, %v1289
  %v1356 = vunpack.c.l.s4 1983009808
  %v1357 = vunpack.c.0.s8 %v1356
  %v1358 = vlaneseq
  %v1359 = vshrl.u32 %v1358, 7
  %v1360 = vsub.s32 %v1357, %v1359
  %v1361 = vrot.slane %v1353, %v1360
  %v1363 = vunpack.c.l.s4 1983009808
  %v1364 = vunpack.c.0.s8 %v1363
  %v1365 = vlaneseq
  %v1366 = vshrl.u32 %v1365, 7
  %v1367 = vsub.s32 %v1364, %v1366
  %v1368 = vrot.slane %v1354, %v1367
  %v1369 = vcombine.low %v1361, %v1368
  %v1370 = vcombine.low %v1290, %v1291
  %v1371 = vcombine.low %v1292, %v1293
  %v1373 = vunpack.c.l.s4 1983009808
  %v1374 = vunpack.c.0.s8 %v1373
  %v1375 = vlaneseq
  %v1376 = vshrl.u32 %v1375, 7
  %v1377 = vsub.s32 %v1374, %v1376
  %v1378 = vrot.slane %v1370, %v1377
  %v1380 = vunpack.c.l.s4 1983009808
  %v1381 = vunpack.c.0.s8 %v1380
  %v1382 = vlaneseq
  %v1383 = vshrl.u32 %v1382, 7
  %v1384 = vsub.s32 %v1381, %v1383
  %v1385 = vrot.slane %v1371, %v1384
  %v1386 = vcombine.low %v1378, %v1385
  %v1387 = vcombine.low %v1294, %v1295
  %v1388 = vcombine.low %v1296, %v1297
  %v1390 = vunpack.c.l.s4 1983009808
  %v1391 = vunpack.c.0.s8 %v1390
  %v1392 = vlaneseq
  %v1393 = vshrl.u32 %v1392, 7
  %v1394 = vsub.s32 %v1391, %v1393
  %v1395 = vrot.slane %v1387, %v1394
  %v1397 = vunpack.c.l.s4 1983009808
  %v1398 = vunpack.c.0.s8 %v1397
  %v1399 = vlaneseq
  %v1400 = vshrl.u32 %v1399, 7
  %v1401 = vsub.s32 %v1398, %v1400
  %v1402 = vrot.slane %v1388, %v1401
  %v1403 = vcombine.low %v1395, %v1402
  %v1404 = vcombine.low %v1298, %v1299
  %v1405 = vcombine.low %v1300, %v1301
  %v1407 = vunpack.c.l.s4 1983009808
  %v1408 = vunpack.c.0.s8 %v1407
  %v1409 = vlaneseq
  %v1410 = vshrl.u32 %v1409, 7
  %v1411 = vsub.s32 %v1408, %v1410
  %v1412 = vrot.slane %v1404, %v1411
  %v1414 = vunpack.c.l.s4 1983009808
  %v1415 = vunpack.c.0.s8 %v1414
  %v1416 = vlaneseq
  %v1417 = vshrl.u32 %v1416, 7
  %v1418 = vsub.s32 %v1415, %v1417
  %v1419 = vrot.slane %v1405, %v1418
  %v1420 = vcombine.low %v1412, %v1419
  %v1421 = vcombine.low %v1302, %v1303
  %v1422 = vcombine.low %v1304, %v1305
  %v1424 = vunpack.c.l.s4 1983009808
  %v1425 = vunpack.c.0.s8 %v1424
  %v1426 = vlaneseq
  %v1427 = vshrl.u32 %v1426, 7
  %v1428 = vsub.s32 %v1425, %v1427
  %v1429 = vrot.slane %v1421, %v1428
  %v1431 = vunpack.c.l.s4 1983009808
  %v1432 = vunpack.c.0.s8 %v1431
  %v1433 = vlaneseq
  %v1434 = vshrl.u32 %v1433, 7
  %v1435 = vsub.s32 %v1432, %v1434
  %v1436 = vrot.slane %v1422, %v1435
  %v1437 = vcombine.low %v1429, %v1436
  %v1438 = vcombine.low %v1306, %v1307
  %v1440 = vunpack.c.l.s4 1983009808
  %v1441 = vunpack.c.0.s8 %v1440
  %v1442 = vlaneseq
  %v1443 = vshrl.u32 %v1442, 7
  %v1444 = vsub.s32 %v1441, %v1443
  %v1445 = vrot.slane %v1438, %v1444
  %v1447 = vunpack.c.l.s4 1983009808
  %v1448 = vunpack.c.0.s8 %v1447
  %v1449 = vlaneseq
  %v1450 = vshrl.u32 %v1449, 7
  %v1451 = vsub.s32 %v1448, %v1450
  %v1452 = vrot.slane %v1308, %v1451
  %v1453 = vcombine.low %v1445, %v1452
  %1461 = vst [vmem:[%s3] sm:$0xff] %v1352
  %1462 = vst [vmem:[%s3 + $0x8] sm:$0xff] %v1369
  %1463 = vst [vmem:[%s3 + $0x10] sm:$0xff] %v1386
  %1464 = vst [vmem:[%s3 + $0x18] sm:$0xff] %v1403
  %1465 = vst [vmem:[%s3 + $0x20] sm:$0xff] %v1420
  %1466 = vst [vmem:[%s3 + $0x28] sm:$0xff] %v1437
  %vm1467 = vcmask 1041408
  %vm1468 = vcmask 1043458
  %vm1469 = vmor %vm1468, %vm1467
  %vm1470 = vcmask 488452
  %vm1471 = vmor %vm1470, %vm1469
  %1472 = vst.msk [vmem:[%s3 + $0x30] sm:$0x3f] %vm1471, %v1453
  // Predicated region
  $region14: #{_lambda_.35} parent=0 // pred_check
    _
  $region15: #{_lambda_.35} parent=0 // pred_check_branch
    %1474 = sbr.rel (0) target = $region17
  $region16: #{_lambda_.35} parent=0 // pred_region
    _
  $region17: #{_lambda_.35} parent=0 // pred_fallthru
    _
  // Predicated region
  $region18: #{_lambda_.35} parent=0 // pred_check
    _
  $region19: #{_lambda_.35} parent=0 // pred_check_branch
    %1476 = sbr.rel (0) target = $region21
  $region20: #{_lambda_.35} parent=0 // pred_region
    _
  $region21: #{_lambda_.35} parent=0 // pred_fallthru
    _

</llo_original>
